<compile_context>
chip_gen: v6e
topology: v6e:2x2x1
jax: 0.10.0
libtpu: 0.0.40
codegen_flags: <defaults>
</compile_context>

<pallas_src>
import jax
import jax.numpy as jnp
from jax.experimental import pallas as pl
from jax.experimental.pallas import tpu as pltpu

H = 64            # hidden_channels == out_channels
NUM_LAYERS = 3
BN_EPS = 1e-5
LEAKY_SLOPE = 0.01
GINE_EPS = 0.0    # train_eps=True, initial value 0.0


# ----------------------------------------------------------------------------
# in-kernel helpers
# ----------------------------------------------------------------------------
def _bn_train(t, gamma, beta):
    """BatchNorm1d forward in training mode (biased batch statistics), f32."""
    mu = jnp.mean(t, axis=0, keepdims=True)
    var = jnp.mean((t - mu) ** 2, axis=0, keepdims=True)
    return (t - mu) * jax.lax.rsqrt(var + BN_EPS) * gamma + beta


def _mm(a, b):
    """bf16 x bf16 MXU matmul with f32 accumulation."""
    return jnp.dot(a.astype(jnp.bfloat16), b, preferred_element_type=jnp.float32)


# ----------------------------------------------------------------------------
# fused Pallas kernel: whole LocalMP forward (gridless, everything VMEM-resident)
# ----------------------------------------------------------------------------
def local_mp_fused_kernel(
        gsrc_ref, sdst_ref, a_ref, at_ref, r_ref,     # structure matrices (bf16 / f32)
        x0_ref, xc0_ref, ea_ref,                      # f32: [N,H], [Nc,H], [L,E,H]
        cW_ref, cb_ref,                               # clique Linear (bf16 W, f32 b)
        w1_ref, b1_ref, g1_ref, be1_ref,              # GINE nn Linear(H,2H) + BN(2H)
        w2_ref, b2_ref, gg_ref, bg_ref,               # GINE nn Linear(2H,H) + graph_norm
        gs_ref, bs_ref,                               # sub_norm
        wa_ref, ba_ref, wc_ref, bc_ref,               # atom2clique / clique2atom linears
        xc_out_ref, ro_out_ref):                      # outputs: [Nc,H], [B,H]
    n_layers = ea_ref.shape[0]

    # loop-invariant structure operands (already bf16; loaded from VMEM input buffers)
    g_src = gsrc_ref[...]      # [E, N]   gather:   x_j    = g_src @ x
    s_dst = sdst_ref[...]      # [N, E]   scatter:  agg    = s_dst @ msg
    a_inc = a_ref[...]         # [Nc, N]  tree:     agg_c  = A @ x
    at_inc = at_ref[...]       # [N, Nc]  tree:     agg_a  = A^T @ xc

    x = x0_ref[...]                                                 # [N, H] f32
    xc = _mm(xc0_ref[...], cW_ref[...]) + cb_ref[...]               # clique Linear, [Nc, H]

    for i in range(n_layers):      # unrolled at trace time; weights stay VMEM-resident
        # ------------- GINEConv(train_eps) + nn + graph_norm + ReLU -------------
        x_j = _mm(g_src, x.astype(jnp.bfloat16))                    # gather x[src]   [E,H]
        msg = jnp.maximum(x_j + ea_ref[i], 0.0)                     # ReLU(x_j + e_ij)
        agg = _mm(s_dst, msg.astype(jnp.bfloat16))                  # scatter-add ->  [N,H]
        h = (1.0 + GINE_EPS) * x + agg

        # nn: Linear(H,2H) -> BN(2H) -> ReLU -> Linear(2H,H)   (bf16 GEMMs, f32 accum)
        t = _mm(h, w1_ref[i]) + b1_ref[i]
        t = jnp.maximum(_bn_train(t, g1_ref[i], be1_ref[i]), 0.0)
        h2 = _mm(t, w2_ref[i]) + b2_ref[i]

        # graph_norm BN + ReLU (dropout p=0 is identity)
        x = jnp.maximum(_bn_train(h2, gg_ref[i], bg_ref[i]), 0.0)

        # ------------- tree step: atom -> clique -------------
        agg_c = _mm(a_inc, x.astype(jnp.bfloat16))                  # scatter(x[row],col) [Nc,H]
        a2c = _mm(agg_c, wa_ref[i]) + ba_ref[i]
        xc = xc + jnp.maximum(a2c, 0.0)
        xc = _bn_train(xc, gs_ref[i], bs_ref[i])                    # sub_norm

        # ------------- tree step: clique -> atom -------------
        agg_a = _mm(at_inc, xc.astype(jnp.bfloat16))                # scatter(xc[col],row) [N,H]
        c2a = _mm(agg_a, wc_ref[i]) + bc_ref[i]
        x = x + jnp.where(c2a > 0, c2a, LEAKY_SLOPE * c2a)          # leaky_relu

    # outputs written exactly once; readout stays f32 for accuracy
    xc_out_ref[...] = xc
    ro_out_ref[...] = jnp.dot(r_ref[...], x, preferred_element_type=jnp.float32)


# ----------------------------------------------------------------------------
# wrapper: glue (embedding lookups, structure matrices, weight stacking) + one pallas_call
# ----------------------------------------------------------------------------
def _pick_vmem_limit(resident_bytes):
    """Generation-aware VMEM limit: real capacity with ~25% headroom, floor 32 MiB."""
    cap = 128 * 1024 * 1024
    try:
        cap = int(pltpu.get_tpu_info().vmem_capacity_bytes)
    except Exception:
        pass
    want = max(32 * 1024 * 1024, 4 * int(resident_bytes))
    return int(min(want, (cap * 3) // 4))


def local_mp_forward(params, data):
    N = data['x'].shape[0]
    E = data['edge_index'].shape[1]
    M = data['a2c'].shape[1]
    Nc = data['x_clique'].shape[0]
    B = int(data['num_graphs'])
    f32, bf16 = jnp.float32, jnp.bfloat16

    # --- host/XLA glue: tiny-table embedding lookups ---
    x0 = sum(jnp.take(params['atom_emb'][i], data['x'][:, i], axis=0) for i in range(9))
    xc_emb = jnp.take(params['clique_emb'], data['x_clique'], axis=0)
    # BondEncoder output for ALL layers precomputed once: [L, E, H]
    ea_all = jnp.stack([
        sum(jnp.take(Lp['bond_emb'][j], data['edge_attr'][:, j], axis=0) for j in range(3))
        for Lp in params['layers']]).astype(f32)

    src = data['edge_index'][0].astype(jnp.int32)
    dst = data['edge_index'][1].astype(jnp.int32)
    row = data['a2c'][0].astype(jnp.int32)
    col = data['a2c'][1].astype(jnp.int32)
    batch = data['batch'].astype(jnp.int32)

    def oh_cols(idx, n, dt):   # [len(idx), n] : out[k, r] = (idx[k] == r)
        return (idx[:, None] == jnp.arange(n, dtype=jnp.int32)[None, :]).astype(dt)

    def oh_rows(idx, n, dt):   # [n, len(idx)] : out[r, k] = (idx[k] == r)
        return (jnp.arange(n, dtype=jnp.int32)[:, None] == idx[None, :]).astype(dt)

    g_src = oh_cols(src, N, bf16)                     # [E, N]  gather one-hot
    s_dst = oh_rows(dst, N, bf16)                     # [N, E]  scatter one-hot
    # a2c incidence A[c, n] = #a2c-edges (row=n, col=c); small ints, exact in bf16
    a_f32 = oh_rows(col, Nc, f32) @ oh_cols(row, N, f32)   # [Nc, N]
    a_inc = a_f32.astype(bf16)
    at_inc = a_f32.T.astype(bf16)                     # [N, Nc]
    r_mat = oh_rows(batch, B, f32)                    # [B, N]  readout kept f32

    stack = lambda k, dt=f32: jnp.stack([Lp[k] for Lp in params['layers']]).astype(dt)
    vmem_inputs = (
        g_src, s_dst, a_inc, at_inc, r_mat,
        x0.astype(f32), xc_emb.astype(f32), ea_all,
        params['clique_W'].astype(bf16), params['clique_b'].astype(f32),
        stack('W1', bf16), stack('b1'), stack('g1'), stack('be1'),
        stack('W2', bf16), stack('b2'), stack('gg'), stack('bg'),
        stack('gs'), stack('bs'),
        stack('Wa', bf16), stack('ba'), stack('Wc', bf16), stack('bc'),
    )

    vmem = pl.BlockSpec(memory_space=pltpu.MemorySpace.VMEM)

    # advisory cost estimate for XLA's scheduler (everything is a matmul now)
    mm = lambda m, k, n: 2 * m * k * n
    flops = (mm(Nc, H, H)                                   # clique Linear
             + NUM_LAYERS * (mm(E, N, H) + mm(N, E, H)      # gather + scatter
                             + mm(N, H, 2 * H) + mm(N, 2 * H, H)   # GINE nn
                             + mm(Nc, N, H) + mm(Nc, H, H)  # atom -> clique
                             + mm(N, Nc, H) + mm(N, H, H))  # clique -> atom
             + mm(B, N, H))                                 # readout
    in_bytes = sum(int(a.size) * a.dtype.itemsize for a in vmem_inputs)
    out_bytes = (Nc * H + B * H) * 4
    cost = pl.CostEstimate(flops=int(flops), transcendentals=0,
                           bytes_accessed=int(in_bytes + out_bytes))

    x_clique, graph_readout = pl.pallas_call(
        local_mp_fused_kernel,
        out_shape=(jax.ShapeDtypeStruct((Nc, H), jnp.float32),
                   jax.ShapeDtypeStruct((B, H), jnp.float32)),
        in_specs=[vmem] * len(vmem_inputs),
        out_specs=(vmem, vmem),
        compiler_params=pltpu.CompilerParams(
            vmem_limit_bytes=_pick_vmem_limit(in_bytes + out_bytes)),
        cost_estimate=cost,
    )(*vmem_inputs)

    # no_tree=False, return_graph=False -> (x_clique, graph_readout)
    return x_clique, graph_readout


# ----------------------------------------------------------------------------
# parameters (deterministic, PyTorch-shaped)
# ----------------------------------------------------------------------------
def init_params(key):
    keys = iter(jax.random.split(key, 128))

    def w(shape, scale=0.1):
        return jax.random.normal(next(keys), shape, jnp.float32) * scale

    p = {
        'atom_emb': [w((100, H), 1.0) for _ in range(9)],   # AtomEncoder: 9 x Embedding(100,H)
        'clique_emb': w((4, H), 1.0),                       # Embedding(4, H)
        'clique_W': w((H, H)), 'clique_b': w((1, H)),       # Linear(H, out)
        'layers': [],
    }
    for _ in range(NUM_LAYERS):
        p['layers'].append({
            'bond_emb': [w((6, H), 1.0) for _ in range(3)],  # BondEncoder: 3 x Embedding(6,H)
            'W1': w((H, 2 * H)), 'b1': w((1, 2 * H)),        # nn Linear(H, 2H)
            'g1': jnp.ones((1, 2 * H), jnp.float32),         # nn BatchNorm1d(2H)
            'be1': jnp.zeros((1, 2 * H), jnp.float32),
            'W2': w((2 * H, H)), 'b2': w((1, H)),            # nn Linear(2H, H)
            'gg': jnp.ones((1, H), jnp.float32),             # graph_norm
            'bg': jnp.zeros((1, H), jnp.float32),
            'gs': jnp.ones((1, H), jnp.float32),             # sub_norm
            'bs': jnp.zeros((1, H), jnp.float32),
            'Wa': w((H, H)), 'ba': w((1, H)),                # atom2clique_lin
            'Wc': w((H, H)), 'bc': w((1, H)),                # clique2atom_lin
        })
    return p


# ----------------------------------------------------------------------------
# pure-JAX f32 reference (for correctness check)
# ----------------------------------------------------------------------------
def ref_forward(params, data):
    def bn(t, g, b):
        mu = jnp.mean(t, axis=0, keepdims=True)
        var = jnp.mean((t - mu) ** 2, axis=0, keepdims=True)
        return (t - mu) / jnp.sqrt(var + BN_EPS) * g + b

    N = data['x'].shape[0]
    x = sum(jnp.take(params['atom_emb'][i], data['x'][:, i], axis=0) for i in range(9))
    xc = jnp.take(params['clique_emb'], data['x_clique'], axis=0)
    xc = xc @ params['clique_W'] + params['clique_b']
    src, dst = data['edge_index'][0], data['edge_index'][1]
    row, col = data['a2c'][0], data['a2c'][1]
    Nc = xc.shape[0]

    for L in params['layers']:
        ea = sum(jnp.take(L['bond_emb'][j], data['edge_attr'][:, j], axis=0) for j in range(3))
        msg = jnp.maximum(x[src] + ea, 0.0)
        agg = jax.ops.segment_sum(msg, dst, num_segments=N)
        h = (1.0 + GINE_EPS) * x + agg
        t = jnp.maximum(bn(h @ L['W1'] + L['b1'], L['g1'], L['be1']), 0.0)
        x = jnp.maximum(bn(t @ L['W2'] + L['b2'], L['gg'], L['bg']), 0.0)
        agg_c = jax.ops.segment_sum(x[row], col, num_segments=Nc)
        xc = xc + jnp.maximum(agg_c @ L['Wa'] + L['ba'], 0.0)
        xc = bn(xc, L['gs'], L['bs'])
        agg_a = jax.ops.segment_sum(xc[col], row, num_segments=N)
        c2a = agg_a @ L['Wc'] + L['bc']
        x = x + jnp.where(c2a > 0, c2a, LEAKY_SLOPE * c2a)

    ro = jax.ops.segment_sum(x, data['batch'], num_segments=data['num_graphs'])
    return xc, ro


def _rel_err(a, b):
    return float(jnp.linalg.norm((a - b).ravel()) / (jnp.linalg.norm(b.ravel()) + 1e-12))


# ----------------------------------------------------------------------------
if __name__ == "__main__":
    key = jax.random.PRNGKey(0)
    kp, kx, kc, ke, kei, kr, kcol = jax.random.split(key, 7)

    N, E, Nc, M, B = 16, 32, 8, 24, 2   # small graph batch
    params = init_params(kp)
    data = {
        'x': jax.random.randint(kx, (N, 9), 0, 100, jnp.int32),           # data.x
        'x_clique': jax.random.randint(kc, (Nc,), 0, 4, jnp.int32),       # data.x_clique
        'edge_attr': jax.random.randint(ke, (E, 3), 0, 6, jnp.int32),     # data.edge_attr_graph
        'edge_index': jax.random.randint(kei, (2, E), 0, N, jnp.int32),   # data.edge_index_graph
        'a2c': jnp.stack([jax.random.randint(kr, (M,), 0, N, jnp.int32),  # data.atom2clique_index
                          jax.random.randint(kcol, (M,), 0, Nc, jnp.int32)]),
        'batch': jnp.repeat(jnp.arange(B, dtype=jnp.int32), N // B),      # data.batch
        'num_graphs': B,
    }

    x_clique, graph_readout = local_mp_forward(params, data)
    jax.block_until_ready((x_clique, graph_readout))

    xc_ref, ro_ref = ref_forward(params, data)
    # bf16 operands feed the MXU matmuls (f32 accumulation, f32 readout), so compare against
    # the pure-f32 reference with an L2 relative-error criterion plus a coarse elementwise guard.
    err_xc = _rel_err(x_clique, xc_ref)
    err_ro = _rel_err(graph_readout, ro_ref)
    assert err_xc < 3e-2, f"x_clique rel err {err_xc}"
    assert err_ro < 3e-2, f"readout rel err {err_ro}"
    assert jnp.allclose(x_clique, xc_ref, rtol=1e-1, atol=1e-1), "x_clique mismatch"
    assert jnp.allclose(graph_readout, ro_ref, rtol=1e-1, atol=1e-1), "readout mismatch"

    print("KERNEL_OK")
</pallas_src>

<mosaic_0001>
module attributes {stable_mosaic.version = 11 : i64} {
  func.func @local_mp_fused_kernel(%arg0: memref<32x16xbf16, #tpu.memory_space<vmem>>, %arg1: memref<16x32xbf16, #tpu.memory_space<vmem>>, %arg2: memref<8x16xbf16, #tpu.memory_space<vmem>>, %arg3: memref<16x8xbf16, #tpu.memory_space<vmem>>, %arg4: memref<2x16xf32, #tpu.memory_space<vmem>>, %arg5: memref<16x64xf32, #tpu.memory_space<vmem>>, %arg6: memref<8x64xf32, #tpu.memory_space<vmem>>, %arg7: memref<3x32x64xf32, #tpu.memory_space<vmem>>, %arg8: memref<64x64xbf16, #tpu.memory_space<vmem>>, %arg9: memref<1x64xf32, #tpu.memory_space<vmem>>, %arg10: memref<3x64x128xbf16, #tpu.memory_space<vmem>>, %arg11: memref<3x1x128xf32, #tpu.memory_space<vmem>>, %arg12: memref<3x1x128xf32, #tpu.memory_space<vmem>>, %arg13: memref<3x1x128xf32, #tpu.memory_space<vmem>>, %arg14: memref<3x128x64xbf16, #tpu.memory_space<vmem>>, %arg15: memref<3x1x64xf32, #tpu.memory_space<vmem>>, %arg16: memref<3x1x64xf32, #tpu.memory_space<vmem>>, %arg17: memref<3x1x64xf32, #tpu.memory_space<vmem>>, %arg18: memref<3x1x64xf32, #tpu.memory_space<vmem>>, %arg19: memref<3x1x64xf32, #tpu.memory_space<vmem>>, %arg20: memref<3x64x64xbf16, #tpu.memory_space<vmem>>, %arg21: memref<3x1x64xf32, #tpu.memory_space<vmem>>, %arg22: memref<3x64x64xbf16, #tpu.memory_space<vmem>>, %arg23: memref<3x1x64xf32, #tpu.memory_space<vmem>>, %arg24: memref<8x64xf32, #tpu.memory_space<vmem>>, %arg25: memref<2x64xf32, #tpu.memory_space<vmem>>) attributes {dimension_semantics = [], scalar_prefetch = 0 : i64, scratch_operands = 0 : i64, tpu.core_type = #tpu.core_type<tc>} {
    %c0 = arith.constant 0 : index
    %c0_0 = arith.constant 0 : index
    %0 = vector.load %arg0[%c0, %c0_0] : memref<32x16xbf16, #tpu.memory_space<vmem>>, vector<32x16xbf16>
    %c0_1 = arith.constant 0 : index
    %c0_2 = arith.constant 0 : index
    %1 = vector.load %arg1[%c0_1, %c0_2] : memref<16x32xbf16, #tpu.memory_space<vmem>>, vector<16x32xbf16>
    %c0_3 = arith.constant 0 : index
    %c0_4 = arith.constant 0 : index
    %2 = vector.load %arg2[%c0_3, %c0_4] : memref<8x16xbf16, #tpu.memory_space<vmem>>, vector<8x16xbf16>
    %c0_5 = arith.constant 0 : index
    %c0_6 = arith.constant 0 : index
    %3 = vector.load %arg3[%c0_5, %c0_6] : memref<16x8xbf16, #tpu.memory_space<vmem>>, vector<16x8xbf16>
    %c0_7 = arith.constant 0 : index
    %c0_8 = arith.constant 0 : index
    %4 = vector.load %arg5[%c0_7, %c0_8] : memref<16x64xf32, #tpu.memory_space<vmem>>, vector<16x64xf32>
    %c0_9 = arith.constant 0 : index
    %c0_10 = arith.constant 0 : index
    %5 = vector.load %arg6[%c0_9, %c0_10] : memref<8x64xf32, #tpu.memory_space<vmem>>, vector<8x64xf32>
    %c0_11 = arith.constant 0 : index
    %c0_12 = arith.constant 0 : index
    %6 = vector.load %arg8[%c0_11, %c0_12] : memref<64x64xbf16, #tpu.memory_space<vmem>>, vector<64x64xbf16>
    %7 = arith.truncf %5 : vector<8x64xf32> to vector<8x64xbf16>
    %cst = arith.constant dense<0.000000e+00> : vector<8x64xf32>
    %8 = tpu.matmul %7, %6, %cst {dimension_numbers = #tpu.dot_dimension_numbers<[1], [0], [0], [1], [0, 0, 1, 1], [], []>} : vector<8x64xbf16>, vector<64x64xbf16>, vector<8x64xf32> -> vector<8x64xf32>
    %c0_13 = arith.constant 0 : index
    %c0_14 = arith.constant 0 : index
    %9 = vector.load %arg9[%c0_13, %c0_14] : memref<1x64xf32, #tpu.memory_space<vmem>>, vector<1x64xf32>
    %10 = vector.broadcast %9 : vector<1x64xf32> to vector<8x64xf32>
    %11 = arith.addf %8, %10 : vector<8x64xf32>
    %12 = arith.truncf %4 : vector<16x64xf32> to vector<16x64xbf16>
    %cst_15 = arith.constant dense<0.000000e+00> : vector<32x64xf32>
    %13 = tpu.matmul %0, %12, %cst_15 {dimension_numbers = #tpu.dot_dimension_numbers<[1], [0], [0], [1], [0, 0, 1, 1], [], []>} : vector<32x16xbf16>, vector<16x64xbf16>, vector<32x64xf32> -> vector<32x64xf32>
    %c0_16 = arith.constant 0 : index
    %c0_17 = arith.constant 0 : index
    %c0_18 = arith.constant 0 : index
    %14 = vector.load %arg7[%c0_16, %c0_17, %c0_18] : memref<3x32x64xf32, #tpu.memory_space<vmem>>, vector<1x32x64xf32>
    %15 = vector.shape_cast %14 : vector<1x32x64xf32> to vector<32x64xf32>
    %16 = arith.addf %13, %15 : vector<32x64xf32>
    %cst_19 = arith.constant 0.000000e+00 : f32
    %17 = vector.broadcast %cst_19 : f32 to vector<32x64xf32>
    %18 = arith.maximumf %16, %17 : vector<32x64xf32>
    %19 = arith.truncf %18 : vector<32x64xf32> to vector<32x64xbf16>
    %cst_20 = arith.constant dense<0.000000e+00> : vector<16x64xf32>
    %20 = tpu.matmul %1, %19, %cst_20 {dimension_numbers = #tpu.dot_dimension_numbers<[1], [0], [0], [1], [0, 0, 1, 1], [], []>} : vector<16x32xbf16>, vector<32x64xbf16>, vector<16x64xf32> -> vector<16x64xf32>
    %cst_21 = arith.constant 1.000000e+00 : f32
    %21 = vector.broadcast %cst_21 : f32 to vector<16x64xf32>
    %22 = arith.mulf %21, %4 : vector<16x64xf32>
    %23 = arith.addf %22, %20 : vector<16x64xf32>
    %c0_22 = arith.constant 0 : index
    %c0_23 = arith.constant 0 : index
    %c0_24 = arith.constant 0 : index
    %24 = vector.load %arg10[%c0_22, %c0_23, %c0_24] : memref<3x64x128xbf16, #tpu.memory_space<vmem>>, vector<1x64x128xbf16>
    %25 = vector.shape_cast %24 : vector<1x64x128xbf16> to vector<64x128xbf16>
    %26 = arith.truncf %23 : vector<16x64xf32> to vector<16x64xbf16>
    %cst_25 = arith.constant dense<0.000000e+00> : vector<16x128xf32>
    %27 = tpu.matmul %26, %25, %cst_25 {dimension_numbers = #tpu.dot_dimension_numbers<[1], [0], [0], [1], [0, 0, 1, 1], [], []>} : vector<16x64xbf16>, vector<64x128xbf16>, vector<16x128xf32> -> vector<16x128xf32>
    %c0_26 = arith.constant 0 : index
    %c0_27 = arith.constant 0 : index
    %c0_28 = arith.constant 0 : index
    %28 = vector.load %arg11[%c0_26, %c0_27, %c0_28] : memref<3x1x128xf32, #tpu.memory_space<vmem>>, vector<1x1x128xf32>
    %29 = vector.shape_cast %28 : vector<1x1x128xf32> to vector<1x128xf32>
    %30 = vector.broadcast %29 : vector<1x128xf32> to vector<16x128xf32>
    %31 = arith.addf %27, %30 : vector<16x128xf32>
    %c0_29 = arith.constant 0 : index
    %c0_30 = arith.constant 0 : index
    %c0_31 = arith.constant 0 : index
    %32 = vector.load %arg12[%c0_29, %c0_30, %c0_31] : memref<3x1x128xf32, #tpu.memory_space<vmem>>, vector<1x1x128xf32>
    %33 = vector.shape_cast %32 : vector<1x1x128xf32> to vector<1x128xf32>
    %c0_32 = arith.constant 0 : index
    %c0_33 = arith.constant 0 : index
    %c0_34 = arith.constant 0 : index
    %34 = vector.load %arg13[%c0_32, %c0_33, %c0_34] : memref<3x1x128xf32, #tpu.memory_space<vmem>>, vector<1x1x128xf32>
    %35 = vector.shape_cast %34 : vector<1x1x128xf32> to vector<1x128xf32>
    %cst_35 = arith.constant dense<0.000000e+00> : vector<128xf32>
    %36 = vector.multi_reduction <add>, %31, %cst_35 [0] : vector<16x128xf32> to vector<128xf32>
    %37 = vector.shape_cast %36 : vector<128xf32> to vector<1x128xf32>
    %cst_36 = arith.constant 1.600000e+01 : f32
    %38 = vector.broadcast %cst_36 : f32 to vector<1x128xf32>
    %39 = arith.divf %37, %38 : vector<1x128xf32>
    %40 = vector.broadcast %39 : vector<1x128xf32> to vector<16x128xf32>
    %41 = arith.subf %31, %40 : vector<16x128xf32>
    %42 = arith.mulf %41, %41 : vector<16x128xf32>
    %cst_37 = arith.constant dense<0.000000e+00> : vector<128xf32>
    %43 = vector.multi_reduction <add>, %42, %cst_37 [0] : vector<16x128xf32> to vector<128xf32>
    %44 = vector.shape_cast %43 : vector<128xf32> to vector<1x128xf32>
    %cst_38 = arith.constant 1.600000e+01 : f32
    %45 = vector.broadcast %cst_38 : f32 to vector<1x128xf32>
    %46 = arith.divf %44, %45 : vector<1x128xf32>
    %47 = vector.broadcast %39 : vector<1x128xf32> to vector<16x128xf32>
    %48 = arith.subf %31, %47 : vector<16x128xf32>
    %cst_39 = arith.constant 9.99999974E-6 : f32
    %49 = vector.broadcast %cst_39 : f32 to vector<1x128xf32>
    %50 = arith.addf %46, %49 : vector<1x128xf32>
    %51 = math.rsqrt %50 : vector<1x128xf32>
    %52 = vector.broadcast %51 : vector<1x128xf32> to vector<16x128xf32>
    %53 = arith.mulf %48, %52 : vector<16x128xf32>
    %54 = vector.broadcast %33 : vector<1x128xf32> to vector<16x128xf32>
    %55 = arith.mulf %53, %54 : vector<16x128xf32>
    %56 = vector.broadcast %35 : vector<1x128xf32> to vector<16x128xf32>
    %57 = arith.addf %55, %56 : vector<16x128xf32>
    %cst_40 = arith.constant 0.000000e+00 : f32
    %58 = vector.broadcast %cst_40 : f32 to vector<16x128xf32>
    %59 = arith.maximumf %57, %58 : vector<16x128xf32>
    %c0_41 = arith.constant 0 : index
    %c0_42 = arith.constant 0 : index
    %c0_43 = arith.constant 0 : index
    %60 = vector.load %arg14[%c0_41, %c0_42, %c0_43] : memref<3x128x64xbf16, #tpu.memory_space<vmem>>, vector<1x128x64xbf16>
    %61 = vector.shape_cast %60 : vector<1x128x64xbf16> to vector<128x64xbf16>
    %62 = arith.truncf %59 : vector<16x128xf32> to vector<16x128xbf16>
    %cst_44 = arith.constant dense<0.000000e+00> : vector<16x64xf32>
    %63 = tpu.matmul %62, %61, %cst_44 {dimension_numbers = #tpu.dot_dimension_numbers<[1], [0], [0], [1], [0, 0, 1, 1], [], []>} : vector<16x128xbf16>, vector<128x64xbf16>, vector<16x64xf32> -> vector<16x64xf32>
    %c0_45 = arith.constant 0 : index
    %c0_46 = arith.constant 0 : index
    %c0_47 = arith.constant 0 : index
    %64 = vector.load %arg15[%c0_45, %c0_46, %c0_47] : memref<3x1x64xf32, #tpu.memory_space<vmem>>, vector<1x1x64xf32>
    %65 = vector.shape_cast %64 : vector<1x1x64xf32> to vector<1x64xf32>
    %66 = vector.broadcast %65 : vector<1x64xf32> to vector<16x64xf32>
    %67 = arith.addf %63, %66 : vector<16x64xf32>
    %c0_48 = arith.constant 0 : index
    %c0_49 = arith.constant 0 : index
    %c0_50 = arith.constant 0 : index
    %68 = vector.load %arg16[%c0_48, %c0_49, %c0_50] : memref<3x1x64xf32, #tpu.memory_space<vmem>>, vector<1x1x64xf32>
    %69 = vector.shape_cast %68 : vector<1x1x64xf32> to vector<1x64xf32>
    %c0_51 = arith.constant 0 : index
    %c0_52 = arith.constant 0 : index
    %c0_53 = arith.constant 0 : index
    %70 = vector.load %arg17[%c0_51, %c0_52, %c0_53] : memref<3x1x64xf32, #tpu.memory_space<vmem>>, vector<1x1x64xf32>
    %71 = vector.shape_cast %70 : vector<1x1x64xf32> to vector<1x64xf32>
    %cst_54 = arith.constant dense<0.000000e+00> : vector<64xf32>
    %72 = vector.multi_reduction <add>, %67, %cst_54 [0] : vector<16x64xf32> to vector<64xf32>
    %73 = vector.shape_cast %72 : vector<64xf32> to vector<1x64xf32>
    %cst_55 = arith.constant 1.600000e+01 : f32
    %74 = vector.broadcast %cst_55 : f32 to vector<1x64xf32>
    %75 = arith.divf %73, %74 : vector<1x64xf32>
    %76 = vector.broadcast %75 : vector<1x64xf32> to vector<16x64xf32>
    %77 = arith.subf %67, %76 : vector<16x64xf32>
    %78 = arith.mulf %77, %77 : vector<16x64xf32>
    %cst_56 = arith.constant dense<0.000000e+00> : vector<64xf32>
    %79 = vector.multi_reduction <add>, %78, %cst_56 [0] : vector<16x64xf32> to vector<64xf32>
    %80 = vector.shape_cast %79 : vector<64xf32> to vector<1x64xf32>
    %cst_57 = arith.constant 1.600000e+01 : f32
    %81 = vector.broadcast %cst_57 : f32 to vector<1x64xf32>
    %82 = arith.divf %80, %81 : vector<1x64xf32>
    %83 = vector.broadcast %75 : vector<1x64xf32> to vector<16x64xf32>
    %84 = arith.subf %67, %83 : vector<16x64xf32>
    %cst_58 = arith.constant 9.99999974E-6 : f32
    %85 = vector.broadcast %cst_58 : f32 to vector<1x64xf32>
    %86 = arith.addf %82, %85 : vector<1x64xf32>
    %87 = math.rsqrt %86 : vector<1x64xf32>
    %88 = vector.broadcast %87 : vector<1x64xf32> to vector<16x64xf32>
    %89 = arith.mulf %84, %88 : vector<16x64xf32>
    %90 = vector.broadcast %69 : vector<1x64xf32> to vector<16x64xf32>
    %91 = arith.mulf %89, %90 : vector<16x64xf32>
    %92 = vector.broadcast %71 : vector<1x64xf32> to vector<16x64xf32>
    %93 = arith.addf %91, %92 : vector<16x64xf32>
    %cst_59 = arith.constant 0.000000e+00 : f32
    %94 = vector.broadcast %cst_59 : f32 to vector<16x64xf32>
    %95 = arith.maximumf %93, %94 : vector<16x64xf32>
    %96 = arith.truncf %95 : vector<16x64xf32> to vector<16x64xbf16>
    %cst_60 = arith.constant dense<0.000000e+00> : vector<8x64xf32>
    %97 = tpu.matmul %2, %96, %cst_60 {dimension_numbers = #tpu.dot_dimension_numbers<[1], [0], [0], [1], [0, 0, 1, 1], [], []>} : vector<8x16xbf16>, vector<16x64xbf16>, vector<8x64xf32> -> vector<8x64xf32>
    %c0_61 = arith.constant 0 : index
    %c0_62 = arith.constant 0 : index
    %c0_63 = arith.constant 0 : index
    %98 = vector.load %arg20[%c0_61, %c0_62, %c0_63] : memref<3x64x64xbf16, #tpu.memory_space<vmem>>, vector<1x64x64xbf16>
    %99 = vector.shape_cast %98 : vector<1x64x64xbf16> to vector<64x64xbf16>
    %100 = arith.truncf %97 : vector<8x64xf32> to vector<8x64xbf16>
    %cst_64 = arith.constant dense<0.000000e+00> : vector<8x64xf32>
    %101 = tpu.matmul %100, %99, %cst_64 {dimension_numbers = #tpu.dot_dimension_numbers<[1], [0], [0], [1], [0, 0, 1, 1], [], []>} : vector<8x64xbf16>, vector<64x64xbf16>, vector<8x64xf32> -> vector<8x64xf32>
    %c0_65 = arith.constant 0 : index
    %c0_66 = arith.constant 0 : index
    %c0_67 = arith.constant 0 : index
    %102 = vector.load %arg21[%c0_65, %c0_66, %c0_67] : memref<3x1x64xf32, #tpu.memory_space<vmem>>, vector<1x1x64xf32>
    %103 = vector.shape_cast %102 : vector<1x1x64xf32> to vector<1x64xf32>
    %104 = vector.broadcast %103 : vector<1x64xf32> to vector<8x64xf32>
    %105 = arith.addf %101, %104 : vector<8x64xf32>
    %cst_68 = arith.constant 0.000000e+00 : f32
    %106 = vector.broadcast %cst_68 : f32 to vector<8x64xf32>
    %107 = arith.maximumf %105, %106 : vector<8x64xf32>
    %108 = arith.addf %11, %107 : vector<8x64xf32>
    %c0_69 = arith.constant 0 : index
    %c0_70 = arith.constant 0 : index
    %c0_71 = arith.constant 0 : index
    %109 = vector.load %arg18[%c0_69, %c0_70, %c0_71] : memref<3x1x64xf32, #tpu.memory_space<vmem>>, vector<1x1x64xf32>
    %110 = vector.shape_cast %109 : vector<1x1x64xf32> to vector<1x64xf32>
    %c0_72 = arith.constant 0 : index
    %c0_73 = arith.constant 0 : index
    %c0_74 = arith.constant 0 : index
    %111 = vector.load %arg19[%c0_72, %c0_73, %c0_74] : memref<3x1x64xf32, #tpu.memory_space<vmem>>, vector<1x1x64xf32>
    %112 = vector.shape_cast %111 : vector<1x1x64xf32> to vector<1x64xf32>
    %cst_75 = arith.constant dense<0.000000e+00> : vector<64xf32>
    %113 = vector.multi_reduction <add>, %108, %cst_75 [0] : vector<8x64xf32> to vector<64xf32>
    %114 = vector.shape_cast %113 : vector<64xf32> to vector<1x64xf32>
    %cst_76 = arith.constant 8.000000e+00 : f32
    %115 = vector.broadcast %cst_76 : f32 to vector<1x64xf32>
    %116 = arith.divf %114, %115 : vector<1x64xf32>
    %117 = vector.broadcast %116 : vector<1x64xf32> to vector<8x64xf32>
    %118 = arith.subf %108, %117 : vector<8x64xf32>
    %119 = arith.mulf %118, %118 : vector<8x64xf32>
    %cst_77 = arith.constant dense<0.000000e+00> : vector<64xf32>
    %120 = vector.multi_reduction <add>, %119, %cst_77 [0] : vector<8x64xf32> to vector<64xf32>
    %121 = vector.shape_cast %120 : vector<64xf32> to vector<1x64xf32>
    %cst_78 = arith.constant 8.000000e+00 : f32
    %122 = vector.broadcast %cst_78 : f32 to vector<1x64xf32>
    %123 = arith.divf %121, %122 : vector<1x64xf32>
    %124 = vector.broadcast %116 : vector<1x64xf32> to vector<8x64xf32>
    %125 = arith.subf %108, %124 : vector<8x64xf32>
    %cst_79 = arith.constant 9.99999974E-6 : f32
    %126 = vector.broadcast %cst_79 : f32 to vector<1x64xf32>
    %127 = arith.addf %123, %126 : vector<1x64xf32>
    %128 = math.rsqrt %127 : vector<1x64xf32>
    %129 = vector.broadcast %128 : vector<1x64xf32> to vector<8x64xf32>
    %130 = arith.mulf %125, %129 : vector<8x64xf32>
    %131 = vector.broadcast %110 : vector<1x64xf32> to vector<8x64xf32>
    %132 = arith.mulf %130, %131 : vector<8x64xf32>
    %133 = vector.broadcast %112 : vector<1x64xf32> to vector<8x64xf32>
    %134 = arith.addf %132, %133 : vector<8x64xf32>
    %135 = arith.truncf %134 : vector<8x64xf32> to vector<8x64xbf16>
    %cst_80 = arith.constant dense<0.000000e+00> : vector<16x64xf32>
    %136 = tpu.matmul %3, %135, %cst_80 {dimension_numbers = #tpu.dot_dimension_numbers<[1], [0], [0], [1], [0, 0, 1, 1], [], []>} : vector<16x8xbf16>, vector<8x64xbf16>, vector<16x64xf32> -> vector<16x64xf32>
    %c0_81 = arith.constant 0 : index
    %c0_82 = arith.constant 0 : index
    %c0_83 = arith.constant 0 : index
    %137 = vector.load %arg22[%c0_81, %c0_82, %c0_83] : memref<3x64x64xbf16, #tpu.memory_space<vmem>>, vector<1x64x64xbf16>
    %138 = vector.shape_cast %137 : vector<1x64x64xbf16> to vector<64x64xbf16>
    %139 = arith.truncf %136 : vector<16x64xf32> to vector<16x64xbf16>
    %cst_84 = arith.constant dense<0.000000e+00> : vector<16x64xf32>
    %140 = tpu.matmul %139, %138, %cst_84 {dimension_numbers = #tpu.dot_dimension_numbers<[1], [0], [0], [1], [0, 0, 1, 1], [], []>} : vector<16x64xbf16>, vector<64x64xbf16>, vector<16x64xf32> -> vector<16x64xf32>
    %c0_85 = arith.constant 0 : index
    %c0_86 = arith.constant 0 : index
    %c0_87 = arith.constant 0 : index
    %141 = vector.load %arg23[%c0_85, %c0_86, %c0_87] : memref<3x1x64xf32, #tpu.memory_space<vmem>>, vector<1x1x64xf32>
    %142 = vector.shape_cast %141 : vector<1x1x64xf32> to vector<1x64xf32>
    %143 = vector.broadcast %142 : vector<1x64xf32> to vector<16x64xf32>
    %144 = arith.addf %140, %143 : vector<16x64xf32>
    %cst_88 = arith.constant 0.000000e+00 : f32
    %145 = vector.broadcast %cst_88 : f32 to vector<16x64xf32>
    %146 = arith.cmpf ogt, %144, %145 : vector<16x64xf32>
    %cst_89 = arith.constant 0.00999999977 : f32
    %147 = vector.broadcast %cst_89 : f32 to vector<16x64xf32>
    %148 = arith.mulf %147, %144 : vector<16x64xf32>
    %149 = arith.select %146, %144, %148 : vector<16x64xi1>, vector<16x64xf32>
    %150 = arith.addf %95, %149 : vector<16x64xf32>
    %151 = arith.truncf %150 : vector<16x64xf32> to vector<16x64xbf16>
    %cst_90 = arith.constant dense<0.000000e+00> : vector<32x64xf32>
    %152 = tpu.matmul %0, %151, %cst_90 {dimension_numbers = #tpu.dot_dimension_numbers<[1], [0], [0], [1], [0, 0, 1, 1], [], []>} : vector<32x16xbf16>, vector<16x64xbf16>, vector<32x64xf32> -> vector<32x64xf32>
    %c1 = arith.constant 1 : index
    %c0_91 = arith.constant 0 : index
    %c0_92 = arith.constant 0 : index
    %153 = vector.load %arg7[%c1, %c0_91, %c0_92] : memref<3x32x64xf32, #tpu.memory_space<vmem>>, vector<1x32x64xf32>
    %154 = vector.shape_cast %153 : vector<1x32x64xf32> to vector<32x64xf32>
    %155 = arith.addf %152, %154 : vector<32x64xf32>
    %cst_93 = arith.constant 0.000000e+00 : f32
    %156 = vector.broadcast %cst_93 : f32 to vector<32x64xf32>
    %157 = arith.maximumf %155, %156 : vector<32x64xf32>
    %158 = arith.truncf %157 : vector<32x64xf32> to vector<32x64xbf16>
    %cst_94 = arith.constant dense<0.000000e+00> : vector<16x64xf32>
    %159 = tpu.matmul %1, %158, %cst_94 {dimension_numbers = #tpu.dot_dimension_numbers<[1], [0], [0], [1], [0, 0, 1, 1], [], []>} : vector<16x32xbf16>, vector<32x64xbf16>, vector<16x64xf32> -> vector<16x64xf32>
    %cst_95 = arith.constant 1.000000e+00 : f32
    %160 = vector.broadcast %cst_95 : f32 to vector<16x64xf32>
    %161 = arith.mulf %160, %150 : vector<16x64xf32>
    %162 = arith.addf %161, %159 : vector<16x64xf32>
    %c1_96 = arith.constant 1 : index
    %c0_97 = arith.constant 0 : index
    %c0_98 = arith.constant 0 : index
    %163 = vector.load %arg10[%c1_96, %c0_97, %c0_98] : memref<3x64x128xbf16, #tpu.memory_space<vmem>>, vector<1x64x128xbf16>
    %164 = vector.shape_cast %163 : vector<1x64x128xbf16> to vector<64x128xbf16>
    %165 = arith.truncf %162 : vector<16x64xf32> to vector<16x64xbf16>
    %cst_99 = arith.constant dense<0.000000e+00> : vector<16x128xf32>
    %166 = tpu.matmul %165, %164, %cst_99 {dimension_numbers = #tpu.dot_dimension_numbers<[1], [0], [0], [1], [0, 0, 1, 1], [], []>} : vector<16x64xbf16>, vector<64x128xbf16>, vector<16x128xf32> -> vector<16x128xf32>
    %c1_100 = arith.constant 1 : index
    %c0_101 = arith.constant 0 : index
    %c0_102 = arith.constant 0 : index
    %167 = vector.load %arg11[%c1_100, %c0_101, %c0_102] : memref<3x1x128xf32, #tpu.memory_space<vmem>>, vector<1x1x128xf32>
    %168 = vector.shape_cast %167 : vector<1x1x128xf32> to vector<1x128xf32>
    %169 = vector.broadcast %168 : vector<1x128xf32> to vector<16x128xf32>
    %170 = arith.addf %166, %169 : vector<16x128xf32>
    %c1_103 = arith.constant 1 : index
    %c0_104 = arith.constant 0 : index
    %c0_105 = arith.constant 0 : index
    %171 = vector.load %arg12[%c1_103, %c0_104, %c0_105] : memref<3x1x128xf32, #tpu.memory_space<vmem>>, vector<1x1x128xf32>
    %172 = vector.shape_cast %171 : vector<1x1x128xf32> to vector<1x128xf32>
    %c1_106 = arith.constant 1 : index
    %c0_107 = arith.constant 0 : index
    %c0_108 = arith.constant 0 : index
    %173 = vector.load %arg13[%c1_106, %c0_107, %c0_108] : memref<3x1x128xf32, #tpu.memory_space<vmem>>, vector<1x1x128xf32>
    %174 = vector.shape_cast %173 : vector<1x1x128xf32> to vector<1x128xf32>
    %cst_109 = arith.constant dense<0.000000e+00> : vector<128xf32>
    %175 = vector.multi_reduction <add>, %170, %cst_109 [0] : vector<16x128xf32> to vector<128xf32>
    %176 = vector.shape_cast %175 : vector<128xf32> to vector<1x128xf32>
    %cst_110 = arith.constant 1.600000e+01 : f32
    %177 = vector.broadcast %cst_110 : f32 to vector<1x128xf32>
    %178 = arith.divf %176, %177 : vector<1x128xf32>
    %179 = vector.broadcast %178 : vector<1x128xf32> to vector<16x128xf32>
    %180 = arith.subf %170, %179 : vector<16x128xf32>
    %181 = arith.mulf %180, %180 : vector<16x128xf32>
    %cst_111 = arith.constant dense<0.000000e+00> : vector<128xf32>
    %182 = vector.multi_reduction <add>, %181, %cst_111 [0] : vector<16x128xf32> to vector<128xf32>
    %183 = vector.shape_cast %182 : vector<128xf32> to vector<1x128xf32>
    %cst_112 = arith.constant 1.600000e+01 : f32
    %184 = vector.broadcast %cst_112 : f32 to vector<1x128xf32>
    %185 = arith.divf %183, %184 : vector<1x128xf32>
    %186 = vector.broadcast %178 : vector<1x128xf32> to vector<16x128xf32>
    %187 = arith.subf %170, %186 : vector<16x128xf32>
    %cst_113 = arith.constant 9.99999974E-6 : f32
    %188 = vector.broadcast %cst_113 : f32 to vector<1x128xf32>
    %189 = arith.addf %185, %188 : vector<1x128xf32>
    %190 = math.rsqrt %189 : vector<1x128xf32>
    %191 = vector.broadcast %190 : vector<1x128xf32> to vector<16x128xf32>
    %192 = arith.mulf %187, %191 : vector<16x128xf32>
    %193 = vector.broadcast %172 : vector<1x128xf32> to vector<16x128xf32>
    %194 = arith.mulf %192, %193 : vector<16x128xf32>
    %195 = vector.broadcast %174 : vector<1x128xf32> to vector<16x128xf32>
    %196 = arith.addf %194, %195 : vector<16x128xf32>
    %cst_114 = arith.constant 0.000000e+00 : f32
    %197 = vector.broadcast %cst_114 : f32 to vector<16x128xf32>
    %198 = arith.maximumf %196, %197 : vector<16x128xf32>
    %c1_115 = arith.constant 1 : index
    %c0_116 = arith.constant 0 : index
    %c0_117 = arith.constant 0 : index
    %199 = vector.load %arg14[%c1_115, %c0_116, %c0_117] : memref<3x128x64xbf16, #tpu.memory_space<vmem>>, vector<1x128x64xbf16>
    %200 = vector.shape_cast %199 : vector<1x128x64xbf16> to vector<128x64xbf16>
    %201 = arith.truncf %198 : vector<16x128xf32> to vector<16x128xbf16>
    %cst_118 = arith.constant dense<0.000000e+00> : vector<16x64xf32>
    %202 = tpu.matmul %201, %200, %cst_118 {dimension_numbers = #tpu.dot_dimension_numbers<[1], [0], [0], [1], [0, 0, 1, 1], [], []>} : vector<16x128xbf16>, vector<128x64xbf16>, vector<16x64xf32> -> vector<16x64xf32>
    %c1_119 = arith.constant 1 : index
    %c0_120 = arith.constant 0 : index
    %c0_121 = arith.constant 0 : index
    %203 = vector.load %arg15[%c1_119, %c0_120, %c0_121] : memref<3x1x64xf32, #tpu.memory_space<vmem>>, vector<1x1x64xf32>
    %204 = vector.shape_cast %203 : vector<1x1x64xf32> to vector<1x64xf32>
    %205 = vector.broadcast %204 : vector<1x64xf32> to vector<16x64xf32>
    %206 = arith.addf %202, %205 : vector<16x64xf32>
    %c1_122 = arith.constant 1 : index
    %c0_123 = arith.constant 0 : index
    %c0_124 = arith.constant 0 : index
    %207 = vector.load %arg16[%c1_122, %c0_123, %c0_124] : memref<3x1x64xf32, #tpu.memory_space<vmem>>, vector<1x1x64xf32>
    %208 = vector.shape_cast %207 : vector<1x1x64xf32> to vector<1x64xf32>
    %c1_125 = arith.constant 1 : index
    %c0_126 = arith.constant 0 : index
    %c0_127 = arith.constant 0 : index
    %209 = vector.load %arg17[%c1_125, %c0_126, %c0_127] : memref<3x1x64xf32, #tpu.memory_space<vmem>>, vector<1x1x64xf32>
    %210 = vector.shape_cast %209 : vector<1x1x64xf32> to vector<1x64xf32>
    %cst_128 = arith.constant dense<0.000000e+00> : vector<64xf32>
    %211 = vector.multi_reduction <add>, %206, %cst_128 [0] : vector<16x64xf32> to vector<64xf32>
    %212 = vector.shape_cast %211 : vector<64xf32> to vector<1x64xf32>
    %cst_129 = arith.constant 1.600000e+01 : f32
    %213 = vector.broadcast %cst_129 : f32 to vector<1x64xf32>
    %214 = arith.divf %212, %213 : vector<1x64xf32>
    %215 = vector.broadcast %214 : vector<1x64xf32> to vector<16x64xf32>
    %216 = arith.subf %206, %215 : vector<16x64xf32>
    %217 = arith.mulf %216, %216 : vector<16x64xf32>
    %cst_130 = arith.constant dense<0.000000e+00> : vector<64xf32>
    %218 = vector.multi_reduction <add>, %217, %cst_130 [0] : vector<16x64xf32> to vector<64xf32>
    %219 = vector.shape_cast %218 : vector<64xf32> to vector<1x64xf32>
    %cst_131 = arith.constant 1.600000e+01 : f32
    %220 = vector.broadcast %cst_131 : f32 to vector<1x64xf32>
    %221 = arith.divf %219, %220 : vector<1x64xf32>
    %222 = vector.broadcast %214 : vector<1x64xf32> to vector<16x64xf32>
    %223 = arith.subf %206, %222 : vector<16x64xf32>
    %cst_132 = arith.constant 9.99999974E-6 : f32
    %224 = vector.broadcast %cst_132 : f32 to vector<1x64xf32>
    %225 = arith.addf %221, %224 : vector<1x64xf32>
    %226 = math.rsqrt %225 : vector<1x64xf32>
    %227 = vector.broadcast %226 : vector<1x64xf32> to vector<16x64xf32>
    %228 = arith.mulf %223, %227 : vector<16x64xf32>
    %229 = vector.broadcast %208 : vector<1x64xf32> to vector<16x64xf32>
    %230 = arith.mulf %228, %229 : vector<16x64xf32>
    %231 = vector.broadcast %210 : vector<1x64xf32> to vector<16x64xf32>
    %232 = arith.addf %230, %231 : vector<16x64xf32>
    %cst_133 = arith.constant 0.000000e+00 : f32
    %233 = vector.broadcast %cst_133 : f32 to vector<16x64xf32>
    %234 = arith.maximumf %232, %233 : vector<16x64xf32>
    %235 = arith.truncf %234 : vector<16x64xf32> to vector<16x64xbf16>
    %cst_134 = arith.constant dense<0.000000e+00> : vector<8x64xf32>
    %236 = tpu.matmul %2, %235, %cst_134 {dimension_numbers = #tpu.dot_dimension_numbers<[1], [0], [0], [1], [0, 0, 1, 1], [], []>} : vector<8x16xbf16>, vector<16x64xbf16>, vector<8x64xf32> -> vector<8x64xf32>
    %c1_135 = arith.constant 1 : index
    %c0_136 = arith.constant 0 : index
    %c0_137 = arith.constant 0 : index
    %237 = vector.load %arg20[%c1_135, %c0_136, %c0_137] : memref<3x64x64xbf16, #tpu.memory_space<vmem>>, vector<1x64x64xbf16>
    %238 = vector.shape_cast %237 : vector<1x64x64xbf16> to vector<64x64xbf16>
    %239 = arith.truncf %236 : vector<8x64xf32> to vector<8x64xbf16>
    %cst_138 = arith.constant dense<0.000000e+00> : vector<8x64xf32>
    %240 = tpu.matmul %239, %238, %cst_138 {dimension_numbers = #tpu.dot_dimension_numbers<[1], [0], [0], [1], [0, 0, 1, 1], [], []>} : vector<8x64xbf16>, vector<64x64xbf16>, vector<8x64xf32> -> vector<8x64xf32>
    %c1_139 = arith.constant 1 : index
    %c0_140 = arith.constant 0 : index
    %c0_141 = arith.constant 0 : index
    %241 = vector.load %arg21[%c1_139, %c0_140, %c0_141] : memref<3x1x64xf32, #tpu.memory_space<vmem>>, vector<1x1x64xf32>
    %242 = vector.shape_cast %241 : vector<1x1x64xf32> to vector<1x64xf32>
    %243 = vector.broadcast %242 : vector<1x64xf32> to vector<8x64xf32>
    %244 = arith.addf %240, %243 : vector<8x64xf32>
    %cst_142 = arith.constant 0.000000e+00 : f32
    %245 = vector.broadcast %cst_142 : f32 to vector<8x64xf32>
    %246 = arith.maximumf %244, %245 : vector<8x64xf32>
    %247 = arith.addf %134, %246 : vector<8x64xf32>
    %c1_143 = arith.constant 1 : index
    %c0_144 = arith.constant 0 : index
    %c0_145 = arith.constant 0 : index
    %248 = vector.load %arg18[%c1_143, %c0_144, %c0_145] : memref<3x1x64xf32, #tpu.memory_space<vmem>>, vector<1x1x64xf32>
    %249 = vector.shape_cast %248 : vector<1x1x64xf32> to vector<1x64xf32>
    %c1_146 = arith.constant 1 : index
    %c0_147 = arith.constant 0 : index
    %c0_148 = arith.constant 0 : index
    %250 = vector.load %arg19[%c1_146, %c0_147, %c0_148] : memref<3x1x64xf32, #tpu.memory_space<vmem>>, vector<1x1x64xf32>
    %251 = vector.shape_cast %250 : vector<1x1x64xf32> to vector<1x64xf32>
    %cst_149 = arith.constant dense<0.000000e+00> : vector<64xf32>
    %252 = vector.multi_reduction <add>, %247, %cst_149 [0] : vector<8x64xf32> to vector<64xf32>
    %253 = vector.shape_cast %252 : vector<64xf32> to vector<1x64xf32>
    %cst_150 = arith.constant 8.000000e+00 : f32
    %254 = vector.broadcast %cst_150 : f32 to vector<1x64xf32>
    %255 = arith.divf %253, %254 : vector<1x64xf32>
    %256 = vector.broadcast %255 : vector<1x64xf32> to vector<8x64xf32>
    %257 = arith.subf %247, %256 : vector<8x64xf32>
    %258 = arith.mulf %257, %257 : vector<8x64xf32>
    %cst_151 = arith.constant dense<0.000000e+00> : vector<64xf32>
    %259 = vector.multi_reduction <add>, %258, %cst_151 [0] : vector<8x64xf32> to vector<64xf32>
    %260 = vector.shape_cast %259 : vector<64xf32> to vector<1x64xf32>
    %cst_152 = arith.constant 8.000000e+00 : f32
    %261 = vector.broadcast %cst_152 : f32 to vector<1x64xf32>
    %262 = arith.divf %260, %261 : vector<1x64xf32>
    %263 = vector.broadcast %255 : vector<1x64xf32> to vector<8x64xf32>
    %264 = arith.subf %247, %263 : vector<8x64xf32>
    %cst_153 = arith.constant 9.99999974E-6 : f32
    %265 = vector.broadcast %cst_153 : f32 to vector<1x64xf32>
    %266 = arith.addf %262, %265 : vector<1x64xf32>
    %267 = math.rsqrt %266 : vector<1x64xf32>
    %268 = vector.broadcast %267 : vector<1x64xf32> to vector<8x64xf32>
    %269 = arith.mulf %264, %268 : vector<8x64xf32>
    %270 = vector.broadcast %249 : vector<1x64xf32> to vector<8x64xf32>
    %271 = arith.mulf %269, %270 : vector<8x64xf32>
    %272 = vector.broadcast %251 : vector<1x64xf32> to vector<8x64xf32>
    %273 = arith.addf %271, %272 : vector<8x64xf32>
    %274 = arith.truncf %273 : vector<8x64xf32> to vector<8x64xbf16>
    %cst_154 = arith.constant dense<0.000000e+00> : vector<16x64xf32>
    %275 = tpu.matmul %3, %274, %cst_154 {dimension_numbers = #tpu.dot_dimension_numbers<[1], [0], [0], [1], [0, 0, 1, 1], [], []>} : vector<16x8xbf16>, vector<8x64xbf16>, vector<16x64xf32> -> vector<16x64xf32>
    %c1_155 = arith.constant 1 : index
    %c0_156 = arith.constant 0 : index
    %c0_157 = arith.constant 0 : index
    %276 = vector.load %arg22[%c1_155, %c0_156, %c0_157] : memref<3x64x64xbf16, #tpu.memory_space<vmem>>, vector<1x64x64xbf16>
    %277 = vector.shape_cast %276 : vector<1x64x64xbf16> to vector<64x64xbf16>
    %278 = arith.truncf %275 : vector<16x64xf32> to vector<16x64xbf16>
    %cst_158 = arith.constant dense<0.000000e+00> : vector<16x64xf32>
    %279 = tpu.matmul %278, %277, %cst_158 {dimension_numbers = #tpu.dot_dimension_numbers<[1], [0], [0], [1], [0, 0, 1, 1], [], []>} : vector<16x64xbf16>, vector<64x64xbf16>, vector<16x64xf32> -> vector<16x64xf32>
    %c1_159 = arith.constant 1 : index
    %c0_160 = arith.constant 0 : index
    %c0_161 = arith.constant 0 : index
    %280 = vector.load %arg23[%c1_159, %c0_160, %c0_161] : memref<3x1x64xf32, #tpu.memory_space<vmem>>, vector<1x1x64xf32>
    %281 = vector.shape_cast %280 : vector<1x1x64xf32> to vector<1x64xf32>
    %282 = vector.broadcast %281 : vector<1x64xf32> to vector<16x64xf32>
    %283 = arith.addf %279, %282 : vector<16x64xf32>
    %cst_162 = arith.constant 0.000000e+00 : f32
    %284 = vector.broadcast %cst_162 : f32 to vector<16x64xf32>
    %285 = arith.cmpf ogt, %283, %284 : vector<16x64xf32>
    %cst_163 = arith.constant 0.00999999977 : f32
    %286 = vector.broadcast %cst_163 : f32 to vector<16x64xf32>
    %287 = arith.mulf %286, %283 : vector<16x64xf32>
    %288 = arith.select %285, %283, %287 : vector<16x64xi1>, vector<16x64xf32>
    %289 = arith.addf %234, %288 : vector<16x64xf32>
    %290 = arith.truncf %289 : vector<16x64xf32> to vector<16x64xbf16>
    %cst_164 = arith.constant dense<0.000000e+00> : vector<32x64xf32>
    %291 = tpu.matmul %0, %290, %cst_164 {dimension_numbers = #tpu.dot_dimension_numbers<[1], [0], [0], [1], [0, 0, 1, 1], [], []>} : vector<32x16xbf16>, vector<16x64xbf16>, vector<32x64xf32> -> vector<32x64xf32>
    %c2 = arith.constant 2 : index
    %c0_165 = arith.constant 0 : index
    %c0_166 = arith.constant 0 : index
    %292 = vector.load %arg7[%c2, %c0_165, %c0_166] : memref<3x32x64xf32, #tpu.memory_space<vmem>>, vector<1x32x64xf32>
    %293 = vector.shape_cast %292 : vector<1x32x64xf32> to vector<32x64xf32>
    %294 = arith.addf %291, %293 : vector<32x64xf32>
    %cst_167 = arith.constant 0.000000e+00 : f32
    %295 = vector.broadcast %cst_167 : f32 to vector<32x64xf32>
    %296 = arith.maximumf %294, %295 : vector<32x64xf32>
    %297 = arith.truncf %296 : vector<32x64xf32> to vector<32x64xbf16>
    %cst_168 = arith.constant dense<0.000000e+00> : vector<16x64xf32>
    %298 = tpu.matmul %1, %297, %cst_168 {dimension_numbers = #tpu.dot_dimension_numbers<[1], [0], [0], [1], [0, 0, 1, 1], [], []>} : vector<16x32xbf16>, vector<32x64xbf16>, vector<16x64xf32> -> vector<16x64xf32>
    %cst_169 = arith.constant 1.000000e+00 : f32
    %299 = vector.broadcast %cst_169 : f32 to vector<16x64xf32>
    %300 = arith.mulf %299, %289 : vector<16x64xf32>
    %301 = arith.addf %300, %298 : vector<16x64xf32>
    %c2_170 = arith.constant 2 : index
    %c0_171 = arith.constant 0 : index
    %c0_172 = arith.constant 0 : index
    %302 = vector.load %arg10[%c2_170, %c0_171, %c0_172] : memref<3x64x128xbf16, #tpu.memory_space<vmem>>, vector<1x64x128xbf16>
    %303 = vector.shape_cast %302 : vector<1x64x128xbf16> to vector<64x128xbf16>
    %304 = arith.truncf %301 : vector<16x64xf32> to vector<16x64xbf16>
    %cst_173 = arith.constant dense<0.000000e+00> : vector<16x128xf32>
    %305 = tpu.matmul %304, %303, %cst_173 {dimension_numbers = #tpu.dot_dimension_numbers<[1], [0], [0], [1], [0, 0, 1, 1], [], []>} : vector<16x64xbf16>, vector<64x128xbf16>, vector<16x128xf32> -> vector<16x128xf32>
    %c2_174 = arith.constant 2 : index
    %c0_175 = arith.constant 0 : index
    %c0_176 = arith.constant 0 : index
    %306 = vector.load %arg11[%c2_174, %c0_175, %c0_176] : memref<3x1x128xf32, #tpu.memory_space<vmem>>, vector<1x1x128xf32>
    %307 = vector.shape_cast %306 : vector<1x1x128xf32> to vector<1x128xf32>
    %308 = vector.broadcast %307 : vector<1x128xf32> to vector<16x128xf32>
    %309 = arith.addf %305, %308 : vector<16x128xf32>
    %c2_177 = arith.constant 2 : index
    %c0_178 = arith.constant 0 : index
    %c0_179 = arith.constant 0 : index
    %310 = vector.load %arg12[%c2_177, %c0_178, %c0_179] : memref<3x1x128xf32, #tpu.memory_space<vmem>>, vector<1x1x128xf32>
    %311 = vector.shape_cast %310 : vector<1x1x128xf32> to vector<1x128xf32>
    %c2_180 = arith.constant 2 : index
    %c0_181 = arith.constant 0 : index
    %c0_182 = arith.constant 0 : index
    %312 = vector.load %arg13[%c2_180, %c0_181, %c0_182] : memref<3x1x128xf32, #tpu.memory_space<vmem>>, vector<1x1x128xf32>
    %313 = vector.shape_cast %312 : vector<1x1x128xf32> to vector<1x128xf32>
    %cst_183 = arith.constant dense<0.000000e+00> : vector<128xf32>
    %314 = vector.multi_reduction <add>, %309, %cst_183 [0] : vector<16x128xf32> to vector<128xf32>
    %315 = vector.shape_cast %314 : vector<128xf32> to vector<1x128xf32>
    %cst_184 = arith.constant 1.600000e+01 : f32
    %316 = vector.broadcast %cst_184 : f32 to vector<1x128xf32>
    %317 = arith.divf %315, %316 : vector<1x128xf32>
    %318 = vector.broadcast %317 : vector<1x128xf32> to vector<16x128xf32>
    %319 = arith.subf %309, %318 : vector<16x128xf32>
    %320 = arith.mulf %319, %319 : vector<16x128xf32>
    %cst_185 = arith.constant dense<0.000000e+00> : vector<128xf32>
    %321 = vector.multi_reduction <add>, %320, %cst_185 [0] : vector<16x128xf32> to vector<128xf32>
    %322 = vector.shape_cast %321 : vector<128xf32> to vector<1x128xf32>
    %cst_186 = arith.constant 1.600000e+01 : f32
    %323 = vector.broadcast %cst_186 : f32 to vector<1x128xf32>
    %324 = arith.divf %322, %323 : vector<1x128xf32>
    %325 = vector.broadcast %317 : vector<1x128xf32> to vector<16x128xf32>
    %326 = arith.subf %309, %325 : vector<16x128xf32>
    %cst_187 = arith.constant 9.99999974E-6 : f32
    %327 = vector.broadcast %cst_187 : f32 to vector<1x128xf32>
    %328 = arith.addf %324, %327 : vector<1x128xf32>
    %329 = math.rsqrt %328 : vector<1x128xf32>
    %330 = vector.broadcast %329 : vector<1x128xf32> to vector<16x128xf32>
    %331 = arith.mulf %326, %330 : vector<16x128xf32>
    %332 = vector.broadcast %311 : vector<1x128xf32> to vector<16x128xf32>
    %333 = arith.mulf %331, %332 : vector<16x128xf32>
    %334 = vector.broadcast %313 : vector<1x128xf32> to vector<16x128xf32>
    %335 = arith.addf %333, %334 : vector<16x128xf32>
    %cst_188 = arith.constant 0.000000e+00 : f32
    %336 = vector.broadcast %cst_188 : f32 to vector<16x128xf32>
    %337 = arith.maximumf %335, %336 : vector<16x128xf32>
    %c2_189 = arith.constant 2 : index
    %c0_190 = arith.constant 0 : index
    %c0_191 = arith.constant 0 : index
    %338 = vector.load %arg14[%c2_189, %c0_190, %c0_191] : memref<3x128x64xbf16, #tpu.memory_space<vmem>>, vector<1x128x64xbf16>
    %339 = vector.shape_cast %338 : vector<1x128x64xbf16> to vector<128x64xbf16>
    %340 = arith.truncf %337 : vector<16x128xf32> to vector<16x128xbf16>
    %cst_192 = arith.constant dense<0.000000e+00> : vector<16x64xf32>
    %341 = tpu.matmul %340, %339, %cst_192 {dimension_numbers = #tpu.dot_dimension_numbers<[1], [0], [0], [1], [0, 0, 1, 1], [], []>} : vector<16x128xbf16>, vector<128x64xbf16>, vector<16x64xf32> -> vector<16x64xf32>
    %c2_193 = arith.constant 2 : index
    %c0_194 = arith.constant 0 : index
    %c0_195 = arith.constant 0 : index
    %342 = vector.load %arg15[%c2_193, %c0_194, %c0_195] : memref<3x1x64xf32, #tpu.memory_space<vmem>>, vector<1x1x64xf32>
    %343 = vector.shape_cast %342 : vector<1x1x64xf32> to vector<1x64xf32>
    %344 = vector.broadcast %343 : vector<1x64xf32> to vector<16x64xf32>
    %345 = arith.addf %341, %344 : vector<16x64xf32>
    %c2_196 = arith.constant 2 : index
    %c0_197 = arith.constant 0 : index
    %c0_198 = arith.constant 0 : index
    %346 = vector.load %arg16[%c2_196, %c0_197, %c0_198] : memref<3x1x64xf32, #tpu.memory_space<vmem>>, vector<1x1x64xf32>
    %347 = vector.shape_cast %346 : vector<1x1x64xf32> to vector<1x64xf32>
    %c2_199 = arith.constant 2 : index
    %c0_200 = arith.constant 0 : index
    %c0_201 = arith.constant 0 : index
    %348 = vector.load %arg17[%c2_199, %c0_200, %c0_201] : memref<3x1x64xf32, #tpu.memory_space<vmem>>, vector<1x1x64xf32>
    %349 = vector.shape_cast %348 : vector<1x1x64xf32> to vector<1x64xf32>
    %cst_202 = arith.constant dense<0.000000e+00> : vector<64xf32>
    %350 = vector.multi_reduction <add>, %345, %cst_202 [0] : vector<16x64xf32> to vector<64xf32>
    %351 = vector.shape_cast %350 : vector<64xf32> to vector<1x64xf32>
    %cst_203 = arith.constant 1.600000e+01 : f32
    %352 = vector.broadcast %cst_203 : f32 to vector<1x64xf32>
    %353 = arith.divf %351, %352 : vector<1x64xf32>
    %354 = vector.broadcast %353 : vector<1x64xf32> to vector<16x64xf32>
    %355 = arith.subf %345, %354 : vector<16x64xf32>
    %356 = arith.mulf %355, %355 : vector<16x64xf32>
    %cst_204 = arith.constant dense<0.000000e+00> : vector<64xf32>
    %357 = vector.multi_reduction <add>, %356, %cst_204 [0] : vector<16x64xf32> to vector<64xf32>
    %358 = vector.shape_cast %357 : vector<64xf32> to vector<1x64xf32>
    %cst_205 = arith.constant 1.600000e+01 : f32
    %359 = vector.broadcast %cst_205 : f32 to vector<1x64xf32>
    %360 = arith.divf %358, %359 : vector<1x64xf32>
    %361 = vector.broadcast %353 : vector<1x64xf32> to vector<16x64xf32>
    %362 = arith.subf %345, %361 : vector<16x64xf32>
    %cst_206 = arith.constant 9.99999974E-6 : f32
    %363 = vector.broadcast %cst_206 : f32 to vector<1x64xf32>
    %364 = arith.addf %360, %363 : vector<1x64xf32>
    %365 = math.rsqrt %364 : vector<1x64xf32>
    %366 = vector.broadcast %365 : vector<1x64xf32> to vector<16x64xf32>
    %367 = arith.mulf %362, %366 : vector<16x64xf32>
    %368 = vector.broadcast %347 : vector<1x64xf32> to vector<16x64xf32>
    %369 = arith.mulf %367, %368 : vector<16x64xf32>
    %370 = vector.broadcast %349 : vector<1x64xf32> to vector<16x64xf32>
    %371 = arith.addf %369, %370 : vector<16x64xf32>
    %cst_207 = arith.constant 0.000000e+00 : f32
    %372 = vector.broadcast %cst_207 : f32 to vector<16x64xf32>
    %373 = arith.maximumf %371, %372 : vector<16x64xf32>
    %374 = arith.truncf %373 : vector<16x64xf32> to vector<16x64xbf16>
    %cst_208 = arith.constant dense<0.000000e+00> : vector<8x64xf32>
    %375 = tpu.matmul %2, %374, %cst_208 {dimension_numbers = #tpu.dot_dimension_numbers<[1], [0], [0], [1], [0, 0, 1, 1], [], []>} : vector<8x16xbf16>, vector<16x64xbf16>, vector<8x64xf32> -> vector<8x64xf32>
    %c2_209 = arith.constant 2 : index
    %c0_210 = arith.constant 0 : index
    %c0_211 = arith.constant 0 : index
    %376 = vector.load %arg20[%c2_209, %c0_210, %c0_211] : memref<3x64x64xbf16, #tpu.memory_space<vmem>>, vector<1x64x64xbf16>
    %377 = vector.shape_cast %376 : vector<1x64x64xbf16> to vector<64x64xbf16>
    %378 = arith.truncf %375 : vector<8x64xf32> to vector<8x64xbf16>
    %cst_212 = arith.constant dense<0.000000e+00> : vector<8x64xf32>
    %379 = tpu.matmul %378, %377, %cst_212 {dimension_numbers = #tpu.dot_dimension_numbers<[1], [0], [0], [1], [0, 0, 1, 1], [], []>} : vector<8x64xbf16>, vector<64x64xbf16>, vector<8x64xf32> -> vector<8x64xf32>
    %c2_213 = arith.constant 2 : index
    %c0_214 = arith.constant 0 : index
    %c0_215 = arith.constant 0 : index
    %380 = vector.load %arg21[%c2_213, %c0_214, %c0_215] : memref<3x1x64xf32, #tpu.memory_space<vmem>>, vector<1x1x64xf32>
    %381 = vector.shape_cast %380 : vector<1x1x64xf32> to vector<1x64xf32>
    %382 = vector.broadcast %381 : vector<1x64xf32> to vector<8x64xf32>
    %383 = arith.addf %379, %382 : vector<8x64xf32>
    %cst_216 = arith.constant 0.000000e+00 : f32
    %384 = vector.broadcast %cst_216 : f32 to vector<8x64xf32>
    %385 = arith.maximumf %383, %384 : vector<8x64xf32>
    %386 = arith.addf %273, %385 : vector<8x64xf32>
    %c2_217 = arith.constant 2 : index
    %c0_218 = arith.constant 0 : index
    %c0_219 = arith.constant 0 : index
    %387 = vector.load %arg18[%c2_217, %c0_218, %c0_219] : memref<3x1x64xf32, #tpu.memory_space<vmem>>, vector<1x1x64xf32>
    %388 = vector.shape_cast %387 : vector<1x1x64xf32> to vector<1x64xf32>
    %c2_220 = arith.constant 2 : index
    %c0_221 = arith.constant 0 : index
    %c0_222 = arith.constant 0 : index
    %389 = vector.load %arg19[%c2_220, %c0_221, %c0_222] : memref<3x1x64xf32, #tpu.memory_space<vmem>>, vector<1x1x64xf32>
    %390 = vector.shape_cast %389 : vector<1x1x64xf32> to vector<1x64xf32>
    %cst_223 = arith.constant dense<0.000000e+00> : vector<64xf32>
    %391 = vector.multi_reduction <add>, %386, %cst_223 [0] : vector<8x64xf32> to vector<64xf32>
    %392 = vector.shape_cast %391 : vector<64xf32> to vector<1x64xf32>
    %cst_224 = arith.constant 8.000000e+00 : f32
    %393 = vector.broadcast %cst_224 : f32 to vector<1x64xf32>
    %394 = arith.divf %392, %393 : vector<1x64xf32>
    %395 = vector.broadcast %394 : vector<1x64xf32> to vector<8x64xf32>
    %396 = arith.subf %386, %395 : vector<8x64xf32>
    %397 = arith.mulf %396, %396 : vector<8x64xf32>
    %cst_225 = arith.constant dense<0.000000e+00> : vector<64xf32>
    %398 = vector.multi_reduction <add>, %397, %cst_225 [0] : vector<8x64xf32> to vector<64xf32>
    %399 = vector.shape_cast %398 : vector<64xf32> to vector<1x64xf32>
    %cst_226 = arith.constant 8.000000e+00 : f32
    %400 = vector.broadcast %cst_226 : f32 to vector<1x64xf32>
    %401 = arith.divf %399, %400 : vector<1x64xf32>
    %402 = vector.broadcast %394 : vector<1x64xf32> to vector<8x64xf32>
    %403 = arith.subf %386, %402 : vector<8x64xf32>
    %cst_227 = arith.constant 9.99999974E-6 : f32
    %404 = vector.broadcast %cst_227 : f32 to vector<1x64xf32>
    %405 = arith.addf %401, %404 : vector<1x64xf32>
    %406 = math.rsqrt %405 : vector<1x64xf32>
    %407 = vector.broadcast %406 : vector<1x64xf32> to vector<8x64xf32>
    %408 = arith.mulf %403, %407 : vector<8x64xf32>
    %409 = vector.broadcast %388 : vector<1x64xf32> to vector<8x64xf32>
    %410 = arith.mulf %408, %409 : vector<8x64xf32>
    %411 = vector.broadcast %390 : vector<1x64xf32> to vector<8x64xf32>
    %412 = arith.addf %410, %411 : vector<8x64xf32>
    %413 = arith.truncf %412 : vector<8x64xf32> to vector<8x64xbf16>
    %cst_228 = arith.constant dense<0.000000e+00> : vector<16x64xf32>
    %414 = tpu.matmul %3, %413, %cst_228 {dimension_numbers = #tpu.dot_dimension_numbers<[1], [0], [0], [1], [0, 0, 1, 1], [], []>} : vector<16x8xbf16>, vector<8x64xbf16>, vector<16x64xf32> -> vector<16x64xf32>
    %c2_229 = arith.constant 2 : index
    %c0_230 = arith.constant 0 : index
    %c0_231 = arith.constant 0 : index
    %415 = vector.load %arg22[%c2_229, %c0_230, %c0_231] : memref<3x64x64xbf16, #tpu.memory_space<vmem>>, vector<1x64x64xbf16>
    %416 = vector.shape_cast %415 : vector<1x64x64xbf16> to vector<64x64xbf16>
    %417 = arith.truncf %414 : vector<16x64xf32> to vector<16x64xbf16>
    %cst_232 = arith.constant dense<0.000000e+00> : vector<16x64xf32>
    %418 = tpu.matmul %417, %416, %cst_232 {dimension_numbers = #tpu.dot_dimension_numbers<[1], [0], [0], [1], [0, 0, 1, 1], [], []>} : vector<16x64xbf16>, vector<64x64xbf16>, vector<16x64xf32> -> vector<16x64xf32>
    %c2_233 = arith.constant 2 : index
    %c0_234 = arith.constant 0 : index
    %c0_235 = arith.constant 0 : index
    %419 = vector.load %arg23[%c2_233, %c0_234, %c0_235] : memref<3x1x64xf32, #tpu.memory_space<vmem>>, vector<1x1x64xf32>
    %420 = vector.shape_cast %419 : vector<1x1x64xf32> to vector<1x64xf32>
    %421 = vector.broadcast %420 : vector<1x64xf32> to vector<16x64xf32>
    %422 = arith.addf %418, %421 : vector<16x64xf32>
    %cst_236 = arith.constant 0.000000e+00 : f32
    %423 = vector.broadcast %cst_236 : f32 to vector<16x64xf32>
    %424 = arith.cmpf ogt, %422, %423 : vector<16x64xf32>
    %cst_237 = arith.constant 0.00999999977 : f32
    %425 = vector.broadcast %cst_237 : f32 to vector<16x64xf32>
    %426 = arith.mulf %425, %422 : vector<16x64xf32>
    %427 = arith.select %424, %422, %426 : vector<16x64xi1>, vector<16x64xf32>
    %428 = arith.addf %373, %427 : vector<16x64xf32>
    %c0_238 = arith.constant 0 : index
    %c0_239 = arith.constant 0 : index
    %429 = vector.load %arg24[%c0_238, %c0_239] : memref<8x64xf32, #tpu.memory_space<vmem>>, vector<8x64xf32>
    tpu.vector_store %arg24[%c0_238, %c0_239], %412 {strides = array<i32>} : memref<8x64xf32, #tpu.memory_space<vmem>>, vector<8x64xf32>,
    %c0_240 = arith.constant 0 : index
    %c0_241 = arith.constant 0 : index
    %430 = vector.load %arg4[%c0_240, %c0_241] : memref<2x16xf32, #tpu.memory_space<vmem>>, vector<2x16xf32>
    %cst_242 = arith.constant dense<0.000000e+00> : vector<2x64xf32>
    %431 = tpu.matmul %430, %428, %cst_242 {dimension_numbers = #tpu.dot_dimension_numbers<[1], [0], [0], [1], [0, 0, 1, 1], [], []>} : vector<2x16xf32>, vector<16x64xf32>, vector<2x64xf32> -> vector<2x64xf32>
    %c0_243 = arith.constant 0 : index
    %c0_244 = arith.constant 0 : index
    %432 = vector.load %arg25[%c0_243, %c0_244] : memref<2x64xf32, #tpu.memory_space<vmem>>, vector<2x64xf32>
    tpu.vector_store %arg25[%c0_243, %c0_244], %431 {strides = array<i32>} : memref<2x64xf32, #tpu.memory_space<vmem>>, vector<2x64xf32>,
    return
  }
}

</mosaic_0001>

<llo_original>
// kernel: tpu_custom_call.1
$region0: #{tpu_custom_call.1}
  #allocation0 [shape = 'u32[]', space=smem, size = 0x4, offset = 0x4, fixed_abs, tag = 'smem constant byte address 0x4 - core index']
  #allocation1 [shape = 'u32[144,128]{1,0:T(1,128)}', space=vmem, size = 0x12000, scoped, tag = 'internal scratch']
  %s0 = inlined_call_operand.vmem [shape: bf16[32,16], index: 0, kind: input, shape index: {}]
  %s1 = inlined_call_operand.hbm [shape: bf16[16,32], index: 1, kind: input, shape index: {}]
  %s2 = inlined_call_operand.hbm [shape: bf16[8,16], index: 2, kind: input, shape index: {}]
  %s3 = inlined_call_operand.vmem [shape: bf16[16,8], index: 3, kind: input, shape index: {}]
  %s4 = inlined_call_operand.hbm [shape: f32[2,16], index: 4, kind: input, shape index: {}]
  %s5 = inlined_call_operand.hbm [shape: f32[16,64], index: 5, kind: input, shape index: {}]
  %s6 = inlined_call_operand.vmem [shape: f32[8,64], index: 6, kind: input, shape index: {}]
  %s7 = inlined_call_operand.vmem [shape: f32[3,32,64], index: 7, kind: input, shape index: {}]
  %s8 = inlined_call_operand.vmem [shape: bf16[64,64], index: 8, kind: input, shape index: {}]
  %s9 = inlined_call_operand.hbm [shape: f32[1,64], index: 9, kind: input, shape index: {}]
  %s10 = inlined_call_operand.vmem [shape: bf16[3,64,128], index: 10, kind: input, shape index: {}]
  %s11 = inlined_call_operand.vmem [shape: f32[3,1,128], index: 11, kind: input, shape index: {}]
  %s12 = inlined_call_operand.vmem [shape: f32[3,1,128], index: 12, kind: input, shape index: {}]
  %s13 = inlined_call_operand.vmem [shape: f32[3,1,128], index: 13, kind: input, shape index: {}]
  %s14 = inlined_call_operand.vmem [shape: bf16[3,128,64], index: 14, kind: input, shape index: {}]
  %s15 = inlined_call_operand.vmem [shape: f32[3,1,64], index: 15, kind: input, shape index: {}]
  %s16 = inlined_call_operand.vmem [shape: f32[3,1,64], index: 16, kind: input, shape index: {}]
  %s17 = inlined_call_operand.vmem [shape: f32[3,1,64], index: 17, kind: input, shape index: {}]
  %s18 = inlined_call_operand.vmem [shape: f32[3,1,64], index: 18, kind: input, shape index: {}]
  %s19 = inlined_call_operand.vmem [shape: f32[3,1,64], index: 19, kind: input, shape index: {}]
  %s20 = inlined_call_operand.vmem [shape: bf16[3,64,64], index: 20, kind: input, shape index: {}]
  %s21 = inlined_call_operand.vmem [shape: f32[3,1,64], index: 21, kind: input, shape index: {}]
  %s22 = inlined_call_operand.hbm [shape: bf16[3,64,64], index: 22, kind: input, shape index: {}]
  %s23 = inlined_call_operand.vmem [shape: f32[3,1,64], index: 23, kind: input, shape index: {}]
  %s24 = inlined_call_operand.hbm [shape: f32[8,64], index: 24, kind: output, shape index: {0}]
  %s25 = inlined_call_operand.hbm [shape: f32[2,64], index: 25, kind: output, shape index: {1}]
  %26 = xla_tuple %s24, %s25
  %s27 = sld [smem:[#allocation0]]
  $region138: #{tpu_custom_call.1} parent=0
    _
  %s29 = ssub.s32 1, %s27
  %s30 = scalar_select 0, %s29, %s27
  $region1: #{tpu_custom_call.1} parent=0
    #allocation2 [shape = 'u8[4096]{0}', space=vmem, size = 0x1000, scoped, tag = 'input window, operand 1, single buffered']
    #allocation3 [shape = 's32[1]{0}', space=sflag, size = 0x4, scoped, tag = 'scoped memory for tpu_custom_call.1']
    #allocation4 [shape = 's32[1]{0}', space=sflag, size = 0x4, scoped, tag = 'scoped memory for tpu_custom_call.1']
    #allocation5 [shape = 'u8[2048]{0}', space=vmem, size = 0x800, scoped, tag = 'input window, operand 2, single buffered']
    #allocation6 [shape = 's32[1]{0}', space=sflag, size = 0x4, scoped, tag = 'scoped memory for tpu_custom_call.1']
    #allocation7 [shape = 'u8[1024]{0}', space=vmem, size = 0x400, scoped, tag = 'input window, operand 4, single buffered']
    #allocation8 [shape = 'u8[8192]{0}', space=vmem, size = 0x2000, scoped, tag = 'input window, operand 5, single buffered']
    #allocation9 [shape = 's32[1]{0}', space=sflag, size = 0x4, scoped, tag = 'scoped memory for tpu_custom_call.1']
    #allocation10 [shape = 'u8[512]{0}', space=vmem, size = 0x400, scoped, tag = 'input window, operand 9, single buffered']
    #allocation11 [shape = 'u8[49152]{0}', space=vmem, size = 0xc000, scoped, tag = 'input window, operand 22, single buffered']
    #allocation12 [shape = 's32[1]{0}', space=sflag, size = 0x4, scoped, tag = 'scoped memory for tpu_custom_call.1']
    #allocation13 [shape = 'u8[4096]{0}', space=vmem, size = 0x1000, scoped, tag = 'output window, operand 0, single buffered']
    #allocation14 [shape = 'u8[1024]{0}', space=vmem, size = 0x400, scoped, tag = 'output window, operand 1, single buffered']
    #allocation15 [shape = 's32[1]{0}', space=sflag, size = 0x4, scoped, tag = 'scoped memory for tpu_custom_call.1']
    %31 = vsyncpa [#allocation3], 0
    %32 = vsyncpa [#allocation6], 0
    %33 = vsyncpa [#allocation9], 0
    %34 = vsyncpa [#allocation12], 0
    %35 = vsyncpa [#allocation4], 0
    %36 = vsyncpa [#allocation15], 0
    // Predicated region
    $region2: #{tpu_custom_call.1} parent=1 // pred_check
      _
    $region3: #{tpu_custom_call.1} parent=1 // pred_check_branch
      %38 = sbr.rel (0) target = $region5
    $region4: #{tpu_custom_call.1} parent=1 // pred_region
      _
    $region5: #{tpu_custom_call.1} parent=1 // pred_fallthru
      _
    // Predicated region
    $region6: #{tpu_custom_call.1} parent=1 // pred_check
      _
    $region7: #{tpu_custom_call.1} parent=1 // pred_check_branch
      %40 = sbr.rel (0) target = $region9
    $region8: #{tpu_custom_call.1} parent=1 // pred_region
      %s42 = ssub.s32 128, 128
      %43 = vsyncadd [#allocation3], %s42
      %s44 = sshll.u32 [#allocation2], 4
      %s45 = int_to_ptr.vmem [resolvable:$true] %s44
      %50 = dma.hbm_to_vmem [thread:$0]  %s1, 128, %s45, [#allocation3], 64, 64, 4
    $region9: #{tpu_custom_call.1} parent=1 // pred_fallthru
      _
    // Predicated region
    $region10: #{tpu_custom_call.1} parent=1 // pred_check
      _
    $region11: #{tpu_custom_call.1} parent=1 // pred_check_branch
      %52 = sbr.rel (0) target = $region13
    $region12: #{tpu_custom_call.1} parent=1 // pred_region
      %s54 = ssub.s32 64, 64
      %55 = vsyncadd [#allocation6], %s54
      %s57 = sshll.u32 [#allocation5], 4
      %s58 = int_to_ptr.vmem [resolvable:$true] %s57
      %60 = dma.hbm_to_vmem [thread:$0]  %s2, 64, %s58, [#allocation6]
    $region13: #{tpu_custom_call.1} parent=1 // pred_fallthru
      _
    // Predicated region
    $region14: #{tpu_custom_call.1} parent=1 // pred_check
      _
    $region15: #{tpu_custom_call.1} parent=1 // pred_check_branch
      %62 = sbr.rel (0) target = $region17
    $region16: #{tpu_custom_call.1} parent=1 // pred_region
      _
    $region17: #{tpu_custom_call.1} parent=1 // pred_fallthru
      _
    // Predicated region
    $region18: #{tpu_custom_call.1} parent=1 // pred_check
      _
    $region19: #{tpu_custom_call.1} parent=1 // pred_check_branch
      %64 = sbr.rel (0) target = $region21
    $region20: #{tpu_custom_call.1} parent=1 // pred_region
      %s66 = ssub.s32 32, 32
      %67 = vsyncadd [#allocation6], %s66
      %s69 = sshll.u32 [#allocation7], 4
      %s70 = int_to_ptr.vmem [resolvable:$true] %s69
      %72 = dma.hbm_to_vmem [thread:$0]  %s4, 32, %s70, [#allocation6]
    $region21: #{tpu_custom_call.1} parent=1 // pred_fallthru
      _
    // Predicated region
    $region22: #{tpu_custom_call.1} parent=1 // pred_check
      _
    $region23: #{tpu_custom_call.1} parent=1 // pred_check_branch
      %74 = sbr.rel (0) target = $region25
    $region24: #{tpu_custom_call.1} parent=1 // pred_region
      %s76 = ssub.s32 256, 256
      %77 = vsyncadd [#allocation9], %s76
      %s78 = sshll.u32 [#allocation8], 4
      %s79 = int_to_ptr.vmem [resolvable:$true] %s78
      %84 = dma.hbm_to_vmem [thread:$0]  %s5, 256, %s79, [#allocation9], 128, 128, 8
    $region25: #{tpu_custom_call.1} parent=1 // pred_fallthru
      _
    // Predicated region
    $region26: #{tpu_custom_call.1} parent=1 // pred_check
      _
    $region27: #{tpu_custom_call.1} parent=1 // pred_check_branch
      %86 = sbr.rel (0) target = $region29
    $region28: #{tpu_custom_call.1} parent=1 // pred_region
      _
    $region29: #{tpu_custom_call.1} parent=1 // pred_fallthru
      _
    // Predicated region
    $region30: #{tpu_custom_call.1} parent=1 // pred_check
      _
    $region31: #{tpu_custom_call.1} parent=1 // pred_check_branch
      %88 = sbr.rel (0) target = $region33
    $region32: #{tpu_custom_call.1} parent=1 // pred_region
      _
    $region33: #{tpu_custom_call.1} parent=1 // pred_fallthru
      _
    // Predicated region
    $region34: #{tpu_custom_call.1} parent=1 // pred_check
      _
    $region35: #{tpu_custom_call.1} parent=1 // pred_check_branch
      %90 = sbr.rel (0) target = $region37
    $region36: #{tpu_custom_call.1} parent=1 // pred_region
      _
    $region37: #{tpu_custom_call.1} parent=1 // pred_fallthru
      _
    // Predicated region
    $region38: #{tpu_custom_call.1} parent=1 // pred_check
      _
    $region39: #{tpu_custom_call.1} parent=1 // pred_check_branch
      %92 = sbr.rel (0) target = $region41
    $region40: #{tpu_custom_call.1} parent=1 // pred_region
      %s94 = ssub.s32 16, 16
      %95 = vsyncadd [#allocation9], %s94
      %s97 = sshll.u32 [#allocation10], 4
      %s98 = int_to_ptr.vmem [resolvable:$true] %s97
      %100 = dma.hbm_to_vmem [thread:$0]  %s9, 16, %s98, [#allocation9]
    $region41: #{tpu_custom_call.1} parent=1 // pred_fallthru
      _
    // Predicated region
    $region42: #{tpu_custom_call.1} parent=1 // pred_check
      _
    $region43: #{tpu_custom_call.1} parent=1 // pred_check_branch
      %102 = sbr.rel (0) target = $region45
    $region44: #{tpu_custom_call.1} parent=1 // pred_region
      _
    $region45: #{tpu_custom_call.1} parent=1 // pred_fallthru
      _
    // Predicated region
    $region46: #{tpu_custom_call.1} parent=1 // pred_check
      _
    $region47: #{tpu_custom_call.1} parent=1 // pred_check_branch
      %104 = sbr.rel (0) target = $region49
    $region48: #{tpu_custom_call.1} parent=1 // pred_region
      _
    $region49: #{tpu_custom_call.1} parent=1 // pred_fallthru
      _
    // Predicated region
    $region50: #{tpu_custom_call.1} parent=1 // pred_check
      _
    $region51: #{tpu_custom_call.1} parent=1 // pred_check_branch
      %106 = sbr.rel (0) target = $region53
    $region52: #{tpu_custom_call.1} parent=1 // pred_region
      _
    $region53: #{tpu_custom_call.1} parent=1 // pred_fallthru
      _
    // Predicated region
    $region54: #{tpu_custom_call.1} parent=1 // pred_check
      _
    $region55: #{tpu_custom_call.1} parent=1 // pred_check_branch
      %108 = sbr.rel (0) target = $region57
    $region56: #{tpu_custom_call.1} parent=1 // pred_region
      _
    $region57: #{tpu_custom_call.1} parent=1 // pred_fallthru
      _
    // Predicated region
    $region58: #{tpu_custom_call.1} parent=1 // pred_check
      _
    $region59: #{tpu_custom_call.1} parent=1 // pred_check_branch
      %110 = sbr.rel (0) target = $region61
    $region60: #{tpu_custom_call.1} parent=1 // pred_region
      _
    $region61: #{tpu_custom_call.1} parent=1 // pred_fallthru
      _
    // Predicated region
    $region62: #{tpu_custom_call.1} parent=1 // pred_check
      _
    $region63: #{tpu_custom_call.1} parent=1 // pred_check_branch
      %112 = sbr.rel (0) target = $region65
    $region64: #{tpu_custom_call.1} parent=1 // pred_region
      _
    $region65: #{tpu_custom_call.1} parent=1 // pred_fallthru
      _
    // Predicated region
    $region66: #{tpu_custom_call.1} parent=1 // pred_check
      _
    $region67: #{tpu_custom_call.1} parent=1 // pred_check_branch
      %114 = sbr.rel (0) target = $region69
    $region68: #{tpu_custom_call.1} parent=1 // pred_region
      _
    $region69: #{tpu_custom_call.1} parent=1 // pred_fallthru
      _
    // Predicated region
    $region70: #{tpu_custom_call.1} parent=1 // pred_check
      _
    $region71: #{tpu_custom_call.1} parent=1 // pred_check_branch
      %116 = sbr.rel (0) target = $region73
    $region72: #{tpu_custom_call.1} parent=1 // pred_region
      _
    $region73: #{tpu_custom_call.1} parent=1 // pred_fallthru
      _
    // Predicated region
    $region74: #{tpu_custom_call.1} parent=1 // pred_check
      _
    $region75: #{tpu_custom_call.1} parent=1 // pred_check_branch
      %118 = sbr.rel (0) target = $region77
    $region76: #{tpu_custom_call.1} parent=1 // pred_region
      _
    $region77: #{tpu_custom_call.1} parent=1 // pred_fallthru
      _
    // Predicated region
    $region78: #{tpu_custom_call.1} parent=1 // pred_check
      _
    $region79: #{tpu_custom_call.1} parent=1 // pred_check_branch
      %120 = sbr.rel (0) target = $region81
    $region80: #{tpu_custom_call.1} parent=1 // pred_region
      _
    $region81: #{tpu_custom_call.1} parent=1 // pred_fallthru
      _
    // Predicated region
    $region82: #{tpu_custom_call.1} parent=1 // pred_check
      _
    $region83: #{tpu_custom_call.1} parent=1 // pred_check_branch
      %122 = sbr.rel (0) target = $region85
    $region84: #{tpu_custom_call.1} parent=1 // pred_region
      _
    $region85: #{tpu_custom_call.1} parent=1 // pred_fallthru
      _
    // Predicated region
    $region86: #{tpu_custom_call.1} parent=1 // pred_check
      _
    $region87: #{tpu_custom_call.1} parent=1 // pred_check_branch
      %124 = sbr.rel (0) target = $region89
    $region88: #{tpu_custom_call.1} parent=1 // pred_region
      _
    $region89: #{tpu_custom_call.1} parent=1 // pred_fallthru
      _
    // Predicated region
    $region90: #{tpu_custom_call.1} parent=1 // pred_check
      _
    $region91: #{tpu_custom_call.1} parent=1 // pred_check_branch
      %126 = sbr.rel (0) target = $region93
    $region92: #{tpu_custom_call.1} parent=1 // pred_region
      %s128 = ssub.s32 1536, 1536
      %129 = vsyncadd [#allocation12], %s128
      %s130 = sshll.u32 [#allocation11], 4
      %s131 = int_to_ptr.vmem [resolvable:$true] %s130
      %136 = dma.hbm_to_vmem [thread:$0]  %s22, 1536, %s131, [#allocation12], 64, 64, 4
    $region93: #{tpu_custom_call.1} parent=1 // pred_fallthru
      _
    // Predicated region
    $region94: #{tpu_custom_call.1} parent=1 // pred_check
      _
    $region95: #{tpu_custom_call.1} parent=1 // pred_check_branch
      %138 = sbr.rel (0) target = $region97
    $region96: #{tpu_custom_call.1} parent=1 // pred_region
      _
    $region97: #{tpu_custom_call.1} parent=1 // pred_fallthru
      _
    // Predicated region
    $region98: #{tpu_custom_call.1} parent=1 // pred_check
      _
    $region99: #{tpu_custom_call.1} parent=1 // pred_check_branch
      %140 = sbr.rel (0) target = $region101
    $region100: #{tpu_custom_call.1} parent=1 // pred_region
      %141 = dma.done [#allocation3], 128
    $region101: #{tpu_custom_call.1} parent=1 // pred_fallthru
      _
    // Predicated region
    $region102: #{tpu_custom_call.1} parent=1 // pred_check
      _
    $region103: #{tpu_custom_call.1} parent=1 // pred_check_branch
      %143 = sbr.rel (0) target = $region105
    $region104: #{tpu_custom_call.1} parent=1 // pred_region
      %144 = dma.done [#allocation6], 64
    $region105: #{tpu_custom_call.1} parent=1 // pred_fallthru
      _
    // Predicated region
    $region106: #{tpu_custom_call.1} parent=1 // pred_check
      _
    $region107: #{tpu_custom_call.1} parent=1 // pred_check_branch
      %146 = sbr.rel (0) target = $region109
    $region108: #{tpu_custom_call.1} parent=1 // pred_region
      %147 = dma.done [#allocation6], 32
    $region109: #{tpu_custom_call.1} parent=1 // pred_fallthru
      _
    // Predicated region
    $region110: #{tpu_custom_call.1} parent=1 // pred_check
      _
    $region111: #{tpu_custom_call.1} parent=1 // pred_check_branch
      %149 = sbr.rel (0) target = $region113
    $region112: #{tpu_custom_call.1} parent=1 // pred_region
      %150 = dma.done [#allocation9], 256
    $region113: #{tpu_custom_call.1} parent=1 // pred_fallthru
      _
    // Predicated region
    $region114: #{tpu_custom_call.1} parent=1 // pred_check
      _
    $region115: #{tpu_custom_call.1} parent=1 // pred_check_branch
      %152 = sbr.rel (0) target = $region117
    $region116: #{tpu_custom_call.1} parent=1 // pred_region
      %153 = dma.done [#allocation9], 16
    $region117: #{tpu_custom_call.1} parent=1 // pred_fallthru
      _
    // Predicated region
    $region118: #{tpu_custom_call.1} parent=1 // pred_check
      _
    $region119: #{tpu_custom_call.1} parent=1 // pred_check_branch
      %155 = sbr.rel (0) target = $region121
    $region120: #{tpu_custom_call.1} parent=1 // pred_region
      %156 = dma.done [#allocation12], 1536
    $region121: #{tpu_custom_call.1} parent=1 // pred_fallthru
      _
    %v158 = vld [vmem:[%s0] sm:$0xf]
    %v159 = vld [vmem:[%s0 + $0x4] sm:$0xf]
    %v160 = vld [vmem:[%s0 + $0x8] sm:$0xf]
    %v161 = vld [vmem:[%s0 + $0xc] sm:$0xf]
    %v162 = vld [vmem:[#allocation2] sm:$0xf]
    %v163 = vld [vmem:[#allocation2 + $0x4] sm:$0xf]
    %v164 = vld [vmem:[#allocation5] sm:$0xf]
    %v165 = vld [vmem:[%s3] sm:$0xf]
    %v166 = vld [vmem:[%s3 + $0x4] sm:$0xf]
    %v167 = vld [vmem:[#allocation8] sm:$0xff]
    %v168 = vld [vmem:[#allocation8 + $0x8] sm:$0xff]
    %v169 = vld [vmem:[%s6] sm:$0xff]
    %v170 = vld [vmem:[%s8] sm:$0xf]
    %v171 = vld [vmem:[%s8 + $0x4] sm:$0xf]
    %v172 = vld [vmem:[%s8 + $0x8] sm:$0xf]
    %v173 = vld [vmem:[%s8 + $0xc] sm:$0xf]
    %v174 = vld [vmem:[%s8 + $0x10] sm:$0xf]
    %v175 = vld [vmem:[%s8 + $0x14] sm:$0xf]
    %v176 = vld [vmem:[%s8 + $0x18] sm:$0xf]
    %v177 = vld [vmem:[%s8 + $0x1c] sm:$0xf]
    %v178 = vpack.c.bf16 %v169, %v169
    %v179 = vld [vmem:[#allocation10] sm:$0x1]
    %v181 = vlaneseq
    %v182 = vshrl.u32 %v181, 7
    %v183 = vsub.s32 0, %v182
    %v184 = vrot.slane %v179, %v183
    %v194 = vunpack.c.l.b16 %v170
    %v195 = vunpack.c.l.b16 %v171
    %v196 = vunpack.c.l.b16 %v172
    %v197 = vunpack.c.l.b16 %v173
    %v198 = vunpack.c.l.b16 %v174
    %v199 = vunpack.c.l.b16 %v175
    %v200 = vunpack.c.l.b16 %v176
    %v201 = vunpack.c.l.b16 %v177
    %v202 = vpack.c.b16 %v195, %v194
    %v203 = vpack.c.b16 %v197, %v196
    %v204 = vpack.c.b16 %v199, %v198
    %v205 = vpack.c.b16 %v201, %v200
    %vm210 = vcmask 523264
    %v212 = vsel %vm210, %v178, 0
    %214 = vmatprep.subr.bf16.mxu0 0
    %215 = vmatpush1.bf16.msra.mxu0 0
    %216 = vmatprep.subr.bf16.mxu0 0
    %217 = vmatpush1.bf16.msra.mxu0 0
    %218 = vmatprep.subr.bf16.mxu0 0
    %219 = vmatpush1.bf16.msra.mxu0 0
    %220 = vmatprep.subr.bf16.mxu0 0
    %221 = vmatpush1.bf16.msra.mxu0 0
    %222 = vmatprep.subr.bf16.mxu0 0
    %223 = vmatpush1.bf16.msra.mxu0 %v205
    %224 = vmatprep.subr.bf16.mxu0 0
    %225 = vmatpush1.bf16.msra.mxu0 %v204
    %226 = vmatprep.subr.bf16.mxu0 0
    %227 = vmatpush1.bf16.msra.mxu0 %v203
    %228 = vmatprep.subr.bf16.mxu0 0
    %229 = vmatpush1.bf16.msra.mxu0 %v202
    %230 = vmatprep.subr.bf16.mxu0 0
    %231 = vmatpush2.bf16.msra.mxu0 0
    %232 = vmatprep.subr.bf16.mxu0 0
    %233 = vmatpush2.bf16.msra.mxu0 0
    %234 = vmatprep.subr.bf16.mxu0 0
    %235 = vmatpush2.bf16.msra.mxu0 0
    %236 = vmatprep.subr.bf16.mxu0 0
    %237 = vmatpush2.bf16.msra.mxu0 0
    %238 = vmatprep.subr.bf16.mxu0 0
    %239 = vmatpush2.bf16.msra.mxu0 0
    %240 = vmatprep.subr.bf16.mxu0 0
    %241 = vmatpush2.bf16.msra.mxu0 0
    %242 = vmatprep.subr.bf16.mxu0 0
    %243 = vmatpush2.bf16.msra.mxu0 0
    %244 = vmatprep.subr.bf16.mxu0 0
    %245 = vmatpush2.bf16.msra.mxu0 0
    %246 = vmatprep.mubr.bf16.mxu0 0
    %247 = vmatmul.mubr.bf16.gmra.mxu0 %v212
    %v248 = vpop.f32.mrf.mxu0
    %v249 = vadd.f32 %v184, %v248
    %v250 = vpop.f32.mrf.mxu0
    %v251 = vpop.f32.mrf.mxu0
    %v252 = vpop.f32.mrf.mxu0
    %253 = vdwg.mxu0
    %v254 = vpack.c.bf16 %v168, %v167
    %v255 = vld [vmem:[%s7] sm:$0xff]
    %v256 = vld [vmem:[%s7 + $0x8] sm:$0xff]
    %v257 = vld [vmem:[%s7 + $0x10] sm:$0xff]
    %v258 = vld [vmem:[%s7 + $0x18] sm:$0xff]
    %v263 = vunpack.c.l.b16 %v158
    %v264 = vunpack.c.l.b16 %v159
    %v265 = vunpack.c.l.b16 %v160
    %v266 = vunpack.c.l.b16 %v161
    %v267 = vpack.c.b16 %v264, %v263
    %v268 = vpack.c.b16 %v266, %v265
    %vm269 = vcmask 130048
    %v271 = vsel %vm269, %v267, 0
    %v274 = vsel %vm269, %v268, 0
    %276 = vmatprep.subr.bf16.mxu0 0
    %277 = vmatpush1.bf16.msra.mxu0 0
    %278 = vmatprep.subr.bf16.mxu0 0
    %279 = vmatpush1.bf16.msra.mxu0 0
    %280 = vmatprep.subr.bf16.mxu0 0
    %281 = vmatpush1.bf16.msra.mxu0 0
    %282 = vmatprep.subr.bf16.mxu0 0
    %283 = vmatpush1.bf16.msra.mxu0 0
    %284 = vmatprep.subr.bf16.mxu0 0
    %285 = vmatpush1.bf16.msra.mxu0 0
    %286 = vmatprep.subr.bf16.mxu0 0
    %287 = vmatpush1.bf16.msra.mxu0 0
    %288 = vmatprep.subr.bf16.mxu0 0
    %289 = vmatpush1.bf16.msra.mxu0 0
    %290 = vmatprep.subr.bf16.mxu0 0
    %291 = vmatpush1.bf16.msra.mxu0 %v254
    %292 = vmatprep.subr.bf16.mxu0 0
    %293 = vmatpush2.bf16.msra.mxu0 0
    %294 = vmatprep.subr.bf16.mxu0 0
    %295 = vmatpush2.bf16.msra.mxu0 0
    %296 = vmatprep.subr.bf16.mxu0 0
    %297 = vmatpush2.bf16.msra.mxu0 0
    %298 = vmatprep.subr.bf16.mxu0 0
    %299 = vmatpush2.bf16.msra.mxu0 0
    %300 = vmatprep.subr.bf16.mxu0 0
    %301 = vmatpush2.bf16.msra.mxu0 0
    %302 = vmatprep.subr.bf16.mxu0 0
    %303 = vmatpush2.bf16.msra.mxu0 0
    %304 = vmatprep.subr.bf16.mxu0 0
    %305 = vmatpush2.bf16.msra.mxu0 0
    %306 = vmatprep.subr.bf16.mxu0 0
    %307 = vmatpush2.bf16.msra.mxu0 0
    %308 = vmatprep.mubr.bf16.mxu0 0
    %309 = vmatmul.mubr.bf16.gmra.mxu0 %v271
    %v310 = vpop.f32.mrf.mxu0
    %v311 = vadd.f32 %v255, %v310
    %v312 = vpop.f32.mrf.mxu0
    %v313 = vpop.f32.mrf.mxu0
    %v314 = vadd.f32 %v256, %v313
    %v315 = vpop.f32.mrf.mxu0
    %316 = vmatprep.mubr.bf16.mxu0 0
    %317 = vmatmul.mubr.bf16.gmra.mxu0 %v274
    %v318 = vpop.f32.mrf.mxu0
    %v319 = vadd.f32 %v257, %v318
    %v320 = vpop.f32.mrf.mxu0
    %v321 = vpop.f32.mrf.mxu0
    %v322 = vadd.f32 %v258, %v321
    %v323 = vpop.f32.mrf.mxu0
    %324 = vdwg.mxu0
    %v325 = vmax.f32 %v311, 0.0
    %v326 = vmax.f32 %v314, 0.0
    %v327 = vmax.f32 %v319, 0.0
    %v328 = vmax.f32 %v322, 0.0
    %v329 = vpack.c.bf16 %v326, %v325
    %v330 = vpack.c.bf16 %v328, %v327
    %v333 = vunpack.c.l.b16 %v162
    %v334 = vunpack.c.l.b16 %v163
    %v335 = vpack.c.b16 %v334, %v333
    %vm336 = vcmask 261120
    %v338 = vsel %vm336, %v335, 0
    %340 = vmatprep.subr.bf16.mxu0 0
    %341 = vmatpush1.bf16.msra.mxu0 0
    %342 = vmatprep.subr.bf16.mxu0 0
    %343 = vmatpush1.bf16.msra.mxu0 0
    %344 = vmatprep.subr.bf16.mxu0 0
    %345 = vmatpush1.bf16.msra.mxu0 0
    %346 = vmatprep.subr.bf16.mxu0 0
    %347 = vmatpush1.bf16.msra.mxu0 0
    %348 = vmatprep.subr.bf16.mxu0 0
    %349 = vmatpush1.bf16.msra.mxu0 0
    %350 = vmatprep.subr.bf16.mxu0 0
    %351 = vmatpush1.bf16.msra.mxu0 0
    %352 = vmatprep.subr.bf16.mxu0 0
    %353 = vmatpush1.bf16.msra.mxu0 %v330
    %354 = vmatprep.subr.bf16.mxu0 0
    %355 = vmatpush1.bf16.msra.mxu0 %v329
    %356 = vmatprep.subr.bf16.mxu0 0
    %357 = vmatpush2.bf16.msra.mxu0 0
    %358 = vmatprep.subr.bf16.mxu0 0
    %359 = vmatpush2.bf16.msra.mxu0 0
    %360 = vmatprep.subr.bf16.mxu0 0
    %361 = vmatpush2.bf16.msra.mxu0 0
    %362 = vmatprep.subr.bf16.mxu0 0
    %363 = vmatpush2.bf16.msra.mxu0 0
    %364 = vmatprep.subr.bf16.mxu0 0
    %365 = vmatpush2.bf16.msra.mxu0 0
    %366 = vmatprep.subr.bf16.mxu0 0
    %367 = vmatpush2.bf16.msra.mxu0 0
    %368 = vmatprep.subr.bf16.mxu0 0
    %369 = vmatpush2.bf16.msra.mxu0 0
    %370 = vmatprep.subr.bf16.mxu0 0
    %371 = vmatpush2.bf16.msra.mxu0 0
    %372 = vmatprep.mubr.bf16.mxu0 0
    %373 = vmatmul.mubr.bf16.gmra.mxu0 %v338
    %v374 = vpop.f32.mrf.mxu0
    %v375 = vadd.f32 0.0, %v374
    %v376 = vpop.f32.mrf.mxu0
    %v377 = vpop.f32.mrf.mxu0
    %v378 = vadd.f32 0.0, %v377
    %v379 = vpop.f32.mrf.mxu0
    %380 = vdwg.mxu0
    %v381 = vadd.f32 %v167, %v375
    %v382 = vadd.f32 %v168, %v378
    %v383 = vld [vmem:[%s10] sm:$0xf]
    %v384 = vld [vmem:[%s10 + $0x4] sm:$0xf]
    %v385 = vld [vmem:[%s10 + $0x8] sm:$0xf]
    %v386 = vld [vmem:[%s10 + $0xc] sm:$0xf]
    %v387 = vld [vmem:[%s10 + $0x10] sm:$0xf]
    %v388 = vld [vmem:[%s10 + $0x14] sm:$0xf]
    %v389 = vld [vmem:[%s10 + $0x18] sm:$0xf]
    %v390 = vld [vmem:[%s10 + $0x1c] sm:$0xf]
    %v391 = vpack.c.bf16 %v382, %v381
    %v392 = vld [vmem:[%s11] sm:$0x1]
    %v394 = vlaneseq
    %v395 = vshrl.u32 %v394, 7
    %v396 = vsub.s32 0, %v395
    %v397 = vrot.slane %v392, %v396
    %v407 = vunpack.c.l.b16 %v383
    %v408 = vunpack.c.l.b16 %v384
    %v409 = vunpack.c.l.b16 %v385
    %v410 = vunpack.c.l.b16 %v386
    %v411 = vunpack.c.l.b16 %v387
    %v412 = vunpack.c.l.b16 %v388
    %v413 = vunpack.c.l.b16 %v389
    %v414 = vunpack.c.l.b16 %v390
    %v415 = vpack.c.b16 %v408, %v407
    %v416 = vpack.c.b16 %v410, %v409
    %v417 = vpack.c.b16 %v412, %v411
    %v418 = vpack.c.b16 %v414, %v413
    %v424 = vsel %vm210, %v391, 0
    %426 = vmatprep.subr.bf16.mxu0 0
    %427 = vmatpush1.bf16.msra.mxu0 0
    %428 = vmatprep.subr.bf16.mxu0 0
    %429 = vmatpush1.bf16.msra.mxu0 0
    %430 = vmatprep.subr.bf16.mxu0 0
    %431 = vmatpush1.bf16.msra.mxu0 0
    %432 = vmatprep.subr.bf16.mxu0 0
    %433 = vmatpush1.bf16.msra.mxu0 0
    %434 = vmatprep.subr.bf16.mxu0 0
    %435 = vmatpush1.bf16.msra.mxu0 %v418
    %436 = vmatprep.subr.bf16.mxu0 0
    %437 = vmatpush1.bf16.msra.mxu0 %v417
    %438 = vmatprep.subr.bf16.mxu0 0
    %439 = vmatpush1.bf16.msra.mxu0 %v416
    %440 = vmatprep.subr.bf16.mxu0 0
    %441 = vmatpush1.bf16.msra.mxu0 %v415
    %442 = vmatprep.subr.bf16.mxu0 0
    %443 = vmatpush2.bf16.msra.mxu0 0
    %444 = vmatprep.subr.bf16.mxu0 0
    %445 = vmatpush2.bf16.msra.mxu0 0
    %446 = vmatprep.subr.bf16.mxu0 0
    %447 = vmatpush2.bf16.msra.mxu0 0
    %448 = vmatprep.subr.bf16.mxu0 0
    %449 = vmatpush2.bf16.msra.mxu0 0
    %450 = vmatprep.subr.bf16.mxu0 0
    %451 = vmatpush2.bf16.msra.mxu0 0
    %452 = vmatprep.subr.bf16.mxu0 0
    %453 = vmatpush2.bf16.msra.mxu0 0
    %454 = vmatprep.subr.bf16.mxu0 0
    %455 = vmatpush2.bf16.msra.mxu0 0
    %456 = vmatprep.subr.bf16.mxu0 0
    %457 = vmatpush2.bf16.msra.mxu0 0
    %458 = vmatprep.mubr.bf16.mxu0 0
    %459 = vmatmul.mubr.bf16.gmra.mxu0 %v424
    %v460 = vpop.f32.mrf.mxu0
    %v461 = vadd.f32 %v397, %v460
    %v462 = vpop.f32.mrf.mxu0
    %v463 = vpop.f32.mrf.mxu0
    %v464 = vadd.f32 %v397, %v463
    %v465 = vpop.f32.mrf.mxu0
    %466 = vdwg.mxu0
    %v467 = vld [vmem:[%s12] sm:$0x1]
    %v468 = vld [vmem:[%s13] sm:$0x1]
    %v469 = vadd.f32 %v461, %v464
    %v470 = vrot.slane %v469, 4
    %v471 = vadd.f32 %v469, %v470
    %v472 = vrot.slane %v471, 2
    %v473 = vadd.f32 %v471, %v472
    %v474 = vrot.slane %v473, 1
    %v475 = vadd.f32 %v473, %v474
    %v476 = vrcp.pop 16.0
    %v477 = vmul.f32 %v475, %v476
    %v478 = vsub.f32 %v461, %v477
    %v479 = vsub.f32 %v464, %v477
    %v480 = vmul.f32 %v478, %v478
    %v481 = vmul.f32 %v479, %v479
    %v482 = vadd.f32 %v480, %v481
    %v483 = vrot.slane %v482, 4
    %v484 = vadd.f32 %v482, %v483
    %v485 = vrot.slane %v484, 2
    %v486 = vadd.f32 %v484, %v485
    %v487 = vrot.slane %v486, 1
    %v488 = vadd.f32 %v486, %v487
    %v489 = vmul.f32 %v488, %v476
    %v490 = vadd.f32 %v489, 1e-05
    %v491 = vrsqrt.pop %v490
    %v492 = vmul.f32 %v478, %v491
    %v493 = vmul.f32 %v479, %v491
    %v495 = vlaneseq
    %v496 = vshrl.u32 %v495, 7
    %v497 = vsub.s32 0, %v496
    %v498 = vrot.slane %v467, %v497
    %v500 = vmul.f32 %v492, %v498
    %v501 = vmul.f32 %v493, %v498
    %v503 = vlaneseq
    %v504 = vshrl.u32 %v503, 7
    %v505 = vsub.s32 0, %v504
    %v506 = vrot.slane %v468, %v505
    %v508 = vadd.f32 %v500, %v506
    %v509 = vadd.f32 %v501, %v506
    %v510 = vmax.f32 %v508, 0.0
    %v511 = vmax.f32 %v509, 0.0
    %v512 = vld [vmem:[%s14] sm:$0xf]
    %v513 = vld [vmem:[%s14 + $0x4] sm:$0xf]
    %v514 = vld [vmem:[%s14 + $0x8] sm:$0xf]
    %v515 = vld [vmem:[%s14 + $0xc] sm:$0xf]
    %v516 = vld [vmem:[%s14 + $0x10] sm:$0xf]
    %v517 = vld [vmem:[%s14 + $0x14] sm:$0xf]
    %v518 = vld [vmem:[%s14 + $0x18] sm:$0xf]
    %v519 = vld [vmem:[%s14 + $0x1c] sm:$0xf]
    %v520 = vld [vmem:[%s14 + $0x20] sm:$0xf]
    %v521 = vld [vmem:[%s14 + $0x24] sm:$0xf]
    %v522 = vld [vmem:[%s14 + $0x28] sm:$0xf]
    %v523 = vld [vmem:[%s14 + $0x2c] sm:$0xf]
    %v524 = vld [vmem:[%s14 + $0x30] sm:$0xf]
    %v525 = vld [vmem:[%s14 + $0x34] sm:$0xf]
    %v526 = vld [vmem:[%s14 + $0x38] sm:$0xf]
    %v527 = vld [vmem:[%s14 + $0x3c] sm:$0xf]
    %v528 = vpack.c.bf16 %v511, %v510
    %v529 = vld [vmem:[%s15] sm:$0x1]
    %v531 = vlaneseq
    %v532 = vshrl.u32 %v531, 7
    %v533 = vsub.s32 0, %v532
    %v534 = vrot.slane %v529, %v533
    %v552 = vunpack.c.l.b16 %v512
    %v553 = vunpack.c.l.b16 %v513
    %v554 = vunpack.c.l.b16 %v514
    %v555 = vunpack.c.l.b16 %v515
    %v556 = vunpack.c.l.b16 %v516
    %v557 = vunpack.c.l.b16 %v517
    %v558 = vunpack.c.l.b16 %v518
    %v559 = vunpack.c.l.b16 %v519
    %v560 = vunpack.c.l.b16 %v520
    %v561 = vunpack.c.l.b16 %v521
    %v562 = vunpack.c.l.b16 %v522
    %v563 = vunpack.c.l.b16 %v523
    %v564 = vunpack.c.l.b16 %v524
    %v565 = vunpack.c.l.b16 %v525
    %v566 = vunpack.c.l.b16 %v526
    %v567 = vunpack.c.l.b16 %v527
    %v568 = vpack.c.b16 %v553, %v552
    %v569 = vpack.c.b16 %v555, %v554
    %v570 = vpack.c.b16 %v557, %v556
    %v571 = vpack.c.b16 %v559, %v558
    %v572 = vpack.c.b16 %v561, %v560
    %v573 = vpack.c.b16 %v563, %v562
    %v574 = vpack.c.b16 %v565, %v564
    %v575 = vpack.c.b16 %v567, %v566
    %584 = vmatprep.subr.bf16.mxu0 0
    %585 = vmatpush1.bf16.msra.mxu0 %v575
    %586 = vmatprep.subr.bf16.mxu0 0
    %587 = vmatpush1.bf16.msra.mxu0 %v574
    %588 = vmatprep.subr.bf16.mxu0 0
    %589 = vmatpush1.bf16.msra.mxu0 %v573
    %590 = vmatprep.subr.bf16.mxu0 0
    %591 = vmatpush1.bf16.msra.mxu0 %v572
    %592 = vmatprep.subr.bf16.mxu0 0
    %593 = vmatpush1.bf16.msra.mxu0 %v571
    %594 = vmatprep.subr.bf16.mxu0 0
    %595 = vmatpush1.bf16.msra.mxu0 %v570
    %596 = vmatprep.subr.bf16.mxu0 0
    %597 = vmatpush1.bf16.msra.mxu0 %v569
    %598 = vmatprep.subr.bf16.mxu0 0
    %599 = vmatpush1.bf16.msra.mxu0 %v568
    %600 = vmatprep.subr.bf16.mxu0 0
    %601 = vmatpush2.bf16.msra.mxu0 0
    %602 = vmatprep.subr.bf16.mxu0 0
    %603 = vmatpush2.bf16.msra.mxu0 0
    %604 = vmatprep.subr.bf16.mxu0 0
    %605 = vmatpush2.bf16.msra.mxu0 0
    %606 = vmatprep.subr.bf16.mxu0 0
    %607 = vmatpush2.bf16.msra.mxu0 0
    %608 = vmatprep.subr.bf16.mxu0 0
    %609 = vmatpush2.bf16.msra.mxu0 0
    %610 = vmatprep.subr.bf16.mxu0 0
    %611 = vmatpush2.bf16.msra.mxu0 0
    %612 = vmatprep.subr.bf16.mxu0 0
    %613 = vmatpush2.bf16.msra.mxu0 0
    %614 = vmatprep.subr.bf16.mxu0 0
    %615 = vmatpush2.bf16.msra.mxu0 0
    %616 = vmatprep.mubr.bf16.mxu0 0
    %617 = vmatmul.mubr.bf16.gmra.mxu0 %v528
    %v618 = vpop.f32.mrf.mxu0
    %v619 = vadd.f32 %v534, %v618
    %v620 = vpop.f32.mrf.mxu0
    %v621 = vpop.f32.mrf.mxu0
    %v622 = vadd.f32 %v534, %v621
    %v623 = vpop.f32.mrf.mxu0
    %624 = vdwg.mxu0
    %v625 = vld [vmem:[%s16] sm:$0x1]
    %v626 = vld [vmem:[%s17] sm:$0x1]
    %v627 = vsel %vm210, %v619, 0.0
    %v628 = vsel %vm210, %v622, 0.0
    %v629 = vadd.f32 %v627, %v628
    %v630 = vrot.slane %v629, 4
    %v631 = vadd.f32 %v629, %v630
    %v632 = vrot.slane %v631, 2
    %v633 = vadd.f32 %v631, %v632
    %v634 = vrot.slane %v633, 1
    %v635 = vadd.f32 %v633, %v634
    %v636 = vmul.f32 %v635, %v476
    %v637 = vsub.f32 %v619, %v636
    %v638 = vsub.f32 %v622, %v636
    %v639 = vmul.f32 %v637, %v637
    %v640 = vmul.f32 %v638, %v638
    %v641 = vsel %vm210, %v639, 0.0
    %v642 = vsel %vm210, %v640, 0.0
    %v643 = vadd.f32 %v641, %v642
    %v644 = vrot.slane %v643, 4
    %v645 = vadd.f32 %v643, %v644
    %v646 = vrot.slane %v645, 2
    %v647 = vadd.f32 %v645, %v646
    %v648 = vrot.slane %v647, 1
    %v649 = vadd.f32 %v647, %v648
    %v650 = vmul.f32 %v649, %v476
    %v651 = vadd.f32 %v650, 1e-05
    %v652 = vrsqrt.pop %v651
    %v653 = vmul.f32 %v637, %v652
    %v654 = vmul.f32 %v638, %v652
    %v656 = vlaneseq
    %v657 = vshrl.u32 %v656, 7
    %v658 = vsub.s32 0, %v657
    %v659 = vrot.slane %v625, %v658
    %v661 = vmul.f32 %v653, %v659
    %v662 = vmul.f32 %v654, %v659
    %v664 = vlaneseq
    %v665 = vshrl.u32 %v664, 7
    %v666 = vsub.s32 0, %v665
    %v667 = vrot.slane %v626, %v666
    %v669 = vadd.f32 %v661, %v667
    %v670 = vadd.f32 %v662, %v667
    %v671 = vmax.f32 %v669, 0.0
    %v672 = vmax.f32 %v670, 0.0
    %v673 = vpack.c.bf16 %v672, %v671
    %v675 = vsel %vm269, %v164, 0
    %677 = vmatprep.subr.bf16.mxu0 0
    %678 = vmatpush1.bf16.msra.mxu0 0
    %679 = vmatprep.subr.bf16.mxu0 0
    %680 = vmatpush1.bf16.msra.mxu0 0
    %681 = vmatprep.subr.bf16.mxu0 0
    %682 = vmatpush1.bf16.msra.mxu0 0
    %683 = vmatprep.subr.bf16.mxu0 0
    %684 = vmatpush1.bf16.msra.mxu0 0
    %685 = vmatprep.subr.bf16.mxu0 0
    %686 = vmatpush1.bf16.msra.mxu0 0
    %687 = vmatprep.subr.bf16.mxu0 0
    %688 = vmatpush1.bf16.msra.mxu0 0
    %689 = vmatprep.subr.bf16.mxu0 0
    %690 = vmatpush1.bf16.msra.mxu0 0
    %691 = vmatprep.subr.bf16.mxu0 0
    %692 = vmatpush1.bf16.msra.mxu0 %v673
    %693 = vmatprep.subr.bf16.mxu0 0
    %694 = vmatpush2.bf16.msra.mxu0 0
    %695 = vmatprep.subr.bf16.mxu0 0
    %696 = vmatpush2.bf16.msra.mxu0 0
    %697 = vmatprep.subr.bf16.mxu0 0
    %698 = vmatpush2.bf16.msra.mxu0 0
    %699 = vmatprep.subr.bf16.mxu0 0
    %700 = vmatpush2.bf16.msra.mxu0 0
    %701 = vmatprep.subr.bf16.mxu0 0
    %702 = vmatpush2.bf16.msra.mxu0 0
    %703 = vmatprep.subr.bf16.mxu0 0
    %704 = vmatpush2.bf16.msra.mxu0 0
    %705 = vmatprep.subr.bf16.mxu0 0
    %706 = vmatpush2.bf16.msra.mxu0 0
    %707 = vmatprep.subr.bf16.mxu0 0
    %708 = vmatpush2.bf16.msra.mxu0 0
    %709 = vmatprep.mubr.bf16.mxu0 0
    %710 = vmatmul.mubr.bf16.gmra.mxu0 %v675
    %v711 = vpop.f32.mrf.mxu0
    %v712 = vadd.f32 0.0, %v711
    %v713 = vpop.f32.mrf.mxu0
    %v714 = vpop.f32.mrf.mxu0
    %v715 = vpop.f32.mrf.mxu0
    %716 = vdwg.mxu0
    %v717 = vld [vmem:[%s20] sm:$0xf]
    %v718 = vld [vmem:[%s20 + $0x4] sm:$0xf]
    %v719 = vld [vmem:[%s20 + $0x8] sm:$0xf]
    %v720 = vld [vmem:[%s20 + $0xc] sm:$0xf]
    %v721 = vld [vmem:[%s20 + $0x10] sm:$0xf]
    %v722 = vld [vmem:[%s20 + $0x14] sm:$0xf]
    %v723 = vld [vmem:[%s20 + $0x18] sm:$0xf]
    %v724 = vld [vmem:[%s20 + $0x1c] sm:$0xf]
    %v725 = vpack.c.bf16 %v712, %v712
    %v726 = vld [vmem:[%s21] sm:$0x1]
    %v728 = vlaneseq
    %v729 = vshrl.u32 %v728, 7
    %v730 = vsub.s32 0, %v729
    %v731 = vrot.slane %v726, %v730
    %v741 = vunpack.c.l.b16 %v717
    %v742 = vunpack.c.l.b16 %v718
    %v743 = vunpack.c.l.b16 %v719
    %v744 = vunpack.c.l.b16 %v720
    %v745 = vunpack.c.l.b16 %v721
    %v746 = vunpack.c.l.b16 %v722
    %v747 = vunpack.c.l.b16 %v723
    %v748 = vunpack.c.l.b16 %v724
    %v749 = vpack.c.b16 %v742, %v741
    %v750 = vpack.c.b16 %v744, %v743
    %v751 = vpack.c.b16 %v746, %v745
    %v752 = vpack.c.b16 %v748, %v747
    %v758 = vsel %vm210, %v725, 0
    %760 = vmatprep.subr.bf16.mxu0 0
    %761 = vmatpush1.bf16.msra.mxu0 0
    %762 = vmatprep.subr.bf16.mxu0 0
    %763 = vmatpush1.bf16.msra.mxu0 0
    %764 = vmatprep.subr.bf16.mxu0 0
    %765 = vmatpush1.bf16.msra.mxu0 0
    %766 = vmatprep.subr.bf16.mxu0 0
    %767 = vmatpush1.bf16.msra.mxu0 0
    %768 = vmatprep.subr.bf16.mxu0 0
    %769 = vmatpush1.bf16.msra.mxu0 %v752
    %770 = vmatprep.subr.bf16.mxu0 0
    %771 = vmatpush1.bf16.msra.mxu0 %v751
    %772 = vmatprep.subr.bf16.mxu0 0
    %773 = vmatpush1.bf16.msra.mxu0 %v750
    %774 = vmatprep.subr.bf16.mxu0 0
    %775 = vmatpush1.bf16.msra.mxu0 %v749
    %776 = vmatprep.subr.bf16.mxu0 0
    %777 = vmatpush2.bf16.msra.mxu0 0
    %778 = vmatprep.subr.bf16.mxu0 0
    %779 = vmatpush2.bf16.msra.mxu0 0
    %780 = vmatprep.subr.bf16.mxu0 0
    %781 = vmatpush2.bf16.msra.mxu0 0
    %782 = vmatprep.subr.bf16.mxu0 0
    %783 = vmatpush2.bf16.msra.mxu0 0
    %784 = vmatprep.subr.bf16.mxu0 0
    %785 = vmatpush2.bf16.msra.mxu0 0
    %786 = vmatprep.subr.bf16.mxu0 0
    %787 = vmatpush2.bf16.msra.mxu0 0
    %788 = vmatprep.subr.bf16.mxu0 0
    %789 = vmatpush2.bf16.msra.mxu0 0
    %790 = vmatprep.subr.bf16.mxu0 0
    %791 = vmatpush2.bf16.msra.mxu0 0
    %792 = vmatprep.mubr.bf16.mxu0 0
    %793 = vmatmul.mubr.bf16.gmra.mxu0 %v758
    %v794 = vpop.f32.mrf.mxu0
    %v795 = vadd.f32 %v731, %v794
    %v796 = vpop.f32.mrf.mxu0
    %v797 = vpop.f32.mrf.mxu0
    %v798 = vpop.f32.mrf.mxu0
    %799 = vdwg.mxu0
    %v800 = vmax.f32 %v795, 0.0
    %v801 = vadd.f32 %v249, %v800
    %v802 = vld [vmem:[%s18] sm:$0x1]
    %v803 = vld [vmem:[%s19] sm:$0x1]
    %v804 = vsel %vm210, %v801, 0.0
    %v805 = vrot.slane %v804, 4
    %v806 = vadd.f32 %v804, %v805
    %v807 = vrot.slane %v806, 2
    %v808 = vadd.f32 %v806, %v807
    %v809 = vrot.slane %v808, 1
    %v810 = vadd.f32 %v808, %v809
    %v811 = vrcp.pop 8.0
    %v812 = vmul.f32 %v810, %v811
    %v813 = vsub.f32 %v801, %v812
    %v814 = vmul.f32 %v813, %v813
    %v815 = vsel %vm210, %v814, 0.0
    %v816 = vrot.slane %v815, 4
    %v817 = vadd.f32 %v815, %v816
    %v818 = vrot.slane %v817, 2
    %v819 = vadd.f32 %v817, %v818
    %v820 = vrot.slane %v819, 1
    %v821 = vadd.f32 %v819, %v820
    %v822 = vmul.f32 %v821, %v811
    %v823 = vadd.f32 %v822, 1e-05
    %v824 = vrsqrt.pop %v823
    %v825 = vmul.f32 %v813, %v824
    %v827 = vlaneseq
    %v828 = vshrl.u32 %v827, 7
    %v829 = vsub.s32 0, %v828
    %v830 = vrot.slane %v802, %v829
    %v832 = vmul.f32 %v825, %v830
    %v834 = vlaneseq
    %v835 = vshrl.u32 %v834, 7
    %v836 = vsub.s32 0, %v835
    %v837 = vrot.slane %v803, %v836
    %v839 = vadd.f32 %v832, %v837
    %v840 = vpack.c.bf16 %v839, %v839
    %v843 = vunpack.c.l.b16 %v165
    %v844 = vunpack.c.l.b16 %v166
    %v845 = vpack.c.b16 %v844, %v843
    %vm846 = vcmask 64512
    %v848 = vsel %vm846, %v845, 0
    %vm850 = vcmask 1043456
    %v852 = vsel %vm850, %v840, 0
    %854 = vmatprep.subr.bf16.mxu0 0
    %855 = vmatpush1.bf16.msra.mxu0 0
    %856 = vmatprep.subr.bf16.mxu0 0
    %857 = vmatpush1.bf16.msra.mxu0 0
    %858 = vmatprep.subr.bf16.mxu0 0
    %859 = vmatpush1.bf16.msra.mxu0 0
    %860 = vmatprep.subr.bf16.mxu0 0
    %861 = vmatpush1.bf16.msra.mxu0 0
    %862 = vmatprep.subr.bf16.mxu0 0
    %863 = vmatpush1.bf16.msra.mxu0 0
    %864 = vmatprep.subr.bf16.mxu0 0
    %865 = vmatpush1.bf16.msra.mxu0 0
    %866 = vmatprep.subr.bf16.mxu0 0
    %867 = vmatpush1.bf16.msra.mxu0 0
    %868 = vmatprep.subr.bf16.mxu0 0
    %869 = vmatpush1.bf16.msra.mxu0 %v852
    %870 = vmatprep.subr.bf16.mxu0 0
    %871 = vmatpush2.bf16.msra.mxu0 0
    %872 = vmatprep.subr.bf16.mxu0 0
    %873 = vmatpush2.bf16.msra.mxu0 0
    %874 = vmatprep.subr.bf16.mxu0 0
    %875 = vmatpush2.bf16.msra.mxu0 0
    %876 = vmatprep.subr.bf16.mxu0 0
    %877 = vmatpush2.bf16.msra.mxu0 0
    %878 = vmatprep.subr.bf16.mxu0 0
    %879 = vmatpush2.bf16.msra.mxu0 0
    %880 = vmatprep.subr.bf16.mxu0 0
    %881 = vmatpush2.bf16.msra.mxu0 0
    %882 = vmatprep.subr.bf16.mxu0 0
    %883 = vmatpush2.bf16.msra.mxu0 0
    %884 = vmatprep.subr.bf16.mxu0 0
    %885 = vmatpush2.bf16.msra.mxu0 0
    %886 = vmatprep.mubr.bf16.mxu0 0
    %887 = vmatmul.mubr.bf16.gmra.mxu0 %v848
    %v888 = vpop.f32.mrf.mxu0
    %v889 = vadd.f32 0.0, %v888
    %v890 = vpop.f32.mrf.mxu0
    %v891 = vpop.f32.mrf.mxu0
    %v892 = vadd.f32 0.0, %v891
    %v893 = vpop.f32.mrf.mxu0
    %894 = vdwg.mxu0
    %v895 = vld [vmem:[#allocation11] sm:$0xf]
    %v896 = vld [vmem:[#allocation11 + $0x4] sm:$0xf]
    %v897 = vld [vmem:[#allocation11 + $0x8] sm:$0xf]
    %v898 = vld [vmem:[#allocation11 + $0xc] sm:$0xf]
    %v899 = vld [vmem:[#allocation11 + $0x10] sm:$0xf]
    %v900 = vld [vmem:[#allocation11 + $0x14] sm:$0xf]
    %v901 = vld [vmem:[#allocation11 + $0x18] sm:$0xf]
    %v902 = vld [vmem:[#allocation11 + $0x1c] sm:$0xf]
    %v903 = vpack.c.bf16 %v892, %v889
    %v904 = vld [vmem:[%s23] sm:$0x1]
    %v906 = vlaneseq
    %v907 = vshrl.u32 %v906, 7
    %v908 = vsub.s32 0, %v907
    %v909 = vrot.slane %v904, %v908
    %v919 = vunpack.c.l.b16 %v895
    %v920 = vunpack.c.l.b16 %v896
    %v921 = vunpack.c.l.b16 %v897
    %v922 = vunpack.c.l.b16 %v898
    %v923 = vunpack.c.l.b16 %v899
    %v924 = vunpack.c.l.b16 %v900
    %v925 = vunpack.c.l.b16 %v901
    %v926 = vunpack.c.l.b16 %v902
    %v927 = vpack.c.b16 %v920, %v919
    %v928 = vpack.c.b16 %v922, %v921
    %v929 = vpack.c.b16 %v924, %v923
    %v930 = vpack.c.b16 %v926, %v925
    %v936 = vsel %vm210, %v903, 0
    %938 = vmatprep.subr.bf16.mxu0 0
    %939 = vmatpush1.bf16.msra.mxu0 0
    %940 = vmatprep.subr.bf16.mxu0 0
    %941 = vmatpush1.bf16.msra.mxu0 0
    %942 = vmatprep.subr.bf16.mxu0 0
    %943 = vmatpush1.bf16.msra.mxu0 0
    %944 = vmatprep.subr.bf16.mxu0 0
    %945 = vmatpush1.bf16.msra.mxu0 0
    %946 = vmatprep.subr.bf16.mxu0 0
    %947 = vmatpush1.bf16.msra.mxu0 %v930
    %948 = vmatprep.subr.bf16.mxu0 0
    %949 = vmatpush1.bf16.msra.mxu0 %v929
    %950 = vmatprep.subr.bf16.mxu0 0
    %951 = vmatpush1.bf16.msra.mxu0 %v928
    %952 = vmatprep.subr.bf16.mxu0 0
    %953 = vmatpush1.bf16.msra.mxu0 %v927
    %954 = vmatprep.subr.bf16.mxu0 0
    %955 = vmatpush2.bf16.msra.mxu0 0
    %956 = vmatprep.subr.bf16.mxu0 0
    %957 = vmatpush2.bf16.msra.mxu0 0
    %958 = vmatprep.subr.bf16.mxu0 0
    %959 = vmatpush2.bf16.msra.mxu0 0
    %960 = vmatprep.subr.bf16.mxu0 0
    %961 = vmatpush2.bf16.msra.mxu0 0
    %962 = vmatprep.subr.bf16.mxu0 0
    %963 = vmatpush2.bf16.msra.mxu0 0
    %964 = vmatprep.subr.bf16.mxu0 0
    %965 = vmatpush2.bf16.msra.mxu0 0
    %966 = vmatprep.subr.bf16.mxu0 0
    %967 = vmatpush2.bf16.msra.mxu0 0
    %968 = vmatprep.subr.bf16.mxu0 0
    %969 = vmatpush2.bf16.msra.mxu0 0
    %970 = vmatprep.mubr.bf16.mxu0 0
    %971 = vmatmul.mubr.bf16.gmra.mxu0 %v936
    %v972 = vpop.f32.mrf.mxu0
    %v973 = vadd.f32 %v909, %v972
    %v974 = vpop.f32.mrf.mxu0
    %v975 = vpop.f32.mrf.mxu0
    %v976 = vadd.f32 %v909, %v975
    %v977 = vpop.f32.mrf.mxu0
    %978 = vdwg.mxu0
    %vm979 = vcmp.gt.f32.partialorder %v973, 0.0
    %vm980 = vcmp.gt.f32.partialorder %v976, 0.0
    %v981 = vmul.f32 %v973, 0.01
    %v982 = vmul.f32 %v976, 0.01
    %v983 = vsel %vm979, %v973, %v981
    %v984 = vsel %vm980, %v976, %v982
    %v985 = vadd.f32 %v671, %v983
    %v986 = vadd.f32 %v672, %v984
    %v987 = vpack.c.bf16 %v986, %v985
    %s988 = scalar_lea.vmem %s7, 32
    %v989 = vld [vmem:[%s988] sm:$0xff]
    %v990 = vld [vmem:[%s988 + $0x8] sm:$0xff]
    %v991 = vld [vmem:[%s988 + $0x10] sm:$0xff]
    %v992 = vld [vmem:[%s988 + $0x18] sm:$0xff]
    %993 = vmatprep.subr.bf16.mxu0 0
    %994 = vmatpush1.bf16.msra.mxu0 0
    %995 = vmatprep.subr.bf16.mxu0 0
    %996 = vmatpush1.bf16.msra.mxu0 0
    %997 = vmatprep.subr.bf16.mxu0 0
    %998 = vmatpush1.bf16.msra.mxu0 0
    %999 = vmatprep.subr.bf16.mxu0 0
    %1000 = vmatpush1.bf16.msra.mxu0 0
    %1001 = vmatprep.subr.bf16.mxu0 0
    %1002 = vmatpush1.bf16.msra.mxu0 0
    %1003 = vmatprep.subr.bf16.mxu0 0
    %1004 = vmatpush1.bf16.msra.mxu0 0
    %1005 = vmatprep.subr.bf16.mxu0 0
    %1006 = vmatpush1.bf16.msra.mxu0 0
    %1007 = vmatprep.subr.bf16.mxu0 0
    %1008 = vmatpush1.bf16.msra.mxu0 %v987
    %1009 = vmatprep.subr.bf16.mxu0 0
    %1010 = vmatpush2.bf16.msra.mxu0 0
    %1011 = vmatprep.subr.bf16.mxu0 0
    %1012 = vmatpush2.bf16.msra.mxu0 0
    %1013 = vmatprep.subr.bf16.mxu0 0
    %1014 = vmatpush2.bf16.msra.mxu0 0
    %1015 = vmatprep.subr.bf16.mxu0 0
    %1016 = vmatpush2.bf16.msra.mxu0 0
    %1017 = vmatprep.subr.bf16.mxu0 0
    %1018 = vmatpush2.bf16.msra.mxu0 0
    %1019 = vmatprep.subr.bf16.mxu0 0
    %1020 = vmatpush2.bf16.msra.mxu0 0
    %1021 = vmatprep.subr.bf16.mxu0 0
    %1022 = vmatpush2.bf16.msra.mxu0 0
    %1023 = vmatprep.subr.bf16.mxu0 0
    %1024 = vmatpush2.bf16.msra.mxu0 0
    %1025 = vmatprep.mubr.bf16.mxu0 0
    %1026 = vmatmul.mubr.bf16.gmra.mxu0 %v271
    %v1027 = vpop.f32.mrf.mxu0
    %v1028 = vadd.f32 %v989, %v1027
    %v1029 = vpop.f32.mrf.mxu0
    %v1030 = vpop.f32.mrf.mxu0
    %v1031 = vadd.f32 %v990, %v1030
    %v1032 = vpop.f32.mrf.mxu0
    %1033 = vmatprep.mubr.bf16.mxu0 0
    %1034 = vmatmul.mubr.bf16.gmra.mxu0 %v274
    %v1035 = vpop.f32.mrf.mxu0
    %v1036 = vadd.f32 %v991, %v1035
    %v1037 = vpop.f32.mrf.mxu0
    %v1038 = vpop.f32.mrf.mxu0
    %v1039 = vadd.f32 %v992, %v1038
    %v1040 = vpop.f32.mrf.mxu0
    %1041 = vdwg.mxu0
    %v1042 = vmax.f32 %v1028, 0.0
    %v1043 = vmax.f32 %v1031, 0.0
    %v1044 = vmax.f32 %v1036, 0.0
    %v1045 = vmax.f32 %v1039, 0.0
    %v1046 = vpack.c.bf16 %v1043, %v1042
    %v1047 = vpack.c.bf16 %v1045, %v1044
    %1048 = vmatprep.subr.bf16.mxu0 0
    %1049 = vmatpush1.bf16.msra.mxu0 0
    %1050 = vmatprep.subr.bf16.mxu0 0
    %1051 = vmatpush1.bf16.msra.mxu0 0
    %1052 = vmatprep.subr.bf16.mxu0 0
    %1053 = vmatpush1.bf16.msra.mxu0 0
    %1054 = vmatprep.subr.bf16.mxu0 0
    %1055 = vmatpush1.bf16.msra.mxu0 0
    %1056 = vmatprep.subr.bf16.mxu0 0
    %1057 = vmatpush1.bf16.msra.mxu0 0
    %1058 = vmatprep.subr.bf16.mxu0 0
    %1059 = vmatpush1.bf16.msra.mxu0 0
    %1060 = vmatprep.subr.bf16.mxu0 0
    %1061 = vmatpush1.bf16.msra.mxu0 %v1047
    %1062 = vmatprep.subr.bf16.mxu0 0
    %1063 = vmatpush1.bf16.msra.mxu0 %v1046
    %1064 = vmatprep.subr.bf16.mxu0 0
    %1065 = vmatpush2.bf16.msra.mxu0 0
    %1066 = vmatprep.subr.bf16.mxu0 0
    %1067 = vmatpush2.bf16.msra.mxu0 0
    %1068 = vmatprep.subr.bf16.mxu0 0
    %1069 = vmatpush2.bf16.msra.mxu0 0
    %1070 = vmatprep.subr.bf16.mxu0 0
    %1071 = vmatpush2.bf16.msra.mxu0 0
    %1072 = vmatprep.subr.bf16.mxu0 0
    %1073 = vmatpush2.bf16.msra.mxu0 0
    %1074 = vmatprep.subr.bf16.mxu0 0
    %1075 = vmatpush2.bf16.msra.mxu0 0
    %1076 = vmatprep.subr.bf16.mxu0 0
    %1077 = vmatpush2.bf16.msra.mxu0 0
    %1078 = vmatprep.subr.bf16.mxu0 0
    %1079 = vmatpush2.bf16.msra.mxu0 0
    %1080 = vmatprep.mubr.bf16.mxu0 0
    %1081 = vmatmul.mubr.bf16.gmra.mxu0 %v338
    %v1082 = vpop.f32.mrf.mxu0
    %v1083 = vadd.f32 0.0, %v1082
    %v1084 = vpop.f32.mrf.mxu0
    %v1085 = vpop.f32.mrf.mxu0
    %v1086 = vadd.f32 0.0, %v1085
    %v1087 = vpop.f32.mrf.mxu0
    %1088 = vdwg.mxu0
    %v1089 = vadd.f32 %v985, %v1083
    %v1090 = vadd.f32 %v986, %v1086
    %s1091 = scalar_lea.vmem %s10, 32
    %v1092 = vld [vmem:[%s1091] sm:$0xf]
    %v1093 = vld [vmem:[%s1091 + $0x4] sm:$0xf]
    %v1094 = vld [vmem:[%s1091 + $0x8] sm:$0xf]
    %v1095 = vld [vmem:[%s1091 + $0xc] sm:$0xf]
    %v1096 = vld [vmem:[%s1091 + $0x10] sm:$0xf]
    %v1097 = vld [vmem:[%s1091 + $0x14] sm:$0xf]
    %v1098 = vld [vmem:[%s1091 + $0x18] sm:$0xf]
    %v1099 = vld [vmem:[%s1091 + $0x1c] sm:$0xf]
    %v1100 = vpack.c.bf16 %v1090, %v1089
    %s1101 = scalar_lea.vmem %s11, 1
    %v1102 = vld [vmem:[%s1101] sm:$0x1]
    %v1104 = vlaneseq
    %v1105 = vshrl.u32 %v1104, 7
    %v1106 = vsub.s32 0, %v1105
    %v1107 = vrot.slane %v1102, %v1106
    %v1117 = vunpack.c.l.b16 %v1092
    %v1118 = vunpack.c.l.b16 %v1093
    %v1119 = vunpack.c.l.b16 %v1094
    %v1120 = vunpack.c.l.b16 %v1095
    %v1121 = vunpack.c.l.b16 %v1096
    %v1122 = vunpack.c.l.b16 %v1097
    %v1123 = vunpack.c.l.b16 %v1098
    %v1124 = vunpack.c.l.b16 %v1099
    %v1125 = vpack.c.b16 %v1118, %v1117
    %v1126 = vpack.c.b16 %v1120, %v1119
    %v1127 = vpack.c.b16 %v1122, %v1121
    %v1128 = vpack.c.b16 %v1124, %v1123
    %v1134 = vsel %vm210, %v1100, 0
    %1136 = vmatprep.subr.bf16.mxu0 0
    %1137 = vmatpush1.bf16.msra.mxu0 0
    %1138 = vmatprep.subr.bf16.mxu0 0
    %1139 = vmatpush1.bf16.msra.mxu0 0
    %1140 = vmatprep.subr.bf16.mxu0 0
    %1141 = vmatpush1.bf16.msra.mxu0 0
    %1142 = vmatprep.subr.bf16.mxu0 0
    %1143 = vmatpush1.bf16.msra.mxu0 0
    %1144 = vmatprep.subr.bf16.mxu0 0
    %1145 = vmatpush1.bf16.msra.mxu0 %v1128
    %1146 = vmatprep.subr.bf16.mxu0 0
    %1147 = vmatpush1.bf16.msra.mxu0 %v1127
    %1148 = vmatprep.subr.bf16.mxu0 0
    %1149 = vmatpush1.bf16.msra.mxu0 %v1126
    %1150 = vmatprep.subr.bf16.mxu0 0
    %1151 = vmatpush1.bf16.msra.mxu0 %v1125
    %1152 = vmatprep.subr.bf16.mxu0 0
    %1153 = vmatpush2.bf16.msra.mxu0 0
    %1154 = vmatprep.subr.bf16.mxu0 0
    %1155 = vmatpush2.bf16.msra.mxu0 0
    %1156 = vmatprep.subr.bf16.mxu0 0
    %1157 = vmatpush2.bf16.msra.mxu0 0
    %1158 = vmatprep.subr.bf16.mxu0 0
    %1159 = vmatpush2.bf16.msra.mxu0 0
    %1160 = vmatprep.subr.bf16.mxu0 0
    %1161 = vmatpush2.bf16.msra.mxu0 0
    %1162 = vmatprep.subr.bf16.mxu0 0
    %1163 = vmatpush2.bf16.msra.mxu0 0
    %1164 = vmatprep.subr.bf16.mxu0 0
    %1165 = vmatpush2.bf16.msra.mxu0 0
    %1166 = vmatprep.subr.bf16.mxu0 0
    %1167 = vmatpush2.bf16.msra.mxu0 0
    %1168 = vmatprep.mubr.bf16.mxu0 0
    %1169 = vmatmul.mubr.bf16.gmra.mxu0 %v1134
    %v1170 = vpop.f32.mrf.mxu0
    %v1171 = vadd.f32 %v1107, %v1170
    %v1172 = vpop.f32.mrf.mxu0
    %v1173 = vpop.f32.mrf.mxu0
    %v1174 = vadd.f32 %v1107, %v1173
    %v1175 = vpop.f32.mrf.mxu0
    %1176 = vdwg.mxu0
    %s1177 = scalar_lea.vmem %s12, 1
    %v1178 = vld [vmem:[%s1177] sm:$0x1]
    %s1179 = scalar_lea.vmem %s13, 1
    %v1180 = vld [vmem:[%s1179] sm:$0x1]
    %v1181 = vadd.f32 %v1171, %v1174
    %v1182 = vrot.slane %v1181, 4
    %v1183 = vadd.f32 %v1181, %v1182
    %v1184 = vrot.slane %v1183, 2
    %v1185 = vadd.f32 %v1183, %v1184
    %v1186 = vrot.slane %v1185, 1
    %v1187 = vadd.f32 %v1185, %v1186
    %v1188 = vmul.f32 %v1187, %v476
    %v1189 = vsub.f32 %v1171, %v1188
    %v1190 = vsub.f32 %v1174, %v1188
    %v1191 = vmul.f32 %v1189, %v1189
    %v1192 = vmul.f32 %v1190, %v1190
    %v1193 = vadd.f32 %v1191, %v1192
    %v1194 = vrot.slane %v1193, 4
    %v1195 = vadd.f32 %v1193, %v1194
    %v1196 = vrot.slane %v1195, 2
    %v1197 = vadd.f32 %v1195, %v1196
    %v1198 = vrot.slane %v1197, 1
    %v1199 = vadd.f32 %v1197, %v1198
    %v1200 = vmul.f32 %v1199, %v476
    %v1201 = vadd.f32 %v1200, 1e-05
    %v1202 = vrsqrt.pop %v1201
    %v1203 = vmul.f32 %v1189, %v1202
    %v1204 = vmul.f32 %v1190, %v1202
    %v1206 = vlaneseq
    %v1207 = vshrl.u32 %v1206, 7
    %v1208 = vsub.s32 0, %v1207
    %v1209 = vrot.slane %v1178, %v1208
    %v1211 = vmul.f32 %v1203, %v1209
    %v1212 = vmul.f32 %v1204, %v1209
    %v1214 = vlaneseq
    %v1215 = vshrl.u32 %v1214, 7
    %v1216 = vsub.s32 0, %v1215
    %v1217 = vrot.slane %v1180, %v1216
    %v1219 = vadd.f32 %v1211, %v1217
    %v1220 = vadd.f32 %v1212, %v1217
    %v1221 = vmax.f32 %v1219, 0.0
    %v1222 = vmax.f32 %v1220, 0.0
    %s1223 = scalar_lea.vmem %s14, 64
    %v1224 = vld [vmem:[%s1223] sm:$0xf]
    %v1225 = vld [vmem:[%s1223 + $0x4] sm:$0xf]
    %v1226 = vld [vmem:[%s1223 + $0x8] sm:$0xf]
    %v1227 = vld [vmem:[%s1223 + $0xc] sm:$0xf]
    %v1228 = vld [vmem:[%s1223 + $0x10] sm:$0xf]
    %v1229 = vld [vmem:[%s1223 + $0x14] sm:$0xf]
    %v1230 = vld [vmem:[%s1223 + $0x18] sm:$0xf]
    %v1231 = vld [vmem:[%s1223 + $0x1c] sm:$0xf]
    %v1232 = vld [vmem:[%s1223 + $0x20] sm:$0xf]
    %v1233 = vld [vmem:[%s1223 + $0x24] sm:$0xf]
    %v1234 = vld [vmem:[%s1223 + $0x28] sm:$0xf]
    %v1235 = vld [vmem:[%s1223 + $0x2c] sm:$0xf]
    %v1236 = vld [vmem:[%s1223 + $0x30] sm:$0xf]
    %v1237 = vld [vmem:[%s1223 + $0x34] sm:$0xf]
    %v1238 = vld [vmem:[%s1223 + $0x38] sm:$0xf]
    %v1239 = vld [vmem:[%s1223 + $0x3c] sm:$0xf]
    %v1240 = vpack.c.bf16 %v1222, %v1221
    %s1241 = scalar_lea.vmem %s15, 1
    %v1242 = vld [vmem:[%s1241] sm:$0x1]
    %v1244 = vlaneseq
    %v1245 = vshrl.u32 %v1244, 7
    %v1246 = vsub.s32 0, %v1245
    %v1247 = vrot.slane %v1242, %v1246
    %v1265 = vunpack.c.l.b16 %v1224
    %v1266 = vunpack.c.l.b16 %v1225
    %v1267 = vunpack.c.l.b16 %v1226
    %v1268 = vunpack.c.l.b16 %v1227
    %v1269 = vunpack.c.l.b16 %v1228
    %v1270 = vunpack.c.l.b16 %v1229
    %v1271 = vunpack.c.l.b16 %v1230
    %v1272 = vunpack.c.l.b16 %v1231
    %v1273 = vunpack.c.l.b16 %v1232
    %v1274 = vunpack.c.l.b16 %v1233
    %v1275 = vunpack.c.l.b16 %v1234
    %v1276 = vunpack.c.l.b16 %v1235
    %v1277 = vunpack.c.l.b16 %v1236
    %v1278 = vunpack.c.l.b16 %v1237
    %v1279 = vunpack.c.l.b16 %v1238
    %v1280 = vunpack.c.l.b16 %v1239
    %v1281 = vpack.c.b16 %v1266, %v1265
    %v1282 = vpack.c.b16 %v1268, %v1267
    %v1283 = vpack.c.b16 %v1270, %v1269
    %v1284 = vpack.c.b16 %v1272, %v1271
    %v1285 = vpack.c.b16 %v1274, %v1273
    %v1286 = vpack.c.b16 %v1276, %v1275
    %v1287 = vpack.c.b16 %v1278, %v1277
    %v1288 = vpack.c.b16 %v1280, %v1279
    %1297 = vmatprep.subr.bf16.mxu0 0
    %1298 = vmatpush1.bf16.msra.mxu0 %v1288
    %1299 = vmatprep.subr.bf16.mxu0 0
    %1300 = vmatpush1.bf16.msra.mxu0 %v1287
    %1301 = vmatprep.subr.bf16.mxu0 0
    %1302 = vmatpush1.bf16.msra.mxu0 %v1286
    %1303 = vmatprep.subr.bf16.mxu0 0
    %1304 = vmatpush1.bf16.msra.mxu0 %v1285
    %1305 = vmatprep.subr.bf16.mxu0 0
    %1306 = vmatpush1.bf16.msra.mxu0 %v1284
    %1307 = vmatprep.subr.bf16.mxu0 0
    %1308 = vmatpush1.bf16.msra.mxu0 %v1283
    %1309 = vmatprep.subr.bf16.mxu0 0
    %1310 = vmatpush1.bf16.msra.mxu0 %v1282
    %1311 = vmatprep.subr.bf16.mxu0 0
    %1312 = vmatpush1.bf16.msra.mxu0 %v1281
    %1313 = vmatprep.subr.bf16.mxu0 0
    %1314 = vmatpush2.bf16.msra.mxu0 0
    %1315 = vmatprep.subr.bf16.mxu0 0
    %1316 = vmatpush2.bf16.msra.mxu0 0
    %1317 = vmatprep.subr.bf16.mxu0 0
    %1318 = vmatpush2.bf16.msra.mxu0 0
    %1319 = vmatprep.subr.bf16.mxu0 0
    %1320 = vmatpush2.bf16.msra.mxu0 0
    %1321 = vmatprep.subr.bf16.mxu0 0
    %1322 = vmatpush2.bf16.msra.mxu0 0
    %1323 = vmatprep.subr.bf16.mxu0 0
    %1324 = vmatpush2.bf16.msra.mxu0 0
    %1325 = vmatprep.subr.bf16.mxu0 0
    %1326 = vmatpush2.bf16.msra.mxu0 0
    %1327 = vmatprep.subr.bf16.mxu0 0
    %1328 = vmatpush2.bf16.msra.mxu0 0
    %1329 = vmatprep.mubr.bf16.mxu0 0
    %1330 = vmatmul.mubr.bf16.gmra.mxu0 %v1240
    %v1331 = vpop.f32.mrf.mxu0
    %v1332 = vadd.f32 %v1247, %v1331
    %v1333 = vpop.f32.mrf.mxu0
    %v1334 = vpop.f32.mrf.mxu0
    %v1335 = vadd.f32 %v1247, %v1334
    %v1336 = vpop.f32.mrf.mxu0
    %1337 = vdwg.mxu0
    %s1338 = scalar_lea.vmem %s16, 1
    %v1339 = vld [vmem:[%s1338] sm:$0x1]
    %s1340 = scalar_lea.vmem %s17, 1
    %v1341 = vld [vmem:[%s1340] sm:$0x1]
    %v1342 = vsel %vm210, %v1332, 0.0
    %v1343 = vsel %vm210, %v1335, 0.0
    %v1344 = vadd.f32 %v1342, %v1343
    %v1345 = vrot.slane %v1344, 4
    %v1346 = vadd.f32 %v1344, %v1345
    %v1347 = vrot.slane %v1346, 2
    %v1348 = vadd.f32 %v1346, %v1347
    %v1349 = vrot.slane %v1348, 1
    %v1350 = vadd.f32 %v1348, %v1349
    %v1351 = vmul.f32 %v1350, %v476
    %v1352 = vsub.f32 %v1332, %v1351
    %v1353 = vsub.f32 %v1335, %v1351
    %v1354 = vmul.f32 %v1352, %v1352
    %v1355 = vmul.f32 %v1353, %v1353
    %v1356 = vsel %vm210, %v1354, 0.0
    %v1357 = vsel %vm210, %v1355, 0.0
    %v1358 = vadd.f32 %v1356, %v1357
    %v1359 = vrot.slane %v1358, 4
    %v1360 = vadd.f32 %v1358, %v1359
    %v1361 = vrot.slane %v1360, 2
    %v1362 = vadd.f32 %v1360, %v1361
    %v1363 = vrot.slane %v1362, 1
    %v1364 = vadd.f32 %v1362, %v1363
    %v1365 = vmul.f32 %v1364, %v476
    %v1366 = vadd.f32 %v1365, 1e-05
    %v1367 = vrsqrt.pop %v1366
    %v1368 = vmul.f32 %v1352, %v1367
    %v1369 = vmul.f32 %v1353, %v1367
    %v1371 = vlaneseq
    %v1372 = vshrl.u32 %v1371, 7
    %v1373 = vsub.s32 0, %v1372
    %v1374 = vrot.slane %v1339, %v1373
    %v1376 = vmul.f32 %v1368, %v1374
    %v1377 = vmul.f32 %v1369, %v1374
    %v1379 = vlaneseq
    %v1380 = vshrl.u32 %v1379, 7
    %v1381 = vsub.s32 0, %v1380
    %v1382 = vrot.slane %v1341, %v1381
    %v1384 = vadd.f32 %v1376, %v1382
    %v1385 = vadd.f32 %v1377, %v1382
    %v1386 = vmax.f32 %v1384, 0.0
    %v1387 = vmax.f32 %v1385, 0.0
    %v1388 = vpack.c.bf16 %v1387, %v1386
    %1389 = vmatprep.subr.bf16.mxu0 0
    %1390 = vmatpush1.bf16.msra.mxu0 0
    %1391 = vmatprep.subr.bf16.mxu0 0
    %1392 = vmatpush1.bf16.msra.mxu0 0
    %1393 = vmatprep.subr.bf16.mxu0 0
    %1394 = vmatpush1.bf16.msra.mxu0 0
    %1395 = vmatprep.subr.bf16.mxu0 0
    %1396 = vmatpush1.bf16.msra.mxu0 0
    %1397 = vmatprep.subr.bf16.mxu0 0
    %1398 = vmatpush1.bf16.msra.mxu0 0
    %1399 = vmatprep.subr.bf16.mxu0 0
    %1400 = vmatpush1.bf16.msra.mxu0 0
    %1401 = vmatprep.subr.bf16.mxu0 0
    %1402 = vmatpush1.bf16.msra.mxu0 0
    %1403 = vmatprep.subr.bf16.mxu0 0
    %1404 = vmatpush1.bf16.msra.mxu0 %v1388
    %1405 = vmatprep.subr.bf16.mxu0 0
    %1406 = vmatpush2.bf16.msra.mxu0 0
    %1407 = vmatprep.subr.bf16.mxu0 0
    %1408 = vmatpush2.bf16.msra.mxu0 0
    %1409 = vmatprep.subr.bf16.mxu0 0
    %1410 = vmatpush2.bf16.msra.mxu0 0
    %1411 = vmatprep.subr.bf16.mxu0 0
    %1412 = vmatpush2.bf16.msra.mxu0 0
    %1413 = vmatprep.subr.bf16.mxu0 0
    %1414 = vmatpush2.bf16.msra.mxu0 0
    %1415 = vmatprep.subr.bf16.mxu0 0
    %1416 = vmatpush2.bf16.msra.mxu0 0
    %1417 = vmatprep.subr.bf16.mxu0 0
    %1418 = vmatpush2.bf16.msra.mxu0 0
    %1419 = vmatprep.subr.bf16.mxu0 0
    %1420 = vmatpush2.bf16.msra.mxu0 0
    %1421 = vmatprep.mubr.bf16.mxu0 0
    %1422 = vmatmul.mubr.bf16.gmra.mxu0 %v675
    %v1423 = vpop.f32.mrf.mxu0
    %v1424 = vadd.f32 0.0, %v1423
    %v1425 = vpop.f32.mrf.mxu0
    %v1426 = vpop.f32.mrf.mxu0
    %v1427 = vpop.f32.mrf.mxu0
    %1428 = vdwg.mxu0
    %s1429 = scalar_lea.vmem %s20, 32
    %v1430 = vld [vmem:[%s1429] sm:$0xf]
    %v1431 = vld [vmem:[%s1429 + $0x4] sm:$0xf]
    %v1432 = vld [vmem:[%s1429 + $0x8] sm:$0xf]
    %v1433 = vld [vmem:[%s1429 + $0xc] sm:$0xf]
    %v1434 = vld [vmem:[%s1429 + $0x10] sm:$0xf]
    %v1435 = vld [vmem:[%s1429 + $0x14] sm:$0xf]
    %v1436 = vld [vmem:[%s1429 + $0x18] sm:$0xf]
    %v1437 = vld [vmem:[%s1429 + $0x1c] sm:$0xf]
    %v1438 = vpack.c.bf16 %v1424, %v1424
    %s1439 = scalar_lea.vmem %s21, 1
    %v1440 = vld [vmem:[%s1439] sm:$0x1]
    %v1442 = vlaneseq
    %v1443 = vshrl.u32 %v1442, 7
    %v1444 = vsub.s32 0, %v1443
    %v1445 = vrot.slane %v1440, %v1444
    %v1455 = vunpack.c.l.b16 %v1430
    %v1456 = vunpack.c.l.b16 %v1431
    %v1457 = vunpack.c.l.b16 %v1432
    %v1458 = vunpack.c.l.b16 %v1433
    %v1459 = vunpack.c.l.b16 %v1434
    %v1460 = vunpack.c.l.b16 %v1435
    %v1461 = vunpack.c.l.b16 %v1436
    %v1462 = vunpack.c.l.b16 %v1437
    %v1463 = vpack.c.b16 %v1456, %v1455
    %v1464 = vpack.c.b16 %v1458, %v1457
    %v1465 = vpack.c.b16 %v1460, %v1459
    %v1466 = vpack.c.b16 %v1462, %v1461
    %v1472 = vsel %vm210, %v1438, 0
    %1474 = vmatprep.subr.bf16.mxu0 0
    %1475 = vmatpush1.bf16.msra.mxu0 0
    %1476 = vmatprep.subr.bf16.mxu0 0
    %1477 = vmatpush1.bf16.msra.mxu0 0
    %1478 = vmatprep.subr.bf16.mxu0 0
    %1479 = vmatpush1.bf16.msra.mxu0 0
    %1480 = vmatprep.subr.bf16.mxu0 0
    %1481 = vmatpush1.bf16.msra.mxu0 0
    %1482 = vmatprep.subr.bf16.mxu0 0
    %1483 = vmatpush1.bf16.msra.mxu0 %v1466
    %1484 = vmatprep.subr.bf16.mxu0 0
    %1485 = vmatpush1.bf16.msra.mxu0 %v1465
    %1486 = vmatprep.subr.bf16.mxu0 0
    %1487 = vmatpush1.bf16.msra.mxu0 %v1464
    %1488 = vmatprep.subr.bf16.mxu0 0
    %1489 = vmatpush1.bf16.msra.mxu0 %v1463
    %1490 = vmatprep.subr.bf16.mxu0 0
    %1491 = vmatpush2.bf16.msra.mxu0 0
    %1492 = vmatprep.subr.bf16.mxu0 0
    %1493 = vmatpush2.bf16.msra.mxu0 0
    %1494 = vmatprep.subr.bf16.mxu0 0
    %1495 = vmatpush2.bf16.msra.mxu0 0
    %1496 = vmatprep.subr.bf16.mxu0 0
    %1497 = vmatpush2.bf16.msra.mxu0 0
    %1498 = vmatprep.subr.bf16.mxu0 0
    %1499 = vmatpush2.bf16.msra.mxu0 0
    %1500 = vmatprep.subr.bf16.mxu0 0
    %1501 = vmatpush2.bf16.msra.mxu0 0
    %1502 = vmatprep.subr.bf16.mxu0 0
    %1503 = vmatpush2.bf16.msra.mxu0 0
    %1504 = vmatprep.subr.bf16.mxu0 0
    %1505 = vmatpush2.bf16.msra.mxu0 0
    %1506 = vmatprep.mubr.bf16.mxu0 0
    %1507 = vmatmul.mubr.bf16.gmra.mxu0 %v1472
    %v1508 = vpop.f32.mrf.mxu0
    %v1509 = vadd.f32 %v1445, %v1508
    %v1510 = vpop.f32.mrf.mxu0
    %v1511 = vpop.f32.mrf.mxu0
    %v1512 = vpop.f32.mrf.mxu0
    %1513 = vdwg.mxu0
    %v1514 = vmax.f32 %v1509, 0.0
    %v1515 = vadd.f32 %v839, %v1514
    %s1516 = scalar_lea.vmem %s18, 1
    %v1517 = vld [vmem:[%s1516] sm:$0x1]
    %s1518 = scalar_lea.vmem %s19, 1
    %v1519 = vld [vmem:[%s1518] sm:$0x1]
    %v1520 = vsel %vm210, %v1515, 0.0
    %v1521 = vrot.slane %v1520, 4
    %v1522 = vadd.f32 %v1520, %v1521
    %v1523 = vrot.slane %v1522, 2
    %v1524 = vadd.f32 %v1522, %v1523
    %v1525 = vrot.slane %v1524, 1
    %v1526 = vadd.f32 %v1524, %v1525
    %v1527 = vmul.f32 %v1526, %v811
    %v1528 = vsub.f32 %v1515, %v1527
    %v1529 = vmul.f32 %v1528, %v1528
    %v1530 = vsel %vm210, %v1529, 0.0
    %v1531 = vrot.slane %v1530, 4
    %v1532 = vadd.f32 %v1530, %v1531
    %v1533 = vrot.slane %v1532, 2
    %v1534 = vadd.f32 %v1532, %v1533
    %v1535 = vrot.slane %v1534, 1
    %v1536 = vadd.f32 %v1534, %v1535
    %v1537 = vmul.f32 %v1536, %v811
    %v1538 = vadd.f32 %v1537, 1e-05
    %v1539 = vrsqrt.pop %v1538
    %v1540 = vmul.f32 %v1528, %v1539
    %v1542 = vlaneseq
    %v1543 = vshrl.u32 %v1542, 7
    %v1544 = vsub.s32 0, %v1543
    %v1545 = vrot.slane %v1517, %v1544
    %v1547 = vmul.f32 %v1540, %v1545
    %v1549 = vlaneseq
    %v1550 = vshrl.u32 %v1549, 7
    %v1551 = vsub.s32 0, %v1550
    %v1552 = vrot.slane %v1519, %v1551
    %v1554 = vadd.f32 %v1547, %v1552
    %v1555 = vpack.c.bf16 %v1554, %v1554
    %v1557 = vsel %vm850, %v1555, 0
    %1559 = vmatprep.subr.bf16.mxu0 0
    %1560 = vmatpush1.bf16.msra.mxu0 0
    %1561 = vmatprep.subr.bf16.mxu0 0
    %1562 = vmatpush1.bf16.msra.mxu0 0
    %1563 = vmatprep.subr.bf16.mxu0 0
    %1564 = vmatpush1.bf16.msra.mxu0 0
    %1565 = vmatprep.subr.bf16.mxu0 0
    %1566 = vmatpush1.bf16.msra.mxu0 0
    %1567 = vmatprep.subr.bf16.mxu0 0
    %1568 = vmatpush1.bf16.msra.mxu0 0
    %1569 = vmatprep.subr.bf16.mxu0 0
    %1570 = vmatpush1.bf16.msra.mxu0 0
    %1571 = vmatprep.subr.bf16.mxu0 0
    %1572 = vmatpush1.bf16.msra.mxu0 0
    %1573 = vmatprep.subr.bf16.mxu0 0
    %1574 = vmatpush1.bf16.msra.mxu0 %v1557
    %1575 = vmatprep.subr.bf16.mxu0 0
    %1576 = vmatpush2.bf16.msra.mxu0 0
    %1577 = vmatprep.subr.bf16.mxu0 0
    %1578 = vmatpush2.bf16.msra.mxu0 0
    %1579 = vmatprep.subr.bf16.mxu0 0
    %1580 = vmatpush2.bf16.msra.mxu0 0
    %1581 = vmatprep.subr.bf16.mxu0 0
    %1582 = vmatpush2.bf16.msra.mxu0 0
    %1583 = vmatprep.subr.bf16.mxu0 0
    %1584 = vmatpush2.bf16.msra.mxu0 0
    %1585 = vmatprep.subr.bf16.mxu0 0
    %1586 = vmatpush2.bf16.msra.mxu0 0
    %1587 = vmatprep.subr.bf16.mxu0 0
    %1588 = vmatpush2.bf16.msra.mxu0 0
    %1589 = vmatprep.subr.bf16.mxu0 0
    %1590 = vmatpush2.bf16.msra.mxu0 0
    %1591 = vmatprep.mubr.bf16.mxu0 0
    %1592 = vmatmul.mubr.bf16.gmra.mxu0 %v848
    %v1593 = vpop.f32.mrf.mxu0
    %v1594 = vadd.f32 0.0, %v1593
    %v1595 = vpop.f32.mrf.mxu0
    %v1596 = vpop.f32.mrf.mxu0
    %v1597 = vadd.f32 0.0, %v1596
    %v1598 = vpop.f32.mrf.mxu0
    %1599 = vdwg.mxu0
    %s1600 = scalar_lea.vmem [#allocation11], 32
    %v1601 = vld [vmem:[%s1600] sm:$0xf]
    %v1602 = vld [vmem:[%s1600 + $0x4] sm:$0xf]
    %v1603 = vld [vmem:[%s1600 + $0x8] sm:$0xf]
    %v1604 = vld [vmem:[%s1600 + $0xc] sm:$0xf]
    %v1605 = vld [vmem:[%s1600 + $0x10] sm:$0xf]
    %v1606 = vld [vmem:[%s1600 + $0x14] sm:$0xf]
    %v1607 = vld [vmem:[%s1600 + $0x18] sm:$0xf]
    %v1608 = vld [vmem:[%s1600 + $0x1c] sm:$0xf]
    %v1609 = vpack.c.bf16 %v1597, %v1594
    %s1610 = scalar_lea.vmem %s23, 1
    %v1611 = vld [vmem:[%s1610] sm:$0x1]
    %v1613 = vlaneseq
    %v1614 = vshrl.u32 %v1613, 7
    %v1615 = vsub.s32 0, %v1614
    %v1616 = vrot.slane %v1611, %v1615
    %v1626 = vunpack.c.l.b16 %v1601
    %v1627 = vunpack.c.l.b16 %v1602
    %v1628 = vunpack.c.l.b16 %v1603
    %v1629 = vunpack.c.l.b16 %v1604
    %v1630 = vunpack.c.l.b16 %v1605
    %v1631 = vunpack.c.l.b16 %v1606
    %v1632 = vunpack.c.l.b16 %v1607
    %v1633 = vunpack.c.l.b16 %v1608
    %v1634 = vpack.c.b16 %v1627, %v1626
    %v1635 = vpack.c.b16 %v1629, %v1628
    %v1636 = vpack.c.b16 %v1631, %v1630
    %v1637 = vpack.c.b16 %v1633, %v1632
    %v1643 = vsel %vm210, %v1609, 0
    %1645 = vmatprep.subr.bf16.mxu0 0
    %1646 = vmatpush1.bf16.msra.mxu0 0
    %1647 = vmatprep.subr.bf16.mxu0 0
    %1648 = vmatpush1.bf16.msra.mxu0 0
    %1649 = vmatprep.subr.bf16.mxu0 0
    %1650 = vmatpush1.bf16.msra.mxu0 0
    %1651 = vmatprep.subr.bf16.mxu0 0
    %1652 = vmatpush1.bf16.msra.mxu0 0
    %1653 = vmatprep.subr.bf16.mxu0 0
    %1654 = vmatpush1.bf16.msra.mxu0 %v1637
    %1655 = vmatprep.subr.bf16.mxu0 0
    %1656 = vmatpush1.bf16.msra.mxu0 %v1636
    %1657 = vmatprep.subr.bf16.mxu0 0
    %1658 = vmatpush1.bf16.msra.mxu0 %v1635
    %1659 = vmatprep.subr.bf16.mxu0 0
    %1660 = vmatpush1.bf16.msra.mxu0 %v1634
    %1661 = vmatprep.subr.bf16.mxu0 0
    %1662 = vmatpush2.bf16.msra.mxu0 0
    %1663 = vmatprep.subr.bf16.mxu0 0
    %1664 = vmatpush2.bf16.msra.mxu0 0
    %1665 = vmatprep.subr.bf16.mxu0 0
    %1666 = vmatpush2.bf16.msra.mxu0 0
    %1667 = vmatprep.subr.bf16.mxu0 0
    %1668 = vmatpush2.bf16.msra.mxu0 0
    %1669 = vmatprep.subr.bf16.mxu0 0
    %1670 = vmatpush2.bf16.msra.mxu0 0
    %1671 = vmatprep.subr.bf16.mxu0 0
    %1672 = vmatpush2.bf16.msra.mxu0 0
    %1673 = vmatprep.subr.bf16.mxu0 0
    %1674 = vmatpush2.bf16.msra.mxu0 0
    %1675 = vmatprep.subr.bf16.mxu0 0
    %1676 = vmatpush2.bf16.msra.mxu0 0
    %1677 = vmatprep.mubr.bf16.mxu0 0
    %1678 = vmatmul.mubr.bf16.gmra.mxu0 %v1643
    %v1679 = vpop.f32.mrf.mxu0
    %v1680 = vadd.f32 %v1616, %v1679
    %v1681 = vpop.f32.mrf.mxu0
    %v1682 = vpop.f32.mrf.mxu0
    %v1683 = vadd.f32 %v1616, %v1682
    %v1684 = vpop.f32.mrf.mxu0
    %1685 = vdwg.mxu0
    %vm1686 = vcmp.gt.f32.partialorder %v1680, 0.0
    %vm1687 = vcmp.gt.f32.partialorder %v1683, 0.0
    %v1688 = vmul.f32 %v1680, 0.01
    %v1689 = vmul.f32 %v1683, 0.01
    %v1690 = vsel %vm1686, %v1680, %v1688
    %v1691 = vsel %vm1687, %v1683, %v1689
    %v1692 = vadd.f32 %v1386, %v1690
    %v1693 = vadd.f32 %v1387, %v1691
    %v1694 = vpack.c.bf16 %v1693, %v1692
    %s1695 = scalar_lea.vmem %s7, 64
    %v1696 = vld [vmem:[%s1695] sm:$0xff]
    %v1697 = vld [vmem:[%s1695 + $0x8] sm:$0xff]
    %v1698 = vld [vmem:[%s1695 + $0x10] sm:$0xff]
    %v1699 = vld [vmem:[%s1695 + $0x18] sm:$0xff]
    %1700 = vmatprep.subr.bf16.mxu0 0
    %1701 = vmatpush1.bf16.msra.mxu0 0
    %1702 = vmatprep.subr.bf16.mxu0 0
    %1703 = vmatpush1.bf16.msra.mxu0 0
    %1704 = vmatprep.subr.bf16.mxu0 0
    %1705 = vmatpush1.bf16.msra.mxu0 0
    %1706 = vmatprep.subr.bf16.mxu0 0
    %1707 = vmatpush1.bf16.msra.mxu0 0
    %1708 = vmatprep.subr.bf16.mxu0 0
    %1709 = vmatpush1.bf16.msra.mxu0 0
    %1710 = vmatprep.subr.bf16.mxu0 0
    %1711 = vmatpush1.bf16.msra.mxu0 0
    %1712 = vmatprep.subr.bf16.mxu0 0
    %1713 = vmatpush1.bf16.msra.mxu0 0
    %1714 = vmatprep.subr.bf16.mxu0 0
    %1715 = vmatpush1.bf16.msra.mxu0 %v1694
    %1716 = vmatprep.subr.bf16.mxu0 0
    %1717 = vmatpush2.bf16.msra.mxu0 0
    %1718 = vmatprep.subr.bf16.mxu0 0
    %1719 = vmatpush2.bf16.msra.mxu0 0
    %1720 = vmatprep.subr.bf16.mxu0 0
    %1721 = vmatpush2.bf16.msra.mxu0 0
    %1722 = vmatprep.subr.bf16.mxu0 0
    %1723 = vmatpush2.bf16.msra.mxu0 0
    %1724 = vmatprep.subr.bf16.mxu0 0
    %1725 = vmatpush2.bf16.msra.mxu0 0
    %1726 = vmatprep.subr.bf16.mxu0 0
    %1727 = vmatpush2.bf16.msra.mxu0 0
    %1728 = vmatprep.subr.bf16.mxu0 0
    %1729 = vmatpush2.bf16.msra.mxu0 0
    %1730 = vmatprep.subr.bf16.mxu0 0
    %1731 = vmatpush2.bf16.msra.mxu0 0
    %1732 = vmatprep.mubr.bf16.mxu0 0
    %1733 = vmatmul.mubr.bf16.gmra.mxu0 %v271
    %v1734 = vpop.f32.mrf.mxu0
    %v1735 = vadd.f32 %v1696, %v1734
    %v1736 = vpop.f32.mrf.mxu0
    %v1737 = vpop.f32.mrf.mxu0
    %v1738 = vadd.f32 %v1697, %v1737
    %v1739 = vpop.f32.mrf.mxu0
    %1740 = vmatprep.mubr.bf16.mxu0 0
    %1741 = vmatmul.mubr.bf16.gmra.mxu0 %v274
    %v1742 = vpop.f32.mrf.mxu0
    %v1743 = vadd.f32 %v1698, %v1742
    %v1744 = vpop.f32.mrf.mxu0
    %v1745 = vpop.f32.mrf.mxu0
    %v1746 = vadd.f32 %v1699, %v1745
    %v1747 = vpop.f32.mrf.mxu0
    %1748 = vdwg.mxu0
    %v1749 = vmax.f32 %v1735, 0.0
    %v1750 = vmax.f32 %v1738, 0.0
    %v1751 = vmax.f32 %v1743, 0.0
    %v1752 = vmax.f32 %v1746, 0.0
    %v1753 = vpack.c.bf16 %v1750, %v1749
    %v1754 = vpack.c.bf16 %v1752, %v1751
    %1755 = vmatprep.subr.bf16.mxu0 0
    %1756 = vmatpush1.bf16.msra.mxu0 0
    %1757 = vmatprep.subr.bf16.mxu0 0
    %1758 = vmatpush1.bf16.msra.mxu0 0
    %1759 = vmatprep.subr.bf16.mxu0 0
    %1760 = vmatpush1.bf16.msra.mxu0 0
    %1761 = vmatprep.subr.bf16.mxu0 0
    %1762 = vmatpush1.bf16.msra.mxu0 0
    %1763 = vmatprep.subr.bf16.mxu0 0
    %1764 = vmatpush1.bf16.msra.mxu0 0
    %1765 = vmatprep.subr.bf16.mxu0 0
    %1766 = vmatpush1.bf16.msra.mxu0 0
    %1767 = vmatprep.subr.bf16.mxu0 0
    %1768 = vmatpush1.bf16.msra.mxu0 %v1754
    %1769 = vmatprep.subr.bf16.mxu0 0
    %1770 = vmatpush1.bf16.msra.mxu0 %v1753
    %1771 = vmatprep.subr.bf16.mxu0 0
    %1772 = vmatpush2.bf16.msra.mxu0 0
    %1773 = vmatprep.subr.bf16.mxu0 0
    %1774 = vmatpush2.bf16.msra.mxu0 0
    %1775 = vmatprep.subr.bf16.mxu0 0
    %1776 = vmatpush2.bf16.msra.mxu0 0
    %1777 = vmatprep.subr.bf16.mxu0 0
    %1778 = vmatpush2.bf16.msra.mxu0 0
    %1779 = vmatprep.subr.bf16.mxu0 0
    %1780 = vmatpush2.bf16.msra.mxu0 0
    %1781 = vmatprep.subr.bf16.mxu0 0
    %1782 = vmatpush2.bf16.msra.mxu0 0
    %1783 = vmatprep.subr.bf16.mxu0 0
    %1784 = vmatpush2.bf16.msra.mxu0 0
    %1785 = vmatprep.subr.bf16.mxu0 0
    %1786 = vmatpush2.bf16.msra.mxu0 0
    %1787 = vmatprep.mubr.bf16.mxu0 0
    %1788 = vmatmul.mubr.bf16.gmra.mxu0 %v338
    %v1789 = vpop.f32.mrf.mxu0
    %v1790 = vadd.f32 0.0, %v1789
    %v1791 = vpop.f32.mrf.mxu0
    %v1792 = vpop.f32.mrf.mxu0
    %v1793 = vadd.f32 0.0, %v1792
    %v1794 = vpop.f32.mrf.mxu0
    %1795 = vdwg.mxu0
    %v1796 = vadd.f32 %v1692, %v1790
    %v1797 = vadd.f32 %v1693, %v1793
    %s1798 = scalar_lea.vmem %s10, 64
    %v1799 = vld [vmem:[%s1798] sm:$0xf]
    %v1800 = vld [vmem:[%s1798 + $0x4] sm:$0xf]
    %v1801 = vld [vmem:[%s1798 + $0x8] sm:$0xf]
    %v1802 = vld [vmem:[%s1798 + $0xc] sm:$0xf]
    %v1803 = vld [vmem:[%s1798 + $0x10] sm:$0xf]
    %v1804 = vld [vmem:[%s1798 + $0x14] sm:$0xf]
    %v1805 = vld [vmem:[%s1798 + $0x18] sm:$0xf]
    %v1806 = vld [vmem:[%s1798 + $0x1c] sm:$0xf]
    %v1807 = vpack.c.bf16 %v1797, %v1796
    %s1808 = scalar_lea.vmem %s11, 2
    %v1809 = vld [vmem:[%s1808] sm:$0x1]
    %v1811 = vlaneseq
    %v1812 = vshrl.u32 %v1811, 7
    %v1813 = vsub.s32 0, %v1812
    %v1814 = vrot.slane %v1809, %v1813
    %v1824 = vunpack.c.l.b16 %v1799
    %v1825 = vunpack.c.l.b16 %v1800
    %v1826 = vunpack.c.l.b16 %v1801
    %v1827 = vunpack.c.l.b16 %v1802
    %v1828 = vunpack.c.l.b16 %v1803
    %v1829 = vunpack.c.l.b16 %v1804
    %v1830 = vunpack.c.l.b16 %v1805
    %v1831 = vunpack.c.l.b16 %v1806
    %v1832 = vpack.c.b16 %v1825, %v1824
    %v1833 = vpack.c.b16 %v1827, %v1826
    %v1834 = vpack.c.b16 %v1829, %v1828
    %v1835 = vpack.c.b16 %v1831, %v1830
    %v1841 = vsel %vm210, %v1807, 0
    %1843 = vmatprep.subr.bf16.mxu0 0
    %1844 = vmatpush1.bf16.msra.mxu0 0
    %1845 = vmatprep.subr.bf16.mxu0 0
    %1846 = vmatpush1.bf16.msra.mxu0 0
    %1847 = vmatprep.subr.bf16.mxu0 0
    %1848 = vmatpush1.bf16.msra.mxu0 0
    %1849 = vmatprep.subr.bf16.mxu0 0
    %1850 = vmatpush1.bf16.msra.mxu0 0
    %1851 = vmatprep.subr.bf16.mxu0 0
    %1852 = vmatpush1.bf16.msra.mxu0 %v1835
    %1853 = vmatprep.subr.bf16.mxu0 0
    %1854 = vmatpush1.bf16.msra.mxu0 %v1834
    %1855 = vmatprep.subr.bf16.mxu0 0
    %1856 = vmatpush1.bf16.msra.mxu0 %v1833
    %1857 = vmatprep.subr.bf16.mxu0 0
    %1858 = vmatpush1.bf16.msra.mxu0 %v1832
    %1859 = vmatprep.subr.bf16.mxu0 0
    %1860 = vmatpush2.bf16.msra.mxu0 0
    %1861 = vmatprep.subr.bf16.mxu0 0
    %1862 = vmatpush2.bf16.msra.mxu0 0
    %1863 = vmatprep.subr.bf16.mxu0 0
    %1864 = vmatpush2.bf16.msra.mxu0 0
    %1865 = vmatprep.subr.bf16.mxu0 0
    %1866 = vmatpush2.bf16.msra.mxu0 0
    %1867 = vmatprep.subr.bf16.mxu0 0
    %1868 = vmatpush2.bf16.msra.mxu0 0
    %1869 = vmatprep.subr.bf16.mxu0 0
    %1870 = vmatpush2.bf16.msra.mxu0 0
    %1871 = vmatprep.subr.bf16.mxu0 0
    %1872 = vmatpush2.bf16.msra.mxu0 0
    %1873 = vmatprep.subr.bf16.mxu0 0
    %1874 = vmatpush2.bf16.msra.mxu0 0
    %1875 = vmatprep.mubr.bf16.mxu0 0
    %1876 = vmatmul.mubr.bf16.gmra.mxu0 %v1841
    %v1877 = vpop.f32.mrf.mxu0
    %v1878 = vadd.f32 %v1814, %v1877
    %v1879 = vpop.f32.mrf.mxu0
    %v1880 = vpop.f32.mrf.mxu0
    %v1881 = vadd.f32 %v1814, %v1880
    %v1882 = vpop.f32.mrf.mxu0
    %1883 = vdwg.mxu0
    %s1884 = scalar_lea.vmem %s12, 2
    %v1885 = vld [vmem:[%s1884] sm:$0x1]
    %s1886 = scalar_lea.vmem %s13, 2
    %v1887 = vld [vmem:[%s1886] sm:$0x1]
    %v1888 = vadd.f32 %v1878, %v1881
    %v1889 = vrot.slane %v1888, 4
    %v1890 = vadd.f32 %v1888, %v1889
    %v1891 = vrot.slane %v1890, 2
    %v1892 = vadd.f32 %v1890, %v1891
    %v1893 = vrot.slane %v1892, 1
    %v1894 = vadd.f32 %v1892, %v1893
    %v1895 = vmul.f32 %v1894, %v476
    %v1896 = vsub.f32 %v1878, %v1895
    %v1897 = vsub.f32 %v1881, %v1895
    %v1898 = vmul.f32 %v1896, %v1896
    %v1899 = vmul.f32 %v1897, %v1897
    %v1900 = vadd.f32 %v1898, %v1899
    %v1901 = vrot.slane %v1900, 4
    %v1902 = vadd.f32 %v1900, %v1901
    %v1903 = vrot.slane %v1902, 2
    %v1904 = vadd.f32 %v1902, %v1903
    %v1905 = vrot.slane %v1904, 1
    %v1906 = vadd.f32 %v1904, %v1905
    %v1907 = vmul.f32 %v1906, %v476
    %v1908 = vadd.f32 %v1907, 1e-05
    %v1909 = vrsqrt.pop %v1908
    %v1910 = vmul.f32 %v1896, %v1909
    %v1911 = vmul.f32 %v1897, %v1909
    %v1913 = vlaneseq
    %v1914 = vshrl.u32 %v1913, 7
    %v1915 = vsub.s32 0, %v1914
    %v1916 = vrot.slane %v1885, %v1915
    %v1918 = vmul.f32 %v1910, %v1916
    %v1919 = vmul.f32 %v1911, %v1916
    %v1921 = vlaneseq
    %v1922 = vshrl.u32 %v1921, 7
    %v1923 = vsub.s32 0, %v1922
    %v1924 = vrot.slane %v1887, %v1923
    %v1926 = vadd.f32 %v1918, %v1924
    %v1927 = vadd.f32 %v1919, %v1924
    %v1928 = vmax.f32 %v1926, 0.0
    %v1929 = vmax.f32 %v1927, 0.0
    %s1930 = scalar_lea.vmem %s14, 128
    %v1931 = vld [vmem:[%s1930] sm:$0xf]
    %v1932 = vld [vmem:[%s1930 + $0x4] sm:$0xf]
    %v1933 = vld [vmem:[%s1930 + $0x8] sm:$0xf]
    %v1934 = vld [vmem:[%s1930 + $0xc] sm:$0xf]
    %v1935 = vld [vmem:[%s1930 + $0x10] sm:$0xf]
    %v1936 = vld [vmem:[%s1930 + $0x14] sm:$0xf]
    %v1937 = vld [vmem:[%s1930 + $0x18] sm:$0xf]
    %v1938 = vld [vmem:[%s1930 + $0x1c] sm:$0xf]
    %v1939 = vld [vmem:[%s1930 + $0x20] sm:$0xf]
    %v1940 = vld [vmem:[%s1930 + $0x24] sm:$0xf]
    %v1941 = vld [vmem:[%s1930 + $0x28] sm:$0xf]
    %v1942 = vld [vmem:[%s1930 + $0x2c] sm:$0xf]
    %v1943 = vld [vmem:[%s1930 + $0x30] sm:$0xf]
    %v1944 = vld [vmem:[%s1930 + $0x34] sm:$0xf]
    %v1945 = vld [vmem:[%s1930 + $0x38] sm:$0xf]
    %v1946 = vld [vmem:[%s1930 + $0x3c] sm:$0xf]
    %v1947 = vpack.c.bf16 %v1929, %v1928
    %s1948 = scalar_lea.vmem %s15, 2
    %v1949 = vld [vmem:[%s1948] sm:$0x1]
    %v1951 = vlaneseq
    %v1952 = vshrl.u32 %v1951, 7
    %v1953 = vsub.s32 0, %v1952
    %v1954 = vrot.slane %v1949, %v1953
    %v1972 = vunpack.c.l.b16 %v1931
    %v1973 = vunpack.c.l.b16 %v1932
    %v1974 = vunpack.c.l.b16 %v1933
    %v1975 = vunpack.c.l.b16 %v1934
    %v1976 = vunpack.c.l.b16 %v1935
    %v1977 = vunpack.c.l.b16 %v1936
    %v1978 = vunpack.c.l.b16 %v1937
    %v1979 = vunpack.c.l.b16 %v1938
    %v1980 = vunpack.c.l.b16 %v1939
    %v1981 = vunpack.c.l.b16 %v1940
    %v1982 = vunpack.c.l.b16 %v1941
    %v1983 = vunpack.c.l.b16 %v1942
    %v1984 = vunpack.c.l.b16 %v1943
    %v1985 = vunpack.c.l.b16 %v1944
    %v1986 = vunpack.c.l.b16 %v1945
    %v1987 = vunpack.c.l.b16 %v1946
    %v1988 = vpack.c.b16 %v1973, %v1972
    %v1989 = vpack.c.b16 %v1975, %v1974
    %v1990 = vpack.c.b16 %v1977, %v1976
    %v1991 = vpack.c.b16 %v1979, %v1978
    %v1992 = vpack.c.b16 %v1981, %v1980
    %v1993 = vpack.c.b16 %v1983, %v1982
    %v1994 = vpack.c.b16 %v1985, %v1984
    %v1995 = vpack.c.b16 %v1987, %v1986
    %2004 = vmatprep.subr.bf16.mxu0 0
    %2005 = vmatpush1.bf16.msra.mxu0 %v1995
    %2006 = vmatprep.subr.bf16.mxu0 0
    %2007 = vmatpush1.bf16.msra.mxu0 %v1994
    %2008 = vmatprep.subr.bf16.mxu0 0
    %2009 = vmatpush1.bf16.msra.mxu0 %v1993
    %2010 = vmatprep.subr.bf16.mxu0 0
    %2011 = vmatpush1.bf16.msra.mxu0 %v1992
    %2012 = vmatprep.subr.bf16.mxu0 0
    %2013 = vmatpush1.bf16.msra.mxu0 %v1991
    %2014 = vmatprep.subr.bf16.mxu0 0
    %2015 = vmatpush1.bf16.msra.mxu0 %v1990
    %2016 = vmatprep.subr.bf16.mxu0 0
    %2017 = vmatpush1.bf16.msra.mxu0 %v1989
    %2018 = vmatprep.subr.bf16.mxu0 0
    %2019 = vmatpush1.bf16.msra.mxu0 %v1988
    %2020 = vmatprep.subr.bf16.mxu0 0
    %2021 = vmatpush2.bf16.msra.mxu0 0
    %2022 = vmatprep.subr.bf16.mxu0 0
    %2023 = vmatpush2.bf16.msra.mxu0 0
    %2024 = vmatprep.subr.bf16.mxu0 0
    %2025 = vmatpush2.bf16.msra.mxu0 0
    %2026 = vmatprep.subr.bf16.mxu0 0
    %2027 = vmatpush2.bf16.msra.mxu0 0
    %2028 = vmatprep.subr.bf16.mxu0 0
    %2029 = vmatpush2.bf16.msra.mxu0 0
    %2030 = vmatprep.subr.bf16.mxu0 0
    %2031 = vmatpush2.bf16.msra.mxu0 0
    %2032 = vmatprep.subr.bf16.mxu0 0
    %2033 = vmatpush2.bf16.msra.mxu0 0
    %2034 = vmatprep.subr.bf16.mxu0 0
    %2035 = vmatpush2.bf16.msra.mxu0 0
    %2036 = vmatprep.mubr.bf16.mxu0 0
    %2037 = vmatmul.mubr.bf16.gmra.mxu0 %v1947
    %v2038 = vpop.f32.mrf.mxu0
    %v2039 = vadd.f32 %v1954, %v2038
    %v2040 = vpop.f32.mrf.mxu0
    %v2041 = vpop.f32.mrf.mxu0
    %v2042 = vadd.f32 %v1954, %v2041
    %v2043 = vpop.f32.mrf.mxu0
    %2044 = vdwg.mxu0
    %s2045 = scalar_lea.vmem %s16, 2
    %v2046 = vld [vmem:[%s2045] sm:$0x1]
    %s2047 = scalar_lea.vmem %s17, 2
    %v2048 = vld [vmem:[%s2047] sm:$0x1]
    %v2049 = vsel %vm210, %v2039, 0.0
    %v2050 = vsel %vm210, %v2042, 0.0
    %v2051 = vadd.f32 %v2049, %v2050
    %v2052 = vrot.slane %v2051, 4
    %v2053 = vadd.f32 %v2051, %v2052
    %v2054 = vrot.slane %v2053, 2
    %v2055 = vadd.f32 %v2053, %v2054
    %v2056 = vrot.slane %v2055, 1
    %v2057 = vadd.f32 %v2055, %v2056
    %v2058 = vmul.f32 %v2057, %v476
    %v2059 = vsub.f32 %v2039, %v2058
    %v2060 = vsub.f32 %v2042, %v2058
    %v2061 = vmul.f32 %v2059, %v2059
    %v2062 = vmul.f32 %v2060, %v2060
    %v2063 = vsel %vm210, %v2061, 0.0
    %v2064 = vsel %vm210, %v2062, 0.0
    %v2065 = vadd.f32 %v2063, %v2064
    %v2066 = vrot.slane %v2065, 4
    %v2067 = vadd.f32 %v2065, %v2066
    %v2068 = vrot.slane %v2067, 2
    %v2069 = vadd.f32 %v2067, %v2068
    %v2070 = vrot.slane %v2069, 1
    %v2071 = vadd.f32 %v2069, %v2070
    %v2072 = vmul.f32 %v2071, %v476
    %v2073 = vadd.f32 %v2072, 1e-05
    %v2074 = vrsqrt.pop %v2073
    %v2075 = vmul.f32 %v2059, %v2074
    %v2076 = vmul.f32 %v2060, %v2074
    %v2078 = vlaneseq
    %v2079 = vshrl.u32 %v2078, 7
    %v2080 = vsub.s32 0, %v2079
    %v2081 = vrot.slane %v2046, %v2080
    %v2083 = vmul.f32 %v2075, %v2081
    %v2084 = vmul.f32 %v2076, %v2081
    %v2086 = vlaneseq
    %v2087 = vshrl.u32 %v2086, 7
    %v2088 = vsub.s32 0, %v2087
    %v2089 = vrot.slane %v2048, %v2088
    %v2091 = vadd.f32 %v2083, %v2089
    %v2092 = vadd.f32 %v2084, %v2089
    %v2093 = vmax.f32 %v2091, 0.0
    %v2094 = vmax.f32 %v2092, 0.0
    %v2095 = vpack.c.bf16 %v2094, %v2093
    %2096 = vmatprep.subr.bf16.mxu0 0
    %2097 = vmatpush1.bf16.msra.mxu0 0
    %2098 = vmatprep.subr.bf16.mxu0 0
    %2099 = vmatpush1.bf16.msra.mxu0 0
    %2100 = vmatprep.subr.bf16.mxu0 0
    %2101 = vmatpush1.bf16.msra.mxu0 0
    %2102 = vmatprep.subr.bf16.mxu0 0
    %2103 = vmatpush1.bf16.msra.mxu0 0
    %2104 = vmatprep.subr.bf16.mxu0 0
    %2105 = vmatpush1.bf16.msra.mxu0 0
    %2106 = vmatprep.subr.bf16.mxu0 0
    %2107 = vmatpush1.bf16.msra.mxu0 0
    %2108 = vmatprep.subr.bf16.mxu0 0
    %2109 = vmatpush1.bf16.msra.mxu0 0
    %2110 = vmatprep.subr.bf16.mxu0 0
    %2111 = vmatpush1.bf16.msra.mxu0 %v2095
    %2112 = vmatprep.subr.bf16.mxu0 0
    %2113 = vmatpush2.bf16.msra.mxu0 0
    %2114 = vmatprep.subr.bf16.mxu0 0
    %2115 = vmatpush2.bf16.msra.mxu0 0
    %2116 = vmatprep.subr.bf16.mxu0 0
    %2117 = vmatpush2.bf16.msra.mxu0 0
    %2118 = vmatprep.subr.bf16.mxu0 0
    %2119 = vmatpush2.bf16.msra.mxu0 0
    %2120 = vmatprep.subr.bf16.mxu0 0
    %2121 = vmatpush2.bf16.msra.mxu0 0
    %2122 = vmatprep.subr.bf16.mxu0 0
    %2123 = vmatpush2.bf16.msra.mxu0 0
    %2124 = vmatprep.subr.bf16.mxu0 0
    %2125 = vmatpush2.bf16.msra.mxu0 0
    %2126 = vmatprep.subr.bf16.mxu0 0
    %2127 = vmatpush2.bf16.msra.mxu0 0
    %2128 = vmatprep.mubr.bf16.mxu0 0
    %2129 = vmatmul.mubr.bf16.gmra.mxu0 %v675
    %v2130 = vpop.f32.mrf.mxu0
    %v2131 = vadd.f32 0.0, %v2130
    %v2132 = vpop.f32.mrf.mxu0
    %v2133 = vpop.f32.mrf.mxu0
    %v2134 = vpop.f32.mrf.mxu0
    %2135 = vdwg.mxu0
    %s2136 = scalar_lea.vmem %s20, 64
    %v2137 = vld [vmem:[%s2136] sm:$0xf]
    %v2138 = vld [vmem:[%s2136 + $0x4] sm:$0xf]
    %v2139 = vld [vmem:[%s2136 + $0x8] sm:$0xf]
    %v2140 = vld [vmem:[%s2136 + $0xc] sm:$0xf]
    %v2141 = vld [vmem:[%s2136 + $0x10] sm:$0xf]
    %v2142 = vld [vmem:[%s2136 + $0x14] sm:$0xf]
    %v2143 = vld [vmem:[%s2136 + $0x18] sm:$0xf]
    %v2144 = vld [vmem:[%s2136 + $0x1c] sm:$0xf]
    %v2145 = vpack.c.bf16 %v2131, %v2131
    %s2146 = scalar_lea.vmem %s21, 2
    %v2147 = vld [vmem:[%s2146] sm:$0x1]
    %v2149 = vlaneseq
    %v2150 = vshrl.u32 %v2149, 7
    %v2151 = vsub.s32 0, %v2150
    %v2152 = vrot.slane %v2147, %v2151
    %v2162 = vunpack.c.l.b16 %v2137
    %v2163 = vunpack.c.l.b16 %v2138
    %v2164 = vunpack.c.l.b16 %v2139
    %v2165 = vunpack.c.l.b16 %v2140
    %v2166 = vunpack.c.l.b16 %v2141
    %v2167 = vunpack.c.l.b16 %v2142
    %v2168 = vunpack.c.l.b16 %v2143
    %v2169 = vunpack.c.l.b16 %v2144
    %v2170 = vpack.c.b16 %v2163, %v2162
    %v2171 = vpack.c.b16 %v2165, %v2164
    %v2172 = vpack.c.b16 %v2167, %v2166
    %v2173 = vpack.c.b16 %v2169, %v2168
    %v2179 = vsel %vm210, %v2145, 0
    %2181 = vmatprep.subr.bf16.mxu0 0
    %2182 = vmatpush1.bf16.msra.mxu0 0
    %2183 = vmatprep.subr.bf16.mxu0 0
    %2184 = vmatpush1.bf16.msra.mxu0 0
    %2185 = vmatprep.subr.bf16.mxu0 0
    %2186 = vmatpush1.bf16.msra.mxu0 0
    %2187 = vmatprep.subr.bf16.mxu0 0
    %2188 = vmatpush1.bf16.msra.mxu0 0
    %2189 = vmatprep.subr.bf16.mxu0 0
    %2190 = vmatpush1.bf16.msra.mxu0 %v2173
    %2191 = vmatprep.subr.bf16.mxu0 0
    %2192 = vmatpush1.bf16.msra.mxu0 %v2172
    %2193 = vmatprep.subr.bf16.mxu0 0
    %2194 = vmatpush1.bf16.msra.mxu0 %v2171
    %2195 = vmatprep.subr.bf16.mxu0 0
    %2196 = vmatpush1.bf16.msra.mxu0 %v2170
    %2197 = vmatprep.subr.bf16.mxu0 0
    %2198 = vmatpush2.bf16.msra.mxu0 0
    %2199 = vmatprep.subr.bf16.mxu0 0
    %2200 = vmatpush2.bf16.msra.mxu0 0
    %2201 = vmatprep.subr.bf16.mxu0 0
    %2202 = vmatpush2.bf16.msra.mxu0 0
    %2203 = vmatprep.subr.bf16.mxu0 0
    %2204 = vmatpush2.bf16.msra.mxu0 0
    %2205 = vmatprep.subr.bf16.mxu0 0
    %2206 = vmatpush2.bf16.msra.mxu0 0
    %2207 = vmatprep.subr.bf16.mxu0 0
    %2208 = vmatpush2.bf16.msra.mxu0 0
    %2209 = vmatprep.subr.bf16.mxu0 0
    %2210 = vmatpush2.bf16.msra.mxu0 0
    %2211 = vmatprep.subr.bf16.mxu0 0
    %2212 = vmatpush2.bf16.msra.mxu0 0
    %2213 = vmatprep.mubr.bf16.mxu0 0
    %2214 = vmatmul.mubr.bf16.gmra.mxu0 %v2179
    %v2215 = vpop.f32.mrf.mxu0
    %v2216 = vadd.f32 %v2152, %v2215
    %v2217 = vpop.f32.mrf.mxu0
    %v2218 = vpop.f32.mrf.mxu0
    %v2219 = vpop.f32.mrf.mxu0
    %2220 = vdwg.mxu0
    %v2221 = vmax.f32 %v2216, 0.0
    %v2222 = vadd.f32 %v1554, %v2221
    %s2223 = scalar_lea.vmem %s18, 2
    %v2224 = vld [vmem:[%s2223] sm:$0x1]
    %s2225 = scalar_lea.vmem %s19, 2
    %v2226 = vld [vmem:[%s2225] sm:$0x1]
    %v2227 = vsel %vm210, %v2222, 0.0
    %v2228 = vrot.slane %v2227, 4
    %v2229 = vadd.f32 %v2227, %v2228
    %v2230 = vrot.slane %v2229, 2
    %v2231 = vadd.f32 %v2229, %v2230
    %v2232 = vrot.slane %v2231, 1
    %v2233 = vadd.f32 %v2231, %v2232
    %v2234 = vmul.f32 %v2233, %v811
    %v2235 = vsub.f32 %v2222, %v2234
    %v2236 = vmul.f32 %v2235, %v2235
    %v2237 = vsel %vm210, %v2236, 0.0
    %v2238 = vrot.slane %v2237, 4
    %v2239 = vadd.f32 %v2237, %v2238
    %v2240 = vrot.slane %v2239, 2
    %v2241 = vadd.f32 %v2239, %v2240
    %v2242 = vrot.slane %v2241, 1
    %v2243 = vadd.f32 %v2241, %v2242
    %v2244 = vmul.f32 %v2243, %v811
    %v2245 = vadd.f32 %v2244, 1e-05
    %v2246 = vrsqrt.pop %v2245
    %v2247 = vmul.f32 %v2235, %v2246
    %v2249 = vlaneseq
    %v2250 = vshrl.u32 %v2249, 7
    %v2251 = vsub.s32 0, %v2250
    %v2252 = vrot.slane %v2224, %v2251
    %v2254 = vmul.f32 %v2247, %v2252
    %v2256 = vlaneseq
    %v2257 = vshrl.u32 %v2256, 7
    %v2258 = vsub.s32 0, %v2257
    %v2259 = vrot.slane %v2226, %v2258
    %v2261 = vadd.f32 %v2254, %v2259
    %v2262 = vpack.c.bf16 %v2261, %v2261
    %v2264 = vsel %vm850, %v2262, 0
    %2266 = vmatprep.subr.bf16.mxu0 0
    %2267 = vmatpush1.bf16.msra.mxu0 0
    %2268 = vmatprep.subr.bf16.mxu0 0
    %2269 = vmatpush1.bf16.msra.mxu0 0
    %2270 = vmatprep.subr.bf16.mxu0 0
    %2271 = vmatpush1.bf16.msra.mxu0 0
    %2272 = vmatprep.subr.bf16.mxu0 0
    %2273 = vmatpush1.bf16.msra.mxu0 0
    %2274 = vmatprep.subr.bf16.mxu0 0
    %2275 = vmatpush1.bf16.msra.mxu0 0
    %2276 = vmatprep.subr.bf16.mxu0 0
    %2277 = vmatpush1.bf16.msra.mxu0 0
    %2278 = vmatprep.subr.bf16.mxu0 0
    %2279 = vmatpush1.bf16.msra.mxu0 0
    %2280 = vmatprep.subr.bf16.mxu0 0
    %2281 = vmatpush1.bf16.msra.mxu0 %v2264
    %2282 = vmatprep.subr.bf16.mxu0 0
    %2283 = vmatpush2.bf16.msra.mxu0 0
    %2284 = vmatprep.subr.bf16.mxu0 0
    %2285 = vmatpush2.bf16.msra.mxu0 0
    %2286 = vmatprep.subr.bf16.mxu0 0
    %2287 = vmatpush2.bf16.msra.mxu0 0
    %2288 = vmatprep.subr.bf16.mxu0 0
    %2289 = vmatpush2.bf16.msra.mxu0 0
    %2290 = vmatprep.subr.bf16.mxu0 0
    %2291 = vmatpush2.bf16.msra.mxu0 0
    %2292 = vmatprep.subr.bf16.mxu0 0
    %2293 = vmatpush2.bf16.msra.mxu0 0
    %2294 = vmatprep.subr.bf16.mxu0 0
    %2295 = vmatpush2.bf16.msra.mxu0 0
    %2296 = vmatprep.subr.bf16.mxu0 0
    %2297 = vmatpush2.bf16.msra.mxu0 0
    %2298 = vmatprep.mubr.bf16.mxu0 0
    %2299 = vmatmul.mubr.bf16.gmra.mxu0 %v848
    %v2300 = vpop.f32.mrf.mxu0
    %v2301 = vadd.f32 0.0, %v2300
    %v2302 = vpop.f32.mrf.mxu0
    %v2303 = vpop.f32.mrf.mxu0
    %v2304 = vadd.f32 0.0, %v2303
    %v2305 = vpop.f32.mrf.mxu0
    %2306 = vdwg.mxu0
    %s2307 = scalar_lea.vmem [#allocation11], 64
    %v2308 = vld [vmem:[%s2307] sm:$0xf]
    %v2309 = vld [vmem:[%s2307 + $0x4] sm:$0xf]
    %v2310 = vld [vmem:[%s2307 + $0x8] sm:$0xf]
    %v2311 = vld [vmem:[%s2307 + $0xc] sm:$0xf]
    %v2312 = vld [vmem:[%s2307 + $0x10] sm:$0xf]
    %v2313 = vld [vmem:[%s2307 + $0x14] sm:$0xf]
    %v2314 = vld [vmem:[%s2307 + $0x18] sm:$0xf]
    %v2315 = vld [vmem:[%s2307 + $0x1c] sm:$0xf]
    %v2316 = vpack.c.bf16 %v2304, %v2301
    %s2317 = scalar_lea.vmem %s23, 2
    %v2318 = vld [vmem:[%s2317] sm:$0x1]
    %v2320 = vlaneseq
    %v2321 = vshrl.u32 %v2320, 7
    %v2322 = vsub.s32 0, %v2321
    %v2323 = vrot.slane %v2318, %v2322
    %v2333 = vunpack.c.l.b16 %v2308
    %v2334 = vunpack.c.l.b16 %v2309
    %v2335 = vunpack.c.l.b16 %v2310
    %v2336 = vunpack.c.l.b16 %v2311
    %v2337 = vunpack.c.l.b16 %v2312
    %v2338 = vunpack.c.l.b16 %v2313
    %v2339 = vunpack.c.l.b16 %v2314
    %v2340 = vunpack.c.l.b16 %v2315
    %v2341 = vpack.c.b16 %v2334, %v2333
    %v2342 = vpack.c.b16 %v2336, %v2335
    %v2343 = vpack.c.b16 %v2338, %v2337
    %v2344 = vpack.c.b16 %v2340, %v2339
    %v2350 = vsel %vm210, %v2316, 0
    %2352 = vmatprep.subr.bf16.mxu0 0
    %2353 = vmatpush1.bf16.msra.mxu0 0
    %2354 = vmatprep.subr.bf16.mxu0 0
    %2355 = vmatpush1.bf16.msra.mxu0 0
    %2356 = vmatprep.subr.bf16.mxu0 0
    %2357 = vmatpush1.bf16.msra.mxu0 0
    %2358 = vmatprep.subr.bf16.mxu0 0
    %2359 = vmatpush1.bf16.msra.mxu0 0
    %2360 = vmatprep.subr.bf16.mxu0 0
    %2361 = vmatpush1.bf16.msra.mxu0 %v2344
    %2362 = vmatprep.subr.bf16.mxu0 0
    %2363 = vmatpush1.bf16.msra.mxu0 %v2343
    %2364 = vmatprep.subr.bf16.mxu0 0
    %2365 = vmatpush1.bf16.msra.mxu0 %v2342
    %2366 = vmatprep.subr.bf16.mxu0 0
    %2367 = vmatpush1.bf16.msra.mxu0 %v2341
    %2368 = vmatprep.subr.bf16.mxu0 0
    %2369 = vmatpush2.bf16.msra.mxu0 0
    %2370 = vmatprep.subr.bf16.mxu0 0
    %2371 = vmatpush2.bf16.msra.mxu0 0
    %2372 = vmatprep.subr.bf16.mxu0 0
    %2373 = vmatpush2.bf16.msra.mxu0 0
    %2374 = vmatprep.subr.bf16.mxu0 0
    %2375 = vmatpush2.bf16.msra.mxu0 0
    %2376 = vmatprep.subr.bf16.mxu0 0
    %2377 = vmatpush2.bf16.msra.mxu0 0
    %2378 = vmatprep.subr.bf16.mxu0 0
    %2379 = vmatpush2.bf16.msra.mxu0 0
    %2380 = vmatprep.subr.bf16.mxu0 0
    %2381 = vmatpush2.bf16.msra.mxu0 0
    %2382 = vmatprep.subr.bf16.mxu0 0
    %2383 = vmatpush2.bf16.msra.mxu0 0
    %2384 = vmatprep.mubr.bf16.mxu0 0
    %2385 = vmatmul.mubr.bf16.gmra.mxu0 %v2350
    %v2386 = vpop.f32.mrf.mxu0
    %v2387 = vadd.f32 %v2323, %v2386
    %v2388 = vpop.f32.mrf.mxu0
    %v2389 = vpop.f32.mrf.mxu0
    %v2390 = vadd.f32 %v2323, %v2389
    %v2391 = vpop.f32.mrf.mxu0
    %2392 = vdwg.mxu0
    %vm2393 = vcmp.gt.f32.partialorder %v2387, 0.0
    %vm2394 = vcmp.gt.f32.partialorder %v2390, 0.0
    %v2395 = vmul.f32 %v2387, 0.01
    %v2396 = vmul.f32 %v2390, 0.01
    %v2397 = vsel %vm2393, %v2387, %v2395
    %v2398 = vsel %vm2394, %v2390, %v2396
    %v2399 = vadd.f32 %v2093, %v2397
    %v2400 = vadd.f32 %v2094, %v2398
    %2401 = vst.msk [vmem:[#allocation13] sm:$0xff] %vm210, %v2261
    %v2402 = vld [vmem:[#allocation7] sm:$0x3]
    %v2404 = vsel %vm269, %v2402, 0
    %2406 = vmatprep.subr.mxu0 0.0
    %2407 = vmatpush1.msra.mxu0 0.0
    %2408 = vmatprep.subr.mxu0 0.0
    %2409 = vmatpush1.msra.mxu0 0.0
    %2410 = vmatprep.subr.mxu0 0.0
    %2411 = vmatpush1.msra.mxu0 0.0
    %2412 = vmatprep.subr.mxu0 0.0
    %2413 = vmatpush1.msra.mxu0 0.0
    %2414 = vmatprep.subr.mxu0 0.0
    %2415 = vmatpush1.msra.mxu0 0.0
    %2416 = vmatprep.subr.mxu0 0.0
    %2417 = vmatpush1.msra.mxu0 0.0
    %2418 = vmatprep.subr.mxu0 0.0
    %2419 = vmatpush1.msra.mxu0 0.0
    %2420 = vmatprep.subr.mxu0 0.0
    %2421 = vmatpush1.msra.mxu0 0.0
    %2422 = vmatprep.subr.mxu0 0.0
    %2423 = vmatpush1.msra.mxu0 0.0
    %2424 = vmatprep.subr.mxu0 0.0
    %2425 = vmatpush1.msra.mxu0 0.0
    %2426 = vmatprep.subr.mxu0 0.0
    %2427 = vmatpush1.msra.mxu0 0.0
    %2428 = vmatprep.subr.mxu0 0.0
    %2429 = vmatpush1.msra.mxu0 0.0
    %2430 = vmatprep.subr.mxu0 0.0
    %2431 = vmatpush1.msra.mxu0 0.0
    %2432 = vmatprep.subr.mxu0 0.0
    %2433 = vmatpush1.msra.mxu0 0.0
    %2434 = vmatprep.subr.mxu0 0.0
    %2435 = vmatpush1.msra.mxu0 %v2400
    %2436 = vmatprep.subr.mxu0 0.0
    %2437 = vmatpush1.msra.mxu0 %v2399
    %2438 = vmatprep.subr.mxu0 0.0
    %2439 = vmatpush2.msra.mxu0 0.0
    %2440 = vmatprep.subr.mxu0 0.0
    %2441 = vmatpush2.msra.mxu0 0.0
    %2442 = vmatprep.subr.mxu0 0.0
    %2443 = vmatpush2.msra.mxu0 0.0
    %2444 = vmatprep.subr.mxu0 0.0
    %2445 = vmatpush2.msra.mxu0 0.0
    %2446 = vmatprep.subr.mxu0 0.0
    %2447 = vmatpush2.msra.mxu0 0.0
    %2448 = vmatprep.subr.mxu0 0.0
    %2449 = vmatpush2.msra.mxu0 0.0
    %2450 = vmatprep.subr.mxu0 0.0
    %2451 = vmatpush2.msra.mxu0 0.0
    %2452 = vmatprep.subr.mxu0 0.0
    %2453 = vmatpush2.msra.mxu0 0.0
    %2454 = vmatprep.subr.mxu0 0.0
    %2455 = vmatpush2.msra.mxu0 0.0
    %2456 = vmatprep.subr.mxu0 0.0
    %2457 = vmatpush2.msra.mxu0 0.0
    %2458 = vmatprep.subr.mxu0 0.0
    %2459 = vmatpush2.msra.mxu0 0.0
    %2460 = vmatprep.subr.mxu0 0.0
    %2461 = vmatpush2.msra.mxu0 0.0
    %2462 = vmatprep.subr.mxu0 0.0
    %2463 = vmatpush2.msra.mxu0 0.0
    %2464 = vmatprep.subr.mxu0 0.0
    %2465 = vmatpush2.msra.mxu0 0.0
    %2466 = vmatprep.subr.mxu0 0.0
    %2467 = vmatpush2.msra.mxu0 0.0
    %2468 = vmatprep.subr.mxu0 0.0
    %2469 = vmatpush2.msra.mxu0 0.0
    %2470 = vmatprep.mubr.f32.mxu0 0.0
    %2471 = vmatmul.mubr.f32.gmra.mxu0 %v2404
    %v2472 = vpop.f32.mrf.mxu0
    %v2473 = vadd.f32 0.0, %v2472
    %v2474 = vpop.f32.mrf.mxu0
    %2475 = vdwg.mxu0
    %vm2476 = vcmask 517120
    %2477 = vst.msk [vmem:[#allocation14] sm:$0x3] %vm2476, %v2473
    // Predicated region
    $region122: #{tpu_custom_call.1} parent=1 // pred_check
      _
    $region123: #{tpu_custom_call.1} parent=1 // pred_check_branch
      %2479 = sbr.rel (0) target = $region125
    $region124: #{tpu_custom_call.1} parent=1 // pred_region
      %s2481 = ssub.s32 128, 128
      %2482 = vsyncadd [#allocation4], %s2481
      %s2484 = sshll.u32 [#allocation13], 4
      %s2485 = int_to_ptr.vmem [resolvable:$true] %s2484
      %2487 = dma.vmem_to_hbm [thread:$0]  %s2485, 128, %s24, [#allocation4]
    $region125: #{tpu_custom_call.1} parent=1 // pred_fallthru
      _
    // Predicated region
    $region126: #{tpu_custom_call.1} parent=1 // pred_check
      _
    $region127: #{tpu_custom_call.1} parent=1 // pred_check_branch
      %2489 = sbr.rel (0) target = $region129
    $region128: #{tpu_custom_call.1} parent=1 // pred_region
      %s2491 = ssub.s32 32, 32
      %2492 = vsyncadd [#allocation15], %s2491
      %s2494 = sshll.u32 [#allocation14], 4
      %s2495 = int_to_ptr.vmem [resolvable:$true] %s2494
      %2497 = dma.vmem_to_hbm [thread:$0]  %s2495, 32, %s25, [#allocation15]
    $region129: #{tpu_custom_call.1} parent=1 // pred_fallthru
      _
    // Predicated region
    $region130: #{tpu_custom_call.1} parent=1 // pred_check
      _
    $region131: #{tpu_custom_call.1} parent=1 // pred_check_branch
      %2499 = sbr.rel (0) target = $region133
    $region132: #{tpu_custom_call.1} parent=1 // pred_region
      %2500 = dma.done [#allocation4], 128
    $region133: #{tpu_custom_call.1} parent=1 // pred_fallthru
      _
    // Predicated region
    $region134: #{tpu_custom_call.1} parent=1 // pred_check
      _
    $region135: #{tpu_custom_call.1} parent=1 // pred_check_branch
      %2502 = sbr.rel (0) target = $region137
    $region136: #{tpu_custom_call.1} parent=1 // pred_region
      %2503 = dma.done [#allocation15], 32
    $region137: #{tpu_custom_call.1} parent=1 // pred_fallthru
      _
    %2504 = vsyncpa [#allocation3], 1
    %2505 = vsyncpa [#allocation6], 1
    %2506 = vsyncpa [#allocation9], 1
    %2507 = vsyncpa [#allocation12], 1
    %2508 = vsyncpa [#allocation4], 1
    %2509 = vsyncpa [#allocation15], 1

</llo_original>
